<compile_context>
chip_gen: v6e
topology: v6e:2x2x1
jax: 0.10.0
libtpu: 0.0.40
codegen_flags: <defaults>
</compile_context>

<pallas_src>
import functools

import jax
import jax.numpy as jnp
from jax import lax
from jax.experimental import pallas as pl
from jax.experimental.pallas import tpu as pltpu

LN_EPS = 1e-5
INV_SQRT2 = 0.7071067811865475
PACK = 8  # tokens packed per lane-row (PACK * C lanes per row; 128 for C=16)


# ---------------------------------------------------------------------------
# Fused kernel: folded (conv1 ∘ conv3x3x3) matmul + bias/pos + LayerNorm + GELU
# ---------------------------------------------------------------------------
def _fused_fcu_down_kernel(p_ref, w_ref, a_ref, add_ref, g_ref, be_ref, o_ref):
    # (rt, PACK*27*C) bf16 @ (PACK*27*C, PACK*C) bf16 block-diagonal weight,
    # f32 accumulation: 8 tokens per row, one 432-deep contraction per token,
    # lane-dense output.
    y = jnp.dot(p_ref[0], w_ref[...], preferred_element_type=jnp.float32)
    y = y + add_ref[...]                   # conv3 bias + folded conv1 bias + pos emb

    # Segmented LayerNorm: per-16-lane-group (= one token's channels) mean/var
    # via a block-diagonal averaging matmul -> stays lane-dense, no relayout.
    mean = jnp.dot(y, a_ref[...], preferred_element_type=jnp.float32)
    yc = y - mean
    var = jnp.dot(yc * yc, a_ref[...], preferred_element_type=jnp.float32)
    yn = yc * lax.rsqrt(var + LN_EPS)
    yn = yn * g_ref[...] + be_ref[...]

    # exact (erf) GELU, matching nn.GELU() default
    o_ref[0] = (0.5 * yn * (1.0 + lax.erf(yn * INV_SQRT2))).astype(o_ref.dtype)


def fused_fcu_down(p_packed, w_packed, a_mat, add_packed, gamma_t, beta_t, *,
                   rt, out_dtype):
    B, NR, KCP = p_packed.shape
    CP = w_packed.shape[1]

    # Cost estimate (advisory, lets XLA schedule neighbours around the call).
    flops = 2 * B * NR * KCP * CP + 2 * (2 * B * NR * CP * CP)
    bytes_accessed = (
        p_packed.size * p_packed.dtype.itemsize
        + w_packed.size * w_packed.dtype.itemsize
        + a_mat.size * a_mat.dtype.itemsize
        + add_packed.size * add_packed.dtype.itemsize
        + gamma_t.size * 4 + beta_t.size * 4
        + B * NR * CP * jnp.dtype(out_dtype).itemsize)
    transcendentals = 2 * B * NR * CP  # rsqrt + erf per output element

    return pl.pallas_call(
        _fused_fcu_down_kernel,
        out_shape=jax.ShapeDtypeStruct((B, NR, CP), out_dtype),
        grid_spec=pltpu.PrefetchScalarGridSpec(
            num_scalar_prefetch=0,
            grid=(B, NR // rt),
            in_specs=[
                pl.BlockSpec((1, rt, KCP), lambda b, n: (b, n, 0)),  # bf16 patches
                pl.BlockSpec((KCP, CP), lambda b, n: (0, 0)),   # resident bf16 weight
                pl.BlockSpec((CP, CP), lambda b, n: (0, 0)),    # LN averaging mat
                pl.BlockSpec((rt, CP), lambda b, n: (n, 0)),    # per-token additive
                pl.BlockSpec((1, CP), lambda b, n: (0, 0)),     # gamma (tiled)
                pl.BlockSpec((1, CP), lambda b, n: (0, 0)),     # beta (tiled)
            ],
            out_specs=pl.BlockSpec((1, rt, CP), lambda b, n: (b, n, 0)),
        ),
        compiler_params=pltpu.CompilerParams(
            dimension_semantics=("parallel", "parallel"),
            vmem_limit_bytes=32 * 1024 * 1024),
        cost_estimate=pl.CostEstimate(flops=int(flops),
                                      transcendentals=int(transcendentals),
                                      bytes_accessed=int(bytes_accessed)),
    )(p_packed, w_packed, a_mat, add_packed, gamma_t, beta_t)


# ---------------------------------------------------------------------------
# Glue (plain JAX): layout transpose, im2col concat, weight folding, packing.
# ---------------------------------------------------------------------------
def _im2col_concat_and_valid(xc, s):
    """xc: (B, D, H, W, C) -> patches (B, N, 27*C) [tap-major], valid (N, 27) f32."""
    B, D, H, W, C = xc.shape
    OD = (D + 2 - 3) // s + 1
    OH = (H + 2 - 3) // s + 1
    OW = (W + 2 - 3) // s + 1
    N = OD * OH * OW
    xp = jnp.pad(xc, ((0, 0), (1, 1), (1, 1), (1, 1), (0, 0)))
    ones = jnp.pad(jnp.ones((D, H, W), jnp.float32), ((1, 1),) * 3)
    pat, val = [], []
    for kd in range(3):
        for kh in range(3):
            for kw in range(3):
                sl = xp[:, kd:kd + (OD - 1) * s + 1:s,
                        kh:kh + (OH - 1) * s + 1:s,
                        kw:kw + (OW - 1) * s + 1:s, :]
                pat.append(sl.reshape(B, N, C))
                vl = ones[kd:kd + (OD - 1) * s + 1:s,
                          kh:kh + (OH - 1) * s + 1:s,
                          kw:kw + (OW - 1) * s + 1:s]
                val.append(vl.reshape(N))
    patches = jnp.concatenate(pat, axis=-1)          # (B, N, 27*C), lane-contiguous
    valid = jnp.stack(val, axis=-1)                  # (N, 27) f32
    return patches, valid, N


def _folded_weights(params, C):
    """Fold conv1 (1x1x1) into the 3x3x3 conv; return (27*C, C) weight (f32)
    and the (27, C) per-tap conv1-bias contribution."""
    w1m = params["w1"][:, :, 0, 0, 0].T                                   # (Ci, Cm)
    w3m = jnp.transpose(params["w3"], (2, 3, 4, 1, 0)).reshape(27, C, C)  # (k, Cm, Co)
    w_eff = jnp.einsum('ic,kco->kio', w1m, w3m)                           # (27, Ci, Co)
    bk = jnp.einsum('c,kco->ko', params["b1"], w3m)                       # (27, Co)
    return w_eff.reshape(27 * C, C), bk


def fcu_down_forward(x_ncdhw, params, *, dw_stride):
    B, C, D, H, W = x_ncdhw.shape
    s = dw_stride
    # bf16 + channels-last BEFORE im2col: the HBM patch slab is bf16 (halves
    # the dominant stream); XLA fuses transpose+cast+pad+slice+concat.
    xc = jnp.transpose(x_ncdhw, (0, 2, 3, 4, 1)).astype(jnp.bfloat16)    # (B,D,H,W,C)
    patches, valid, N = _im2col_concat_and_valid(xc, s)                  # bf16 patches

    # --- fold conv1 (1x1x1) into the 3x3x3 conv weights (in f32) ---
    Wm, bk = _folded_weights(params, C)                                  # (27*C, C), (27, C)

    # conv1-bias boundary correction: b1 only flows through taps that land
    # inside the unpadded volume (original code zero-pads y1 = conv1(x)+b1).
    bias_field = valid @ bk                                              # (N, C) f32

    pos = params["pos"][0]                                               # (Npos, C)
    assert pos.shape[0] == N, "LearnedPositionalEncoding expects 4096 tokens"
    add = pos + bias_field + params["b3"][None, :]                       # (N, C) f32

    # --- lane packing: 8 tokens per row (all reshapes are zero-cost views) ---
    assert N % PACK == 0
    KC = 27 * C
    NR = N // PACK
    p_packed = patches.reshape(B, NR, PACK * KC)                         # (B, NR, 3456) bf16
    w_packed = jnp.kron(jnp.eye(PACK, dtype=jnp.float32),
                        Wm).astype(jnp.bfloat16)                         # (3456, 128) bf16
    add_packed = add.reshape(NR, PACK * C).astype(jnp.float32)           # (NR, 128)
    a_mat = jnp.kron(jnp.eye(PACK, dtype=jnp.float32),
                     jnp.full((C, C), 1.0 / C, jnp.float32))             # (128, 128)
    gamma_t = jnp.tile(params["gamma"], PACK).reshape(1, PACK * C)
    beta_t = jnp.tile(params["beta"], PACK).reshape(1, PACK * C)

    # token-tile size: 128 packed rows (= 1024 tokens) preferred -> >=4 grid
    # steps per v7x TensorCore, steady-state DMA/compute overlap everywhere.
    rt = NR
    for cand in (128, 64, 256, 32, 16, 8):
        if NR % cand == 0:
            rt = cand
            break

    out_packed = fused_fcu_down(p_packed, w_packed, a_mat, add_packed,
                                gamma_t, beta_t, rt=rt,
                                out_dtype=x_ncdhw.dtype)                 # (B, NR, 128)
    return out_packed.reshape(B, N, C)                                   # (B, N, C)


# ---------------------------------------------------------------------------
# Pure-JAX references.
#  * reference_forward: exact f32 mirror of the PyTorch forward.
#  * reference_forward_bf16ops: identical math to the kernel path (bf16 matmul
#    operands, f32 everything else) -> tight gate on the kernel logic.
# ---------------------------------------------------------------------------
def reference_forward(x_ncdhw, params, *, dw_stride):
    dn1 = lax.conv_dimension_numbers(x_ncdhw.shape, params["w1"].shape,
                                     ("NCDHW", "OIDHW", "NCDHW"))
    y = lax.conv_general_dilated(x_ncdhw, params["w1"], (1, 1, 1), "VALID",
                                 dimension_numbers=dn1)
    y = y + params["b1"].reshape(1, -1, 1, 1, 1)
    dn3 = lax.conv_dimension_numbers(y.shape, params["w3"].shape,
                                     ("NCDHW", "OIDHW", "NCDHW"))
    y = lax.conv_general_dilated(y, params["w3"], (dw_stride,) * 3,
                                 ((1, 1), (1, 1), (1, 1)),
                                 dimension_numbers=dn3)
    y = y + params["b3"].reshape(1, -1, 1, 1, 1)
    B, C = y.shape[0], y.shape[1]
    y = jnp.transpose(y.reshape(B, C, -1), (0, 2, 1))             # (B, N, C)
    y = y + params["pos"]
    mean = jnp.mean(y, axis=-1, keepdims=True)
    var = jnp.mean(jnp.square(y - mean), axis=-1, keepdims=True)
    y = (y - mean) * lax.rsqrt(var + LN_EPS)
    y = y * params["gamma"] + params["beta"]
    return 0.5 * y * (1.0 + lax.erf(y * INV_SQRT2))


def reference_forward_bf16ops(x_ncdhw, params, *, dw_stride):
    B, C = x_ncdhw.shape[0], x_ncdhw.shape[1]
    xc = jnp.transpose(x_ncdhw, (0, 2, 3, 4, 1)).astype(jnp.bfloat16)
    patches, valid, N = _im2col_concat_and_valid(xc, dw_stride)
    Wm, bk = _folded_weights(params, C)
    y = jnp.einsum('bnk,kc->bnc', patches, Wm.astype(jnp.bfloat16),
                   preferred_element_type=jnp.float32)
    y = y + (valid @ bk)[None] + params["b3"] + params["pos"]
    mean = jnp.mean(y, axis=-1, keepdims=True)
    var = jnp.mean(jnp.square(y - mean), axis=-1, keepdims=True)
    y = (y - mean) * lax.rsqrt(var + LN_EPS)
    y = y * params["gamma"] + params["beta"]
    return 0.5 * y * (1.0 + lax.erf(y * INV_SQRT2))


if __name__ == "__main__":
    B, C, D, H, W = 2, 16, 32, 32, 32
    dw_stride = 2                    # output tokens = 16^3 = 4096 (pos-emb size)

    key = jax.random.PRNGKey(0)
    ks = jax.random.split(key, 8)
    x = jax.random.normal(ks[0], (B, C, D, H, W), jnp.float32)
    params = dict(
        w1=0.2 * jax.random.normal(ks[1], (C, C, 1, 1, 1), jnp.float32),
        b1=0.1 * jax.random.normal(ks[2], (C,), jnp.float32),
        w3=0.05 * jax.random.normal(ks[3], (C, C, 3, 3, 3), jnp.float32),
        b3=0.1 * jax.random.normal(ks[4], (C,), jnp.float32),
        # LearnedPositionalEncoding param is (1, 4096, C); randomized here to
        # exercise the add path (nn.init is zeros).
        pos=0.02 * jax.random.normal(ks[5], (1, 4096, C), jnp.float32),
        gamma=1.0 + 0.1 * jax.random.normal(ks[6], (C,), jnp.float32),
        beta=0.05 * jax.random.normal(ks[7], (C,), jnp.float32),
    )

    fwd = jax.jit(functools.partial(fcu_down_forward, dw_stride=dw_stride))
    ref_fwd = jax.jit(functools.partial(reference_forward, dw_stride=dw_stride))
    ref_bf16 = jax.jit(functools.partial(reference_forward_bf16ops,
                                         dw_stride=dw_stride))

    out = jax.block_until_ready(fwd(x, params))
    ref = jax.block_until_ready(ref_fwd(x, params))
    refb = jax.block_until_ready(ref_bf16(x, params))

    assert out.shape == (B, 4096, C), out.shape
    # Tight gate: kernel vs identical-math reference (bf16 matmul operands,
    # f32 accumulation / LN / GELU) -> validates the kernel logic itself.
    err_logic = float(jnp.max(jnp.abs(out - refb)))
    assert err_logic < 2e-3, f"kernel-logic max abs err {err_logic}"
    # Loose gate: bf16 operand quantization over a 432-deep contraction vs the
    # exact f32 PyTorch-equivalent forward.
    err_full = float(jnp.max(jnp.abs(out - ref)))
    assert err_full < 5e-2, f"full-precision max abs err {err_full}"
    print("KERNEL_OK")
</pallas_src>

<mosaic_0001>
module attributes {stable_mosaic.version = 11 : i64} {
  func.func @_fused_fcu_down_kernel(%arg0: i32, %arg1: i32, %arg2: memref<1x128x3456xbf16, #tpu.memory_space<vmem>>, %arg3: memref<3456x128xbf16, #tpu.memory_space<vmem>>, %arg4: memref<128x128xf32, #tpu.memory_space<vmem>>, %arg5: memref<128x128xf32, #tpu.memory_space<vmem>>, %arg6: memref<1x128xf32, #tpu.memory_space<vmem>>, %arg7: memref<1x128xf32, #tpu.memory_space<vmem>>, %arg8: memref<1x128x128xf32, #tpu.memory_space<vmem>>) attributes {dimension_semantics = [#tpu.dimension_semantics<parallel>, #tpu.dimension_semantics<parallel>], iteration_bounds = array<i64: 2, 4>, scalar_prefetch = 0 : i64, scratch_operands = 0 : i64, tpu.core_type = #tpu.core_type<tc>, window_params = [{transform_indices = @transform_0, window_bounds = array<i64: 1, 128, 3456>}, {pipeline_mode = #tpu.pipeline_mode<synchronous>, transform_indices = @transform_1, window_bounds = array<i64: 3456, 128>}, {pipeline_mode = #tpu.pipeline_mode<synchronous>, transform_indices = @transform_2, window_bounds = array<i64: 128, 128>}, {transform_indices = @transform_3, window_bounds = array<i64: 128, 128>}, {pipeline_mode = #tpu.pipeline_mode<synchronous>, transform_indices = @transform_4, window_bounds = array<i64: 1, 128>}, {pipeline_mode = #tpu.pipeline_mode<synchronous>, transform_indices = @transform_5, window_bounds = array<i64: 1, 128>}, {transform_indices = @transform_6, window_bounds = array<i64: 1, 128, 128>}]} {
    %c0 = arith.constant 0 : index
    %c0_0 = arith.constant 0 : index
    %c0_1 = arith.constant 0 : index
    %0 = vector.load %arg2[%c0, %c0_0, %c0_1] : memref<1x128x3456xbf16, #tpu.memory_space<vmem>>, vector<1x128x3456xbf16>
    %1 = vector.shape_cast %0 : vector<1x128x3456xbf16> to vector<128x3456xbf16>
    %c0_2 = arith.constant 0 : index
    %c0_3 = arith.constant 0 : index
    %2 = vector.load %arg3[%c0_2, %c0_3] : memref<3456x128xbf16, #tpu.memory_space<vmem>>, vector<3456x128xbf16>
    %cst = arith.constant dense<0.000000e+00> : vector<128x128xf32>
    %3 = tpu.matmul %1, %2, %cst {dimension_numbers = #tpu.dot_dimension_numbers<[1], [0], [0], [1], [0, 0, 1, 1], [], []>} : vector<128x3456xbf16>, vector<3456x128xbf16>, vector<128x128xf32> -> vector<128x128xf32>
    %c0_4 = arith.constant 0 : index
    %c0_5 = arith.constant 0 : index
    %4 = vector.load %arg5[%c0_4, %c0_5] : memref<128x128xf32, #tpu.memory_space<vmem>>, vector<128x128xf32>
    %5 = arith.addf %3, %4 : vector<128x128xf32>
    %c0_6 = arith.constant 0 : index
    %c0_7 = arith.constant 0 : index
    %6 = vector.load %arg4[%c0_6, %c0_7] : memref<128x128xf32, #tpu.memory_space<vmem>>, vector<128x128xf32>
    %cst_8 = arith.constant dense<0.000000e+00> : vector<128x128xf32>
    %7 = tpu.matmul %5, %6, %cst_8 {dimension_numbers = #tpu.dot_dimension_numbers<[1], [0], [0], [1], [0, 0, 1, 1], [], []>} : vector<128x128xf32>, vector<128x128xf32>, vector<128x128xf32> -> vector<128x128xf32>
    %8 = arith.subf %5, %7 : vector<128x128xf32>
    %9 = arith.mulf %8, %8 : vector<128x128xf32>
    %c0_9 = arith.constant 0 : index
    %c0_10 = arith.constant 0 : index
    %10 = vector.load %arg4[%c0_9, %c0_10] : memref<128x128xf32, #tpu.memory_space<vmem>>, vector<128x128xf32>
    %cst_11 = arith.constant dense<0.000000e+00> : vector<128x128xf32>
    %11 = tpu.matmul %9, %10, %cst_11 {dimension_numbers = #tpu.dot_dimension_numbers<[1], [0], [0], [1], [0, 0, 1, 1], [], []>} : vector<128x128xf32>, vector<128x128xf32>, vector<128x128xf32> -> vector<128x128xf32>
    %cst_12 = arith.constant 9.99999974E-6 : f32
    %12 = vector.broadcast %cst_12 : f32 to vector<128x128xf32>
    %13 = arith.addf %11, %12 : vector<128x128xf32>
    %14 = math.rsqrt %13 : vector<128x128xf32>
    %15 = arith.mulf %8, %14 : vector<128x128xf32>
    %c0_13 = arith.constant 0 : index
    %c0_14 = arith.constant 0 : index
    %16 = vector.load %arg6[%c0_13, %c0_14] : memref<1x128xf32, #tpu.memory_space<vmem>>, vector<1x128xf32>
    %17 = vector.broadcast %16 : vector<1x128xf32> to vector<128x128xf32>
    %18 = arith.mulf %15, %17 : vector<128x128xf32>
    %c0_15 = arith.constant 0 : index
    %c0_16 = arith.constant 0 : index
    %19 = vector.load %arg7[%c0_15, %c0_16] : memref<1x128xf32, #tpu.memory_space<vmem>>, vector<1x128xf32>
    %20 = vector.broadcast %19 : vector<1x128xf32> to vector<128x128xf32>
    %21 = arith.addf %18, %20 : vector<128x128xf32>
    %cst_17 = arith.constant 5.000000e-01 : f32
    %22 = vector.broadcast %cst_17 : f32 to vector<128x128xf32>
    %23 = arith.mulf %22, %21 : vector<128x128xf32>
    %cst_18 = arith.constant 0.707106769 : f32
    %24 = vector.broadcast %cst_18 : f32 to vector<128x128xf32>
    %25 = arith.mulf %21, %24 : vector<128x128xf32>
    %26 = math.erf %25 : vector<128x128xf32>
    %cst_19 = arith.constant 1.000000e+00 : f32
    %27 = vector.broadcast %cst_19 : f32 to vector<128x128xf32>
    %28 = arith.addf %27, %26 : vector<128x128xf32>
    %29 = arith.mulf %23, %28 : vector<128x128xf32>
    %c0_20 = arith.constant 0 : index
    %c0_21 = arith.constant 0 : index
    %c0_22 = arith.constant 0 : index
    %30 = vector.load %arg8[%c0_20, %c0_21, %c0_22] : memref<1x128x128xf32, #tpu.memory_space<vmem>>, vector<1x128x128xf32>
    %31 = vector.shape_cast %30 : vector<1x128x128xf32> to vector<128x128xf32>
    %32 = vector.shape_cast %29 : vector<128x128xf32> to vector<1x128x128xf32>
    tpu.vector_store %arg8[%c0_20, %c0_21, %c0_22], %32 {strides = array<i32>} : memref<1x128x128xf32, #tpu.memory_space<vmem>>, vector<1x128x128xf32>,
    return
  }
  func.func @transform_0(%arg0: i32, %arg1: i32) -> (i32, i32, i32) {
    %c0_i32 = arith.constant 0 : i32
    %c0_i32_0 = arith.constant 0 : i32
    return %arg0, %arg1, %c0_i32 : i32, i32, i32
  }
  func.func @transform_1(%arg0: i32, %arg1: i32) -> (i32, i32) {
    %c0_i32 = arith.constant 0 : i32
    %c0_i32_0 = arith.constant 0 : i32
    %c0_i32_1 = arith.constant 0 : i32
    return %c0_i32, %c0_i32_0 : i32, i32
  }
  func.func @transform_2(%arg0: i32, %arg1: i32) -> (i32, i32) {
    %c0_i32 = arith.constant 0 : i32
    %c0_i32_0 = arith.constant 0 : i32
    %c0_i32_1 = arith.constant 0 : i32
    return %c0_i32, %c0_i32_0 : i32, i32
  }
  func.func @transform_3(%arg0: i32, %arg1: i32) -> (i32, i32) {
    %c0_i32 = arith.constant 0 : i32
    %c0_i32_0 = arith.constant 0 : i32
    return %arg1, %c0_i32 : i32, i32
  }
  func.func @transform_4(%arg0: i32, %arg1: i32) -> (i32, i32) {
    %c0_i32 = arith.constant 0 : i32
    %c0_i32_0 = arith.constant 0 : i32
    %c0_i32_1 = arith.constant 0 : i32
    return %c0_i32, %c0_i32_0 : i32, i32
  }
  func.func @transform_5(%arg0: i32, %arg1: i32) -> (i32, i32) {
    %c0_i32 = arith.constant 0 : i32
    %c0_i32_0 = arith.constant 0 : i32
    %c0_i32_1 = arith.constant 0 : i32
    return %c0_i32, %c0_i32_0 : i32, i32
  }
  func.func @transform_6(%arg0: i32, %arg1: i32) -> (i32, i32, i32) {
    %c0_i32 = arith.constant 0 : i32
    %c0_i32_0 = arith.constant 0 : i32
    return %arg0, %arg1, %c0_i32 : i32, i32, i32
  }
}

</mosaic_0001>

<llo_original>
// kernel: mul.4
$region0: #{mul.4}
  %s0 = inlined_call_operand.vmem [shape: f32[27,16,16], index: 0, kind: input, shape index: {}]
  %s1 = inlined_call_operand.vmem [shape: f32[432,16], index: 1, kind: output, shape index: {}]
  %v2 = vld [vmem:[%s0] ss:$8 sm:$0xf]
  %v3 = vld [vmem:[%s0] ss:$8 sm:$0xf0]
  %vm4 = vcmask 1047556
  %v5 = vsel %vm4, %v3, %v2
  %vm6 = vcmask 130048
  %7 = vst.msk [vmem:[%s1] ss:$8 sm:$0xf] %vm6, %v5
  %s8 = scalar_lea.vmem %s1, 4294967265
  %9 = vst.msk [vmem:[%s8] ss:$8 sm:$0xf0] %vm6, %v5
  %s10 = scalar_lea.vmem %s0, 64
  %v11 = vld [vmem:[%s10] ss:$8 sm:$0xf]
  %s12 = scalar_lea.vmem %s0, 64
  %v13 = vld [vmem:[%s12] ss:$8 sm:$0xf0]
  %vm14 = vcmask 1047556
  %v15 = vsel %vm14, %v13, %v11
  %vm16 = vcmask 130048
  %s17 = scalar_lea.vmem %s1, 2
  %18 = vst.msk [vmem:[%s17] ss:$8 sm:$0xf] %vm16, %v15
  %s19 = scalar_lea.vmem %s1, 4294967267
  %20 = vst.msk [vmem:[%s19] ss:$8 sm:$0xf0] %vm16, %v15
  %s21 = scalar_lea.vmem %s0, 128
  %v22 = vld [vmem:[%s21] ss:$8 sm:$0xf]
  %s23 = scalar_lea.vmem %s0, 128
  %v24 = vld [vmem:[%s23] ss:$8 sm:$0xf0]
  %vm25 = vcmask 1047556
  %v26 = vsel %vm25, %v24, %v22
  %vm27 = vcmask 130048
  %s28 = scalar_lea.vmem %s1, 4
  %29 = vst.msk [vmem:[%s28] ss:$8 sm:$0xf] %vm27, %v26
  %s30 = scalar_lea.vmem %s1, 4294967269
  %31 = vst.msk [vmem:[%s30] ss:$8 sm:$0xf0] %vm27, %v26
  %s32 = scalar_lea.vmem %s0, 192
  %v33 = vld [vmem:[%s32] ss:$8 sm:$0xf]
  %s34 = scalar_lea.vmem %s0, 192
  %v35 = vld [vmem:[%s34] ss:$8 sm:$0xf0]
  %vm36 = vcmask 1047556
  %v37 = vsel %vm36, %v35, %v33
  %vm38 = vcmask 130048
  %s39 = scalar_lea.vmem %s1, 6
  %40 = vst.msk [vmem:[%s39] ss:$8 sm:$0xf] %vm38, %v37
  %s41 = scalar_lea.vmem %s1, 4294967271
  %42 = vst.msk [vmem:[%s41] ss:$8 sm:$0xf0] %vm38, %v37
  %s43 = scalar_lea.vmem %s0, 256
  %v44 = vld [vmem:[%s43] ss:$8 sm:$0xf]
  %s45 = scalar_lea.vmem %s0, 256
  %v46 = vld [vmem:[%s45] ss:$8 sm:$0xf0]
  %vm47 = vcmask 1047556
  %v48 = vsel %vm47, %v46, %v44
  %vm49 = vcmask 130048
  %s50 = scalar_lea.vmem %s1, 32
  %51 = vst.msk [vmem:[%s50] ss:$8 sm:$0xf] %vm49, %v48
  %s52 = scalar_lea.vmem %s1, 1
  %53 = vst.msk [vmem:[%s52] ss:$8 sm:$0xf0] %vm49, %v48
  %s54 = scalar_lea.vmem %s0, 320
  %v55 = vld [vmem:[%s54] ss:$8 sm:$0xf]
  %s56 = scalar_lea.vmem %s0, 320
  %v57 = vld [vmem:[%s56] ss:$8 sm:$0xf0]
  %vm58 = vcmask 1047556
  %v59 = vsel %vm58, %v57, %v55
  %vm60 = vcmask 130048
  %s61 = scalar_lea.vmem %s1, 34
  %62 = vst.msk [vmem:[%s61] ss:$8 sm:$0xf] %vm60, %v59
  %s63 = scalar_lea.vmem %s1, 3
  %64 = vst.msk [vmem:[%s63] ss:$8 sm:$0xf0] %vm60, %v59
  %s65 = scalar_lea.vmem %s0, 384
  %v66 = vld [vmem:[%s65] ss:$8 sm:$0xf]
  %s67 = scalar_lea.vmem %s0, 384
  %v68 = vld [vmem:[%s67] ss:$8 sm:$0xf0]
  %vm69 = vcmask 1047556
  %v70 = vsel %vm69, %v68, %v66
  %vm71 = vcmask 130048
  %s72 = scalar_lea.vmem %s1, 36
  %73 = vst.msk [vmem:[%s72] ss:$8 sm:$0xf] %vm71, %v70
  %s74 = scalar_lea.vmem %s1, 5
  %75 = vst.msk [vmem:[%s74] ss:$8 sm:$0xf0] %vm71, %v70
  %s76 = scalar_lea.vmem %s0, 448
  %v77 = vld [vmem:[%s76] ss:$8 sm:$0xf]
  %s78 = scalar_lea.vmem %s0, 448
  %v79 = vld [vmem:[%s78] ss:$8 sm:$0xf0]
  %vm80 = vcmask 1047556
  %v81 = vsel %vm80, %v79, %v77
  %vm82 = vcmask 130048
  %s83 = scalar_lea.vmem %s1, 38
  %84 = vst.msk [vmem:[%s83] ss:$8 sm:$0xf] %vm82, %v81
  %s85 = scalar_lea.vmem %s1, 7
  %86 = vst.msk [vmem:[%s85] ss:$8 sm:$0xf0] %vm82, %v81
  %s87 = scalar_lea.vmem %s0, 7
  %v88 = vld [vmem:[%s87] sm:$0x1]
  %s89 = scalar_lea.vmem %s0, 38
  %v90 = vld [vmem:[%s89] sm:$0x2]
  %vm91 = vcmask 1041409
  %v92 = vsel %vm91, %v90, %v88
  %s93 = scalar_lea.vmem %s0, 69
  %v94 = vld [vmem:[%s93] sm:$0x4]
  %vm95 = vcmask 1042434
  %v96 = vsel %vm95, %v94, %v92
  %s97 = scalar_lea.vmem %s0, 100
  %v98 = vld [vmem:[%s97] sm:$0x8]
  %vm99 = vcmask 1043459
  %v100 = vsel %vm99, %v98, %v96
  %s101 = scalar_lea.vmem %s0, 131
  %v102 = vld [vmem:[%s101] sm:$0x10]
  %vm103 = vcmask 1044484
  %v104 = vsel %vm103, %v102, %v100
  %s105 = scalar_lea.vmem %s0, 162
  %v106 = vld [vmem:[%s105] sm:$0x20]
  %vm107 = vcmask 1045509
  %v108 = vsel %vm107, %v106, %v104
  %s109 = scalar_lea.vmem %s0, 193
  %v110 = vld [vmem:[%s109] sm:$0x40]
  %vm111 = vcmask 1046534
  %v112 = vsel %vm111, %v110, %v108
  %s113 = scalar_lea.vmem %s0, 224
  %v114 = vld [vmem:[%s113] sm:$0x80]
  %vm115 = vcmask 1047559
  %v116 = vsel %vm115, %v114, %v112
  %117 = vrot.lane.b32.xlu0 %v116, 112
  %v118 = vpop.permute.xlu0 %117
  %vm119 = vcmask 1048448
  %120 = vst.msk [vmem:[%s1] sm:$0xff] %vm119, %v118
  %s121 = scalar_lea.vmem %s0, 263
  %v122 = vld [vmem:[%s121] sm:$0x1]
  %s123 = scalar_lea.vmem %s0, 294
  %v124 = vld [vmem:[%s123] sm:$0x2]
  %vm125 = vcmask 1041409
  %v126 = vsel %vm125, %v124, %v122
  %s127 = scalar_lea.vmem %s0, 325
  %v128 = vld [vmem:[%s127] sm:$0x4]
  %vm129 = vcmask 1042434
  %v130 = vsel %vm129, %v128, %v126
  %s131 = scalar_lea.vmem %s0, 356
  %v132 = vld [vmem:[%s131] sm:$0x8]
  %vm133 = vcmask 1043459
  %v134 = vsel %vm133, %v132, %v130
  %s135 = scalar_lea.vmem %s0, 387
  %v136 = vld [vmem:[%s135] sm:$0x10]
  %vm137 = vcmask 1044484
  %v138 = vsel %vm137, %v136, %v134
  %s139 = scalar_lea.vmem %s0, 418
  %v140 = vld [vmem:[%s139] sm:$0x20]
  %vm141 = vcmask 1045509
  %v142 = vsel %vm141, %v140, %v138
  %s143 = scalar_lea.vmem %s0, 449
  %v144 = vld [vmem:[%s143] sm:$0x40]
  %vm145 = vcmask 1046534
  %v146 = vsel %vm145, %v144, %v142
  %s147 = scalar_lea.vmem %s0, 480
  %v148 = vld [vmem:[%s147] sm:$0x80]
  %vm149 = vcmask 1047559
  %v150 = vsel %vm149, %v148, %v146
  %151 = vrot.lane.b32.xlu0 %v150, 112
  %v152 = vpop.permute.xlu0 %151
  %vm153 = vcmask 1048448
  %s154 = scalar_lea.vmem %s1, 32
  %155 = vst.msk [vmem:[%s154] sm:$0xff] %vm153, %v152
  %s156 = scalar_lea.vmem %s0, 15
  %v157 = vld [vmem:[%s156] sm:$0x1]
  %s158 = scalar_lea.vmem %s0, 46
  %v159 = vld [vmem:[%s158] sm:$0x2]
  %vm160 = vcmask 1041409
  %v161 = vsel %vm160, %v159, %v157
  %s162 = scalar_lea.vmem %s0, 77
  %v163 = vld [vmem:[%s162] sm:$0x4]
  %vm164 = vcmask 1042434
  %v165 = vsel %vm164, %v163, %v161
  %s166 = scalar_lea.vmem %s0, 108
  %v167 = vld [vmem:[%s166] sm:$0x8]
  %vm168 = vcmask 1043459
  %v169 = vsel %vm168, %v167, %v165
  %s170 = scalar_lea.vmem %s0, 139
  %v171 = vld [vmem:[%s170] sm:$0x10]
  %vm172 = vcmask 1044484
  %v173 = vsel %vm172, %v171, %v169
  %s174 = scalar_lea.vmem %s0, 170
  %v175 = vld [vmem:[%s174] sm:$0x20]
  %vm176 = vcmask 1045509
  %v177 = vsel %vm176, %v175, %v173
  %s178 = scalar_lea.vmem %s0, 201
  %v179 = vld [vmem:[%s178] sm:$0x40]
  %vm180 = vcmask 1046534
  %v181 = vsel %vm180, %v179, %v177
  %s182 = scalar_lea.vmem %s0, 232
  %v183 = vld [vmem:[%s182] sm:$0x80]
  %vm184 = vcmask 1047559
  %v185 = vsel %vm184, %v183, %v181
  %186 = vrot.lane.b32.xlu0 %v185, 112
  %v187 = vpop.permute.xlu0 %186
  %vm188 = vcmask 1048448
  %s189 = scalar_lea.vmem %s1, 8
  %190 = vst.msk [vmem:[%s189] sm:$0xff] %vm188, %v187
  %s191 = scalar_lea.vmem %s0, 271
  %v192 = vld [vmem:[%s191] sm:$0x1]
  %s193 = scalar_lea.vmem %s0, 302
  %v194 = vld [vmem:[%s193] sm:$0x2]
  %vm195 = vcmask 1041409
  %v196 = vsel %vm195, %v194, %v192
  %s197 = scalar_lea.vmem %s0, 333
  %v198 = vld [vmem:[%s197] sm:$0x4]
  %vm199 = vcmask 1042434
  %v200 = vsel %vm199, %v198, %v196
  %s201 = scalar_lea.vmem %s0, 364
  %v202 = vld [vmem:[%s201] sm:$0x8]
  %vm203 = vcmask 1043459
  %v204 = vsel %vm203, %v202, %v200
  %s205 = scalar_lea.vmem %s0, 395
  %v206 = vld [vmem:[%s205] sm:$0x10]
  %vm207 = vcmask 1044484
  %v208 = vsel %vm207, %v206, %v204
  %s209 = scalar_lea.vmem %s0, 426
  %v210 = vld [vmem:[%s209] sm:$0x20]
  %vm211 = vcmask 1045509
  %v212 = vsel %vm211, %v210, %v208
  %s213 = scalar_lea.vmem %s0, 457
  %v214 = vld [vmem:[%s213] sm:$0x40]
  %vm215 = vcmask 1046534
  %v216 = vsel %vm215, %v214, %v212
  %s217 = scalar_lea.vmem %s0, 488
  %v218 = vld [vmem:[%s217] sm:$0x80]
  %vm219 = vcmask 1047559
  %v220 = vsel %vm219, %v218, %v216
  %221 = vrot.lane.b32.xlu0 %v220, 112
  %v222 = vpop.permute.xlu0 %221
  %vm223 = vcmask 1048448
  %s224 = scalar_lea.vmem %s1, 40
  %225 = vst.msk [vmem:[%s224] sm:$0xff] %vm223, %v222
  %s226 = scalar_lea.vmem %s0, 23
  %v227 = vld [vmem:[%s226] sm:$0x1]
  %s228 = scalar_lea.vmem %s0, 54
  %v229 = vld [vmem:[%s228] sm:$0x2]
  %vm230 = vcmask 1041409
  %v231 = vsel %vm230, %v229, %v227
  %s232 = scalar_lea.vmem %s0, 85
  %v233 = vld [vmem:[%s232] sm:$0x4]
  %vm234 = vcmask 1042434
  %v235 = vsel %vm234, %v233, %v231
  %s236 = scalar_lea.vmem %s0, 116
  %v237 = vld [vmem:[%s236] sm:$0x8]
  %vm238 = vcmask 1043459
  %v239 = vsel %vm238, %v237, %v235
  %s240 = scalar_lea.vmem %s0, 147
  %v241 = vld [vmem:[%s240] sm:$0x10]
  %vm242 = vcmask 1044484
  %v243 = vsel %vm242, %v241, %v239
  %s244 = scalar_lea.vmem %s0, 178
  %v245 = vld [vmem:[%s244] sm:$0x20]
  %vm246 = vcmask 1045509
  %v247 = vsel %vm246, %v245, %v243
  %s248 = scalar_lea.vmem %s0, 209
  %v249 = vld [vmem:[%s248] sm:$0x40]
  %vm250 = vcmask 1046534
  %v251 = vsel %vm250, %v249, %v247
  %s252 = scalar_lea.vmem %s0, 240
  %v253 = vld [vmem:[%s252] sm:$0x80]
  %vm254 = vcmask 1047559
  %v255 = vsel %vm254, %v253, %v251
  %256 = vrot.lane.b32.xlu0 %v255, 112
  %v257 = vpop.permute.xlu0 %256
  %vm258 = vcmask 1048448
  %s259 = scalar_lea.vmem %s1, 16
  %260 = vst.msk [vmem:[%s259] sm:$0xff] %vm258, %v257
  %s261 = scalar_lea.vmem %s0, 279
  %v262 = vld [vmem:[%s261] sm:$0x1]
  %s263 = scalar_lea.vmem %s0, 310
  %v264 = vld [vmem:[%s263] sm:$0x2]
  %vm265 = vcmask 1041409
  %v266 = vsel %vm265, %v264, %v262
  %s267 = scalar_lea.vmem %s0, 341
  %v268 = vld [vmem:[%s267] sm:$0x4]
  %vm269 = vcmask 1042434
  %v270 = vsel %vm269, %v268, %v266
  %s271 = scalar_lea.vmem %s0, 372
  %v272 = vld [vmem:[%s271] sm:$0x8]
  %vm273 = vcmask 1043459
  %v274 = vsel %vm273, %v272, %v270
  %s275 = scalar_lea.vmem %s0, 403
  %v276 = vld [vmem:[%s275] sm:$0x10]
  %vm277 = vcmask 1044484
  %v278 = vsel %vm277, %v276, %v274
  %s279 = scalar_lea.vmem %s0, 434
  %v280 = vld [vmem:[%s279] sm:$0x20]
  %vm281 = vcmask 1045509
  %v282 = vsel %vm281, %v280, %v278
  %s283 = scalar_lea.vmem %s0, 465
  %v284 = vld [vmem:[%s283] sm:$0x40]
  %vm285 = vcmask 1046534
  %v286 = vsel %vm285, %v284, %v282
  %s287 = scalar_lea.vmem %s0, 496
  %v288 = vld [vmem:[%s287] sm:$0x80]
  %vm289 = vcmask 1047559
  %v290 = vsel %vm289, %v288, %v286
  %291 = vrot.lane.b32.xlu0 %v290, 112
  %v292 = vpop.permute.xlu0 %291
  %vm293 = vcmask 1048448
  %s294 = scalar_lea.vmem %s1, 48
  %295 = vst.msk [vmem:[%s294] sm:$0xff] %vm293, %v292
  %s296 = scalar_lea.vmem %s0, 6
  %v297 = vld [vmem:[%s296] sm:$0x1]
  %s298 = scalar_lea.vmem %s0, 37
  %v299 = vld [vmem:[%s298] sm:$0x2]
  %vm300 = vcmask 1041409
  %v301 = vsel %vm300, %v299, %v297
  %s302 = scalar_lea.vmem %s0, 68
  %v303 = vld [vmem:[%s302] sm:$0x4]
  %vm304 = vcmask 1042434
  %v305 = vsel %vm304, %v303, %v301
  %s306 = scalar_lea.vmem %s0, 99
  %v307 = vld [vmem:[%s306] sm:$0x8]
  %vm308 = vcmask 1043459
  %v309 = vsel %vm308, %v307, %v305
  %s310 = scalar_lea.vmem %s0, 130
  %v311 = vld [vmem:[%s310] sm:$0x10]
  %vm312 = vcmask 1044484
  %v313 = vsel %vm312, %v311, %v309
  %s314 = scalar_lea.vmem %s0, 161
  %v315 = vld [vmem:[%s314] sm:$0x20]
  %vm316 = vcmask 1045509
  %v317 = vsel %vm316, %v315, %v313
  %s318 = scalar_lea.vmem %s0, 192
  %v319 = vld [vmem:[%s318] sm:$0x40]
  %vm320 = vcmask 1046534
  %v321 = vsel %vm320, %v319, %v317
  %s322 = scalar_lea.vmem %s0, 223
  %v323 = vld [vmem:[%s322] sm:$0x80]
  %vm324 = vcmask 1047559
  %v325 = vsel %vm324, %v323, %v321
  %326 = vrot.lane.b32.xlu0 %v325, 96
  %v327 = vpop.permute.xlu0 %326
  %vm328 = vcmask 917248
  %329 = vst.msk [vmem:[%s1] sm:$0xff] %vm328, %v327
  %s330 = scalar_lea.vmem %s0, 262
  %v331 = vld [vmem:[%s330] sm:$0x1]
  %s332 = scalar_lea.vmem %s0, 293
  %v333 = vld [vmem:[%s332] sm:$0x2]
  %vm334 = vcmask 1041409
  %v335 = vsel %vm334, %v333, %v331
  %s336 = scalar_lea.vmem %s0, 324
  %v337 = vld [vmem:[%s336] sm:$0x4]
  %vm338 = vcmask 1042434
  %v339 = vsel %vm338, %v337, %v335
  %s340 = scalar_lea.vmem %s0, 355
  %v341 = vld [vmem:[%s340] sm:$0x8]
  %vm342 = vcmask 1043459
  %v343 = vsel %vm342, %v341, %v339
  %s344 = scalar_lea.vmem %s0, 386
  %v345 = vld [vmem:[%s344] sm:$0x10]
  %vm346 = vcmask 1044484
  %v347 = vsel %vm346, %v345, %v343
  %s348 = scalar_lea.vmem %s0, 417
  %v349 = vld [vmem:[%s348] sm:$0x20]
  %vm350 = vcmask 1045509
  %v351 = vsel %vm350, %v349, %v347
  %s352 = scalar_lea.vmem %s0, 448
  %v353 = vld [vmem:[%s352] sm:$0x40]
  %vm354 = vcmask 1046534
  %v355 = vsel %vm354, %v353, %v351
  %s356 = scalar_lea.vmem %s0, 479
  %v357 = vld [vmem:[%s356] sm:$0x80]
  %vm358 = vcmask 1047559
  %v359 = vsel %vm358, %v357, %v355
  %360 = vrot.lane.b32.xlu0 %v359, 96
  %v361 = vpop.permute.xlu0 %360
  %vm362 = vcmask 917248
  %s363 = scalar_lea.vmem %s1, 32
  %364 = vst.msk [vmem:[%s363] sm:$0xff] %vm362, %v361
  %s365 = scalar_lea.vmem %s0, 14
  %v366 = vld [vmem:[%s365] sm:$0x1]
  %s367 = scalar_lea.vmem %s0, 45
  %v368 = vld [vmem:[%s367] sm:$0x2]
  %vm369 = vcmask 1041409
  %v370 = vsel %vm369, %v368, %v366
  %s371 = scalar_lea.vmem %s0, 76
  %v372 = vld [vmem:[%s371] sm:$0x4]
  %vm373 = vcmask 1042434
  %v374 = vsel %vm373, %v372, %v370
  %s375 = scalar_lea.vmem %s0, 107
  %v376 = vld [vmem:[%s375] sm:$0x8]
  %vm377 = vcmask 1043459
  %v378 = vsel %vm377, %v376, %v374
  %s379 = scalar_lea.vmem %s0, 138
  %v380 = vld [vmem:[%s379] sm:$0x10]
  %vm381 = vcmask 1044484
  %v382 = vsel %vm381, %v380, %v378
  %s383 = scalar_lea.vmem %s0, 169
  %v384 = vld [vmem:[%s383] sm:$0x20]
  %vm385 = vcmask 1045509
  %v386 = vsel %vm385, %v384, %v382
  %s387 = scalar_lea.vmem %s0, 200
  %v388 = vld [vmem:[%s387] sm:$0x40]
  %vm389 = vcmask 1046534
  %v390 = vsel %vm389, %v388, %v386
  %s391 = scalar_lea.vmem %s0, 231
  %v392 = vld [vmem:[%s391] sm:$0x80]
  %vm393 = vcmask 1047559
  %v394 = vsel %vm393, %v392, %v390
  %395 = vrot.lane.b32.xlu0 %v394, 96
  %v396 = vpop.permute.xlu0 %395
  %vm397 = vcmask 917248
  %s398 = scalar_lea.vmem %s1, 8
  %399 = vst.msk [vmem:[%s398] sm:$0xff] %vm397, %v396
  %s400 = scalar_lea.vmem %s0, 270
  %v401 = vld [vmem:[%s400] sm:$0x1]
  %s402 = scalar_lea.vmem %s0, 301
  %v403 = vld [vmem:[%s402] sm:$0x2]
  %vm404 = vcmask 1041409
  %v405 = vsel %vm404, %v403, %v401
  %s406 = scalar_lea.vmem %s0, 332
  %v407 = vld [vmem:[%s406] sm:$0x4]
  %vm408 = vcmask 1042434
  %v409 = vsel %vm408, %v407, %v405
  %s410 = scalar_lea.vmem %s0, 363
  %v411 = vld [vmem:[%s410] sm:$0x8]
  %vm412 = vcmask 1043459
  %v413 = vsel %vm412, %v411, %v409
  %s414 = scalar_lea.vmem %s0, 394
  %v415 = vld [vmem:[%s414] sm:$0x10]
  %vm416 = vcmask 1044484
  %v417 = vsel %vm416, %v415, %v413
  %s418 = scalar_lea.vmem %s0, 425
  %v419 = vld [vmem:[%s418] sm:$0x20]
  %vm420 = vcmask 1045509
  %v421 = vsel %vm420, %v419, %v417
  %s422 = scalar_lea.vmem %s0, 456
  %v423 = vld [vmem:[%s422] sm:$0x40]
  %vm424 = vcmask 1046534
  %v425 = vsel %vm424, %v423, %v421
  %s426 = scalar_lea.vmem %s0, 487
  %v427 = vld [vmem:[%s426] sm:$0x80]
  %vm428 = vcmask 1047559
  %v429 = vsel %vm428, %v427, %v425
  %430 = vrot.lane.b32.xlu0 %v429, 96
  %v431 = vpop.permute.xlu0 %430
  %vm432 = vcmask 917248
  %s433 = scalar_lea.vmem %s1, 40
  %434 = vst.msk [vmem:[%s433] sm:$0xff] %vm432, %v431
  %s435 = scalar_lea.vmem %s0, 22
  %v436 = vld [vmem:[%s435] sm:$0x1]
  %s437 = scalar_lea.vmem %s0, 53
  %v438 = vld [vmem:[%s437] sm:$0x2]
  %vm439 = vcmask 1041409
  %v440 = vsel %vm439, %v438, %v436
  %s441 = scalar_lea.vmem %s0, 84
  %v442 = vld [vmem:[%s441] sm:$0x4]
  %vm443 = vcmask 1042434
  %v444 = vsel %vm443, %v442, %v440
  %s445 = scalar_lea.vmem %s0, 115
  %v446 = vld [vmem:[%s445] sm:$0x8]
  %vm447 = vcmask 1043459
  %v448 = vsel %vm447, %v446, %v444
  %s449 = scalar_lea.vmem %s0, 146
  %v450 = vld [vmem:[%s449] sm:$0x10]
  %vm451 = vcmask 1044484
  %v452 = vsel %vm451, %v450, %v448
  %s453 = scalar_lea.vmem %s0, 177
  %v454 = vld [vmem:[%s453] sm:$0x20]
  %vm455 = vcmask 1045509
  %v456 = vsel %vm455, %v454, %v452
  %s457 = scalar_lea.vmem %s0, 208
  %v458 = vld [vmem:[%s457] sm:$0x40]
  %vm459 = vcmask 1046534
  %v460 = vsel %vm459, %v458, %v456
  %s461 = scalar_lea.vmem %s0, 239
  %v462 = vld [vmem:[%s461] sm:$0x80]
  %vm463 = vcmask 1047559
  %v464 = vsel %vm463, %v462, %v460
  %465 = vrot.lane.b32.xlu0 %v464, 96
  %v466 = vpop.permute.xlu0 %465
  %vm467 = vcmask 917248
  %s468 = scalar_lea.vmem %s1, 16
  %469 = vst.msk [vmem:[%s468] sm:$0xff] %vm467, %v466
  %s470 = scalar_lea.vmem %s0, 278
  %v471 = vld [vmem:[%s470] sm:$0x1]
  %s472 = scalar_lea.vmem %s0, 309
  %v473 = vld [vmem:[%s472] sm:$0x2]
  %vm474 = vcmask 1041409
  %v475 = vsel %vm474, %v473, %v471
  %s476 = scalar_lea.vmem %s0, 340
  %v477 = vld [vmem:[%s476] sm:$0x4]
  %vm478 = vcmask 1042434
  %v479 = vsel %vm478, %v477, %v475
  %s480 = scalar_lea.vmem %s0, 371
  %v481 = vld [vmem:[%s480] sm:$0x8]
  %vm482 = vcmask 1043459
  %v483 = vsel %vm482, %v481, %v479
  %s484 = scalar_lea.vmem %s0, 402
  %v485 = vld [vmem:[%s484] sm:$0x10]
  %vm486 = vcmask 1044484
  %v487 = vsel %vm486, %v485, %v483
  %s488 = scalar_lea.vmem %s0, 433
  %v489 = vld [vmem:[%s488] sm:$0x20]
  %vm490 = vcmask 1045509
  %v491 = vsel %vm490, %v489, %v487
  %s492 = scalar_lea.vmem %s0, 464
  %v493 = vld [vmem:[%s492] sm:$0x40]
  %vm494 = vcmask 1046534
  %v495 = vsel %vm494, %v493, %v491
  %s496 = scalar_lea.vmem %s0, 495
  %v497 = vld [vmem:[%s496] sm:$0x80]
  %vm498 = vcmask 1047559
  %v499 = vsel %vm498, %v497, %v495
  %500 = vrot.lane.b32.xlu0 %v499, 96
  %v501 = vpop.permute.xlu0 %500
  %vm502 = vcmask 917248
  %s503 = scalar_lea.vmem %s1, 48
  %504 = vst.msk [vmem:[%s503] sm:$0xff] %vm502, %v501
  %s505 = scalar_lea.vmem %s0, 5
  %v506 = vld [vmem:[%s505] sm:$0x1]
  %s507 = scalar_lea.vmem %s0, 36
  %v508 = vld [vmem:[%s507] sm:$0x2]
  %vm509 = vcmask 1041409
  %v510 = vsel %vm509, %v508, %v506
  %s511 = scalar_lea.vmem %s0, 67
  %v512 = vld [vmem:[%s511] sm:$0x4]
  %vm513 = vcmask 1042434
  %v514 = vsel %vm513, %v512, %v510
  %s515 = scalar_lea.vmem %s0, 98
  %v516 = vld [vmem:[%s515] sm:$0x8]
  %vm517 = vcmask 1043459
  %v518 = vsel %vm517, %v516, %v514
  %s519 = scalar_lea.vmem %s0, 129
  %v520 = vld [vmem:[%s519] sm:$0x10]
  %vm521 = vcmask 1044484
  %v522 = vsel %vm521, %v520, %v518
  %s523 = scalar_lea.vmem %s0, 160
  %v524 = vld [vmem:[%s523] sm:$0x20]
  %vm525 = vcmask 1045509
  %v526 = vsel %vm525, %v524, %v522
  %s527 = scalar_lea.vmem %s0, 191
  %v528 = vld [vmem:[%s527] sm:$0x40]
  %vm529 = vcmask 1046534
  %v530 = vsel %vm529, %v528, %v526
  %s531 = scalar_lea.vmem %s0, 222
  %v532 = vld [vmem:[%s531] sm:$0x80]
  %vm533 = vcmask 1047559
  %v534 = vsel %vm533, %v532, %v530
  %535 = vrot.lane.b32.xlu0 %v534, 80
  %v536 = vpop.permute.xlu0 %535
  %vm537 = vcmask 786048
  %538 = vst.msk [vmem:[%s1] sm:$0xff] %vm537, %v536
  %s539 = scalar_lea.vmem %s0, 261
  %v540 = vld [vmem:[%s539] sm:$0x1]
  %s541 = scalar_lea.vmem %s0, 292
  %v542 = vld [vmem:[%s541] sm:$0x2]
  %vm543 = vcmask 1041409
  %v544 = vsel %vm543, %v542, %v540
  %s545 = scalar_lea.vmem %s0, 323
  %v546 = vld [vmem:[%s545] sm:$0x4]
  %vm547 = vcmask 1042434
  %v548 = vsel %vm547, %v546, %v544
  %s549 = scalar_lea.vmem %s0, 354
  %v550 = vld [vmem:[%s549] sm:$0x8]
  %vm551 = vcmask 1043459
  %v552 = vsel %vm551, %v550, %v548
  %s553 = scalar_lea.vmem %s0, 385
  %v554 = vld [vmem:[%s553] sm:$0x10]
  %vm555 = vcmask 1044484
  %v556 = vsel %vm555, %v554, %v552
  %s557 = scalar_lea.vmem %s0, 416
  %v558 = vld [vmem:[%s557] sm:$0x20]
  %vm559 = vcmask 1045509
  %v560 = vsel %vm559, %v558, %v556
  %s561 = scalar_lea.vmem %s0, 447
  %v562 = vld [vmem:[%s561] sm:$0x40]
  %vm563 = vcmask 1046534
  %v564 = vsel %vm563, %v562, %v560
  %s565 = scalar_lea.vmem %s0, 478
  %v566 = vld [vmem:[%s565] sm:$0x80]
  %vm567 = vcmask 1047559
  %v568 = vsel %vm567, %v566, %v564
  %569 = vrot.lane.b32.xlu0 %v568, 80
  %v570 = vpop.permute.xlu0 %569
  %vm571 = vcmask 786048
  %s572 = scalar_lea.vmem %s1, 32
  %573 = vst.msk [vmem:[%s572] sm:$0xff] %vm571, %v570
  %s574 = scalar_lea.vmem %s0, 13
  %v575 = vld [vmem:[%s574] sm:$0x1]
  %s576 = scalar_lea.vmem %s0, 44
  %v577 = vld [vmem:[%s576] sm:$0x2]
  %vm578 = vcmask 1041409
  %v579 = vsel %vm578, %v577, %v575
  %s580 = scalar_lea.vmem %s0, 75
  %v581 = vld [vmem:[%s580] sm:$0x4]
  %vm582 = vcmask 1042434
  %v583 = vsel %vm582, %v581, %v579
  %s584 = scalar_lea.vmem %s0, 106
  %v585 = vld [vmem:[%s584] sm:$0x8]
  %vm586 = vcmask 1043459
  %v587 = vsel %vm586, %v585, %v583
  %s588 = scalar_lea.vmem %s0, 137
  %v589 = vld [vmem:[%s588] sm:$0x10]
  %vm590 = vcmask 1044484
  %v591 = vsel %vm590, %v589, %v587
  %s592 = scalar_lea.vmem %s0, 168
  %v593 = vld [vmem:[%s592] sm:$0x20]
  %vm594 = vcmask 1045509
  %v595 = vsel %vm594, %v593, %v591
  %s596 = scalar_lea.vmem %s0, 199
  %v597 = vld [vmem:[%s596] sm:$0x40]
  %vm598 = vcmask 1046534
  %v599 = vsel %vm598, %v597, %v595
  %s600 = scalar_lea.vmem %s0, 230
  %v601 = vld [vmem:[%s600] sm:$0x80]
  %vm602 = vcmask 1047559
  %v603 = vsel %vm602, %v601, %v599
  %604 = vrot.lane.b32.xlu0 %v603, 80
  %v605 = vpop.permute.xlu0 %604
  %vm606 = vcmask 786048
  %s607 = scalar_lea.vmem %s1, 8
  %608 = vst.msk [vmem:[%s607] sm:$0xff] %vm606, %v605
  %s609 = scalar_lea.vmem %s0, 269
  %v610 = vld [vmem:[%s609] sm:$0x1]
  %s611 = scalar_lea.vmem %s0, 300
  %v612 = vld [vmem:[%s611] sm:$0x2]
  %vm613 = vcmask 1041409
  %v614 = vsel %vm613, %v612, %v610
  %s615 = scalar_lea.vmem %s0, 331
  %v616 = vld [vmem:[%s615] sm:$0x4]
  %vm617 = vcmask 1042434
  %v618 = vsel %vm617, %v616, %v614
  %s619 = scalar_lea.vmem %s0, 362
  %v620 = vld [vmem:[%s619] sm:$0x8]
  %vm621 = vcmask 1043459
  %v622 = vsel %vm621, %v620, %v618
  %s623 = scalar_lea.vmem %s0, 393
  %v624 = vld [vmem:[%s623] sm:$0x10]
  %vm625 = vcmask 1044484
  %v626 = vsel %vm625, %v624, %v622
  %s627 = scalar_lea.vmem %s0, 424
  %v628 = vld [vmem:[%s627] sm:$0x20]
  %vm629 = vcmask 1045509
  %v630 = vsel %vm629, %v628, %v626
  %s631 = scalar_lea.vmem %s0, 455
  %v632 = vld [vmem:[%s631] sm:$0x40]
  %vm633 = vcmask 1046534
  %v634 = vsel %vm633, %v632, %v630
  %s635 = scalar_lea.vmem %s0, 486
  %v636 = vld [vmem:[%s635] sm:$0x80]
  %vm637 = vcmask 1047559
  %v638 = vsel %vm637, %v636, %v634
  %639 = vrot.lane.b32.xlu0 %v638, 80
  %v640 = vpop.permute.xlu0 %639
  %vm641 = vcmask 786048
  %s642 = scalar_lea.vmem %s1, 40
  %643 = vst.msk [vmem:[%s642] sm:$0xff] %vm641, %v640
  %s644 = scalar_lea.vmem %s0, 21
  %v645 = vld [vmem:[%s644] sm:$0x1]
  %s646 = scalar_lea.vmem %s0, 52
  %v647 = vld [vmem:[%s646] sm:$0x2]
  %vm648 = vcmask 1041409
  %v649 = vsel %vm648, %v647, %v645
  %s650 = scalar_lea.vmem %s0, 83
  %v651 = vld [vmem:[%s650] sm:$0x4]
  %vm652 = vcmask 1042434
  %v653 = vsel %vm652, %v651, %v649
  %s654 = scalar_lea.vmem %s0, 114
  %v655 = vld [vmem:[%s654] sm:$0x8]
  %vm656 = vcmask 1043459
  %v657 = vsel %vm656, %v655, %v653
  %s658 = scalar_lea.vmem %s0, 145
  %v659 = vld [vmem:[%s658] sm:$0x10]
  %vm660 = vcmask 1044484
  %v661 = vsel %vm660, %v659, %v657
  %s662 = scalar_lea.vmem %s0, 176
  %v663 = vld [vmem:[%s662] sm:$0x20]
  %vm664 = vcmask 1045509
  %v665 = vsel %vm664, %v663, %v661
  %s666 = scalar_lea.vmem %s0, 207
  %v667 = vld [vmem:[%s666] sm:$0x40]
  %vm668 = vcmask 1046534
  %v669 = vsel %vm668, %v667, %v665
  %s670 = scalar_lea.vmem %s0, 238
  %v671 = vld [vmem:[%s670] sm:$0x80]
  %vm672 = vcmask 1047559
  %v673 = vsel %vm672, %v671, %v669
  %674 = vrot.lane.b32.xlu0 %v673, 80
  %v675 = vpop.permute.xlu0 %674
  %vm676 = vcmask 786048
  %s677 = scalar_lea.vmem %s1, 16
  %678 = vst.msk [vmem:[%s677] sm:$0xff] %vm676, %v675
  %s679 = scalar_lea.vmem %s0, 277
  %v680 = vld [vmem:[%s679] sm:$0x1]
  %s681 = scalar_lea.vmem %s0, 308
  %v682 = vld [vmem:[%s681] sm:$0x2]
  %vm683 = vcmask 1041409
  %v684 = vsel %vm683, %v682, %v680
  %s685 = scalar_lea.vmem %s0, 339
  %v686 = vld [vmem:[%s685] sm:$0x4]
  %vm687 = vcmask 1042434
  %v688 = vsel %vm687, %v686, %v684
  %s689 = scalar_lea.vmem %s0, 370
  %v690 = vld [vmem:[%s689] sm:$0x8]
  %vm691 = vcmask 1043459
  %v692 = vsel %vm691, %v690, %v688
  %s693 = scalar_lea.vmem %s0, 401
  %v694 = vld [vmem:[%s693] sm:$0x10]
  %vm695 = vcmask 1044484
  %v696 = vsel %vm695, %v694, %v692
  %s697 = scalar_lea.vmem %s0, 432
  %v698 = vld [vmem:[%s697] sm:$0x20]
  %vm699 = vcmask 1045509
  %v700 = vsel %vm699, %v698, %v696
  %s701 = scalar_lea.vmem %s0, 463
  %v702 = vld [vmem:[%s701] sm:$0x40]
  %vm703 = vcmask 1046534
  %v704 = vsel %vm703, %v702, %v700
  %s705 = scalar_lea.vmem %s0, 494
  %v706 = vld [vmem:[%s705] sm:$0x80]
  %vm707 = vcmask 1047559
  %v708 = vsel %vm707, %v706, %v704
  %709 = vrot.lane.b32.xlu0 %v708, 80
  %v710 = vpop.permute.xlu0 %709
  %vm711 = vcmask 786048
  %s712 = scalar_lea.vmem %s1, 48
  %713 = vst.msk [vmem:[%s712] sm:$0xff] %vm711, %v710
  %s714 = scalar_lea.vmem %s0, 4
  %v715 = vld [vmem:[%s714] sm:$0x1]
  %s716 = scalar_lea.vmem %s0, 35
  %v717 = vld [vmem:[%s716] sm:$0x2]
  %vm718 = vcmask 1041409
  %v719 = vsel %vm718, %v717, %v715
  %s720 = scalar_lea.vmem %s0, 66
  %v721 = vld [vmem:[%s720] sm:$0x4]
  %vm722 = vcmask 1042434
  %v723 = vsel %vm722, %v721, %v719
  %s724 = scalar_lea.vmem %s0, 97
  %v725 = vld [vmem:[%s724] sm:$0x8]
  %vm726 = vcmask 1043459
  %v727 = vsel %vm726, %v725, %v723
  %s728 = scalar_lea.vmem %s0, 128
  %v729 = vld [vmem:[%s728] sm:$0x10]
  %vm730 = vcmask 1044484
  %v731 = vsel %vm730, %v729, %v727
  %s732 = scalar_lea.vmem %s0, 159
  %v733 = vld [vmem:[%s732] sm:$0x20]
  %vm734 = vcmask 1045509
  %v735 = vsel %vm734, %v733, %v731
  %s736 = scalar_lea.vmem %s0, 190
  %v737 = vld [vmem:[%s736] sm:$0x40]
  %vm738 = vcmask 1046534
  %v739 = vsel %vm738, %v737, %v735
  %s740 = scalar_lea.vmem %s0, 221
  %v741 = vld [vmem:[%s740] sm:$0x80]
  %vm742 = vcmask 1047559
  %v743 = vsel %vm742, %v741, %v739
  %744 = vrot.lane.b32.xlu0 %v743, 64
  %v745 = vpop.permute.xlu0 %744
  %vm746 = vcmask 654848
  %747 = vst.msk [vmem:[%s1] sm:$0xff] %vm746, %v745
  %s748 = scalar_lea.vmem %s0, 260
  %v749 = vld [vmem:[%s748] sm:$0x1]
  %s750 = scalar_lea.vmem %s0, 291
  %v751 = vld [vmem:[%s750] sm:$0x2]
  %vm752 = vcmask 1041409
  %v753 = vsel %vm752, %v751, %v749
  %s754 = scalar_lea.vmem %s0, 322
  %v755 = vld [vmem:[%s754] sm:$0x4]
  %vm756 = vcmask 1042434
  %v757 = vsel %vm756, %v755, %v753
  %s758 = scalar_lea.vmem %s0, 353
  %v759 = vld [vmem:[%s758] sm:$0x8]
  %vm760 = vcmask 1043459
  %v761 = vsel %vm760, %v759, %v757
  %s762 = scalar_lea.vmem %s0, 384
  %v763 = vld [vmem:[%s762] sm:$0x10]
  %vm764 = vcmask 1044484
  %v765 = vsel %vm764, %v763, %v761
  %s766 = scalar_lea.vmem %s0, 415
  %v767 = vld [vmem:[%s766] sm:$0x20]
  %vm768 = vcmask 1045509
  %v769 = vsel %vm768, %v767, %v765
  %s770 = scalar_lea.vmem %s0, 446
  %v771 = vld [vmem:[%s770] sm:$0x40]
  %vm772 = vcmask 1046534
  %v773 = vsel %vm772, %v771, %v769
  %s774 = scalar_lea.vmem %s0, 477
  %v775 = vld [vmem:[%s774] sm:$0x80]
  %vm776 = vcmask 1047559
  %v777 = vsel %vm776, %v775, %v773
  %778 = vrot.lane.b32.xlu0 %v777, 64
  %v779 = vpop.permute.xlu0 %778
  %vm780 = vcmask 654848
  %s781 = scalar_lea.vmem %s1, 32
  %782 = vst.msk [vmem:[%s781] sm:$0xff] %vm780, %v779
  %s783 = scalar_lea.vmem %s0, 12
  %v784 = vld [vmem:[%s783] sm:$0x1]
  %s785 = scalar_lea.vmem %s0, 43
  %v786 = vld [vmem:[%s785] sm:$0x2]
  %vm787 = vcmask 1041409
  %v788 = vsel %vm787, %v786, %v784
  %s789 = scalar_lea.vmem %s0, 74
  %v790 = vld [vmem:[%s789] sm:$0x4]
  %vm791 = vcmask 1042434
  %v792 = vsel %vm791, %v790, %v788
  %s793 = scalar_lea.vmem %s0, 105
  %v794 = vld [vmem:[%s793] sm:$0x8]
  %vm795 = vcmask 1043459
  %v796 = vsel %vm795, %v794, %v792
  %s797 = scalar_lea.vmem %s0, 136
  %v798 = vld [vmem:[%s797] sm:$0x10]
  %vm799 = vcmask 1044484
  %v800 = vsel %vm799, %v798, %v796
  %s801 = scalar_lea.vmem %s0, 167
  %v802 = vld [vmem:[%s801] sm:$0x20]
  %vm803 = vcmask 1045509
  %v804 = vsel %vm803, %v802, %v800
  %s805 = scalar_lea.vmem %s0, 198
  %v806 = vld [vmem:[%s805] sm:$0x40]
  %vm807 = vcmask 1046534
  %v808 = vsel %vm807, %v806, %v804
  %s809 = scalar_lea.vmem %s0, 229
  %v810 = vld [vmem:[%s809] sm:$0x80]
  %vm811 = vcmask 1047559
  %v812 = vsel %vm811, %v810, %v808
  %813 = vrot.lane.b32.xlu0 %v812, 64
  %v814 = vpop.permute.xlu0 %813
  %vm815 = vcmask 654848
  %s816 = scalar_lea.vmem %s1, 8
  %817 = vst.msk [vmem:[%s816] sm:$0xff] %vm815, %v814
  %s818 = scalar_lea.vmem %s0, 268
  %v819 = vld [vmem:[%s818] sm:$0x1]
  %s820 = scalar_lea.vmem %s0, 299
  %v821 = vld [vmem:[%s820] sm:$0x2]
  %vm822 = vcmask 1041409
  %v823 = vsel %vm822, %v821, %v819
  %s824 = scalar_lea.vmem %s0, 330
  %v825 = vld [vmem:[%s824] sm:$0x4]
  %vm826 = vcmask 1042434
  %v827 = vsel %vm826, %v825, %v823
  %s828 = scalar_lea.vmem %s0, 361
  %v829 = vld [vmem:[%s828] sm:$0x8]
  %vm830 = vcmask 1043459
  %v831 = vsel %vm830, %v829, %v827
  %s832 = scalar_lea.vmem %s0, 392
  %v833 = vld [vmem:[%s832] sm:$0x10]
  %vm834 = vcmask 1044484
  %v835 = vsel %vm834, %v833, %v831
  %s836 = scalar_lea.vmem %s0, 423
  %v837 = vld [vmem:[%s836] sm:$0x20]
  %vm838 = vcmask 1045509
  %v839 = vsel %vm838, %v837, %v835
  %s840 = scalar_lea.vmem %s0, 454
  %v841 = vld [vmem:[%s840] sm:$0x40]
  %vm842 = vcmask 1046534
  %v843 = vsel %vm842, %v841, %v839
  %s844 = scalar_lea.vmem %s0, 485
  %v845 = vld [vmem:[%s844] sm:$0x80]
  %vm846 = vcmask 1047559
  %v847 = vsel %vm846, %v845, %v843
  %848 = vrot.lane.b32.xlu0 %v847, 64
  %v849 = vpop.permute.xlu0 %848
  %vm850 = vcmask 654848
  %s851 = scalar_lea.vmem %s1, 40
  %852 = vst.msk [vmem:[%s851] sm:$0xff] %vm850, %v849
  %s853 = scalar_lea.vmem %s0, 20
  %v854 = vld [vmem:[%s853] sm:$0x1]
  %s855 = scalar_lea.vmem %s0, 51
  %v856 = vld [vmem:[%s855] sm:$0x2]
  %vm857 = vcmask 1041409
  %v858 = vsel %vm857, %v856, %v854
  %s859 = scalar_lea.vmem %s0, 82
  %v860 = vld [vmem:[%s859] sm:$0x4]
  %vm861 = vcmask 1042434
  %v862 = vsel %vm861, %v860, %v858
  %s863 = scalar_lea.vmem %s0, 113
  %v864 = vld [vmem:[%s863] sm:$0x8]
  %vm865 = vcmask 1043459
  %v866 = vsel %vm865, %v864, %v862
  %s867 = scalar_lea.vmem %s0, 144
  %v868 = vld [vmem:[%s867] sm:$0x10]
  %vm869 = vcmask 1044484
  %v870 = vsel %vm869, %v868, %v866
  %s871 = scalar_lea.vmem %s0, 175
  %v872 = vld [vmem:[%s871] sm:$0x20]
  %vm873 = vcmask 1045509
  %v874 = vsel %vm873, %v872, %v870
  %s875 = scalar_lea.vmem %s0, 206
  %v876 = vld [vmem:[%s875] sm:$0x40]
  %vm877 = vcmask 1046534
  %v878 = vsel %vm877, %v876, %v874
  %s879 = scalar_lea.vmem %s0, 237
  %v880 = vld [vmem:[%s879] sm:$0x80]
  %vm881 = vcmask 1047559
  %v882 = vsel %vm881, %v880, %v878
  %883 = vrot.lane.b32.xlu0 %v882, 64
  %v884 = vpop.permute.xlu0 %883
  %vm885 = vcmask 654848
  %s886 = scalar_lea.vmem %s1, 16
  %887 = vst.msk [vmem:[%s886] sm:$0xff] %vm885, %v884
  %s888 = scalar_lea.vmem %s0, 276
  %v889 = vld [vmem:[%s888] sm:$0x1]
  %s890 = scalar_lea.vmem %s0, 307
  %v891 = vld [vmem:[%s890] sm:$0x2]
  %vm892 = vcmask 1041409
  %v893 = vsel %vm892, %v891, %v889
  %s894 = scalar_lea.vmem %s0, 338
  %v895 = vld [vmem:[%s894] sm:$0x4]
  %vm896 = vcmask 1042434
  %v897 = vsel %vm896, %v895, %v893
  %s898 = scalar_lea.vmem %s0, 369
  %v899 = vld [vmem:[%s898] sm:$0x8]
  %vm900 = vcmask 1043459
  %v901 = vsel %vm900, %v899, %v897
  %s902 = scalar_lea.vmem %s0, 400
  %v903 = vld [vmem:[%s902] sm:$0x10]
  %vm904 = vcmask 1044484
  %v905 = vsel %vm904, %v903, %v901
  %s906 = scalar_lea.vmem %s0, 431
  %v907 = vld [vmem:[%s906] sm:$0x20]
  %vm908 = vcmask 1045509
  %v909 = vsel %vm908, %v907, %v905
  %s910 = scalar_lea.vmem %s0, 462
  %v911 = vld [vmem:[%s910] sm:$0x40]
  %vm912 = vcmask 1046534
  %v913 = vsel %vm912, %v911, %v909
  %s914 = scalar_lea.vmem %s0, 493
  %v915 = vld [vmem:[%s914] sm:$0x80]
  %vm916 = vcmask 1047559
  %v917 = vsel %vm916, %v915, %v913
  %918 = vrot.lane.b32.xlu0 %v917, 64
  %v919 = vpop.permute.xlu0 %918
  %vm920 = vcmask 654848
  %s921 = scalar_lea.vmem %s1, 48
  %922 = vst.msk [vmem:[%s921] sm:$0xff] %vm920, %v919
  %s923 = scalar_lea.vmem %s0, 3
  %v924 = vld [vmem:[%s923] sm:$0x1]
  %s925 = scalar_lea.vmem %s0, 34
  %v926 = vld [vmem:[%s925] sm:$0x2]
  %vm927 = vcmask 1041409
  %v928 = vsel %vm927, %v926, %v924
  %s929 = scalar_lea.vmem %s0, 65
  %v930 = vld [vmem:[%s929] sm:$0x4]
  %vm931 = vcmask 1042434
  %v932 = vsel %vm931, %v930, %v928
  %s933 = scalar_lea.vmem %s0, 96
  %v934 = vld [vmem:[%s933] sm:$0x8]
  %vm935 = vcmask 1043459
  %v936 = vsel %vm935, %v934, %v932
  %s937 = scalar_lea.vmem %s0, 127
  %v938 = vld [vmem:[%s937] sm:$0x10]
  %vm939 = vcmask 1044484
  %v940 = vsel %vm939, %v938, %v936
  %s941 = scalar_lea.vmem %s0, 158
  %v942 = vld [vmem:[%s941] sm:$0x20]
  %vm943 = vcmask 1045509
  %v944 = vsel %vm943, %v942, %v940
  %s945 = scalar_lea.vmem %s0, 189
  %v946 = vld [vmem:[%s945] sm:$0x40]
  %vm947 = vcmask 1046534
  %v948 = vsel %vm947, %v946, %v944
  %s949 = scalar_lea.vmem %s0, 220
  %v950 = vld [vmem:[%s949] sm:$0x80]
  %vm951 = vcmask 1047559
  %v952 = vsel %vm951, %v950, %v948
  %953 = vrot.lane.b32.xlu0 %v952, 48
  %v954 = vpop.permute.xlu0 %953
  %vm955 = vcmask 523648
  %956 = vst.msk [vmem:[%s1] sm:$0xff] %vm955, %v954
  %s957 = scalar_lea.vmem %s0, 259
  %v958 = vld [vmem:[%s957] sm:$0x1]
  %s959 = scalar_lea.vmem %s0, 290
  %v960 = vld [vmem:[%s959] sm:$0x2]
  %vm961 = vcmask 1041409
  %v962 = vsel %vm961, %v960, %v958
  %s963 = scalar_lea.vmem %s0, 321
  %v964 = vld [vmem:[%s963] sm:$0x4]
  %vm965 = vcmask 1042434
  %v966 = vsel %vm965, %v964, %v962
  %s967 = scalar_lea.vmem %s0, 352
  %v968 = vld [vmem:[%s967] sm:$0x8]
  %vm969 = vcmask 1043459
  %v970 = vsel %vm969, %v968, %v966
  %s971 = scalar_lea.vmem %s0, 383
  %v972 = vld [vmem:[%s971] sm:$0x10]
  %vm973 = vcmask 1044484
  %v974 = vsel %vm973, %v972, %v970
  %s975 = scalar_lea.vmem %s0, 414
  %v976 = vld [vmem:[%s975] sm:$0x20]
  %vm977 = vcmask 1045509
  %v978 = vsel %vm977, %v976, %v974
  %s979 = scalar_lea.vmem %s0, 445
  %v980 = vld [vmem:[%s979] sm:$0x40]
  %vm981 = vcmask 1046534
  %v982 = vsel %vm981, %v980, %v978
  %s983 = scalar_lea.vmem %s0, 476
  %v984 = vld [vmem:[%s983] sm:$0x80]
  %vm985 = vcmask 1047559
  %v986 = vsel %vm985, %v984, %v982
  %987 = vrot.lane.b32.xlu0 %v986, 48
  %v988 = vpop.permute.xlu0 %987
  %vm989 = vcmask 523648
  %s990 = scalar_lea.vmem %s1, 32
  %991 = vst.msk [vmem:[%s990] sm:$0xff] %vm989, %v988
  %s992 = scalar_lea.vmem %s0, 11
  %v993 = vld [vmem:[%s992] sm:$0x1]
  %s994 = scalar_lea.vmem %s0, 42
  %v995 = vld [vmem:[%s994] sm:$0x2]
  %vm996 = vcmask 1041409
  %v997 = vsel %vm996, %v995, %v993
  %s998 = scalar_lea.vmem %s0, 73
  %v999 = vld [vmem:[%s998] sm:$0x4]
  %vm1000 = vcmask 1042434
  %v1001 = vsel %vm1000, %v999, %v997
  %s1002 = scalar_lea.vmem %s0, 104
  %v1003 = vld [vmem:[%s1002] sm:$0x8]
  %vm1004 = vcmask 1043459
  %v1005 = vsel %vm1004, %v1003, %v1001
  %s1006 = scalar_lea.vmem %s0, 135
  %v1007 = vld [vmem:[%s1006] sm:$0x10]
  %vm1008 = vcmask 1044484
  %v1009 = vsel %vm1008, %v1007, %v1005
  %s1010 = scalar_lea.vmem %s0, 166
  %v1011 = vld [vmem:[%s1010] sm:$0x20]
  %vm1012 = vcmask 1045509
  %v1013 = vsel %vm1012, %v1011, %v1009
  %s1014 = scalar_lea.vmem %s0, 197
  %v1015 = vld [vmem:[%s1014] sm:$0x40]
  %vm1016 = vcmask 1046534
  %v1017 = vsel %vm1016, %v1015, %v1013
  %s1018 = scalar_lea.vmem %s0, 228
  %v1019 = vld [vmem:[%s1018] sm:$0x80]
  %vm1020 = vcmask 1047559
  %v1021 = vsel %vm1020, %v1019, %v1017
  %1022 = vrot.lane.b32.xlu0 %v1021, 48
  %v1023 = vpop.permute.xlu0 %1022
  %vm1024 = vcmask 523648
  %s1025 = scalar_lea.vmem %s1, 8
  %1026 = vst.msk [vmem:[%s1025] sm:$0xff] %vm1024, %v1023
  %s1027 = scalar_lea.vmem %s0, 267
  %v1028 = vld [vmem:[%s1027] sm:$0x1]
  %s1029 = scalar_lea.vmem %s0, 298
  %v1030 = vld [vmem:[%s1029] sm:$0x2]
  %vm1031 = vcmask 1041409
  %v1032 = vsel %vm1031, %v1030, %v1028
  %s1033 = scalar_lea.vmem %s0, 329
  %v1034 = vld [vmem:[%s1033] sm:$0x4]
  %vm1035 = vcmask 1042434
  %v1036 = vsel %vm1035, %v1034, %v1032
  %s1037 = scalar_lea.vmem %s0, 360
  %v1038 = vld [vmem:[%s1037] sm:$0x8]
  %vm1039 = vcmask 1043459
  %v1040 = vsel %vm1039, %v1038, %v1036
  %s1041 = scalar_lea.vmem %s0, 391
  %v1042 = vld [vmem:[%s1041] sm:$0x10]
  %vm1043 = vcmask 1044484
  %v1044 = vsel %vm1043, %v1042, %v1040
  %s1045 = scalar_lea.vmem %s0, 422
  %v1046 = vld [vmem:[%s1045] sm:$0x20]
  %vm1047 = vcmask 1045509
  %v1048 = vsel %vm1047, %v1046, %v1044
  %s1049 = scalar_lea.vmem %s0, 453
  %v1050 = vld [vmem:[%s1049] sm:$0x40]
  %vm1051 = vcmask 1046534
  %v1052 = vsel %vm1051, %v1050, %v1048
  %s1053 = scalar_lea.vmem %s0, 484
  %v1054 = vld [vmem:[%s1053] sm:$0x80]
  %vm1055 = vcmask 1047559
  %v1056 = vsel %vm1055, %v1054, %v1052
  %1057 = vrot.lane.b32.xlu0 %v1056, 48
  %v1058 = vpop.permute.xlu0 %1057
  %vm1059 = vcmask 523648
  %s1060 = scalar_lea.vmem %s1, 40
  %1061 = vst.msk [vmem:[%s1060] sm:$0xff] %vm1059, %v1058
  %s1062 = scalar_lea.vmem %s0, 19
  %v1063 = vld [vmem:[%s1062] sm:$0x1]
  %s1064 = scalar_lea.vmem %s0, 50
  %v1065 = vld [vmem:[%s1064] sm:$0x2]
  %vm1066 = vcmask 1041409
  %v1067 = vsel %vm1066, %v1065, %v1063
  %s1068 = scalar_lea.vmem %s0, 81
  %v1069 = vld [vmem:[%s1068] sm:$0x4]
  %vm1070 = vcmask 1042434
  %v1071 = vsel %vm1070, %v1069, %v1067
  %s1072 = scalar_lea.vmem %s0, 112
  %v1073 = vld [vmem:[%s1072] sm:$0x8]
  %vm1074 = vcmask 1043459
  %v1075 = vsel %vm1074, %v1073, %v1071
  %s1076 = scalar_lea.vmem %s0, 143
  %v1077 = vld [vmem:[%s1076] sm:$0x10]
  %vm1078 = vcmask 1044484
  %v1079 = vsel %vm1078, %v1077, %v1075
  %s1080 = scalar_lea.vmem %s0, 174
  %v1081 = vld [vmem:[%s1080] sm:$0x20]
  %vm1082 = vcmask 1045509
  %v1083 = vsel %vm1082, %v1081, %v1079
  %s1084 = scalar_lea.vmem %s0, 205
  %v1085 = vld [vmem:[%s1084] sm:$0x40]
  %vm1086 = vcmask 1046534
  %v1087 = vsel %vm1086, %v1085, %v1083
  %s1088 = scalar_lea.vmem %s0, 236
  %v1089 = vld [vmem:[%s1088] sm:$0x80]
  %vm1090 = vcmask 1047559
  %v1091 = vsel %vm1090, %v1089, %v1087
  %1092 = vrot.lane.b32.xlu0 %v1091, 48
  %v1093 = vpop.permute.xlu0 %1092
  %vm1094 = vcmask 523648
  %s1095 = scalar_lea.vmem %s1, 16
  %1096 = vst.msk [vmem:[%s1095] sm:$0xff] %vm1094, %v1093
  %s1097 = scalar_lea.vmem %s0, 275
  %v1098 = vld [vmem:[%s1097] sm:$0x1]
  %s1099 = scalar_lea.vmem %s0, 306
  %v1100 = vld [vmem:[%s1099] sm:$0x2]
  %vm1101 = vcmask 1041409
  %v1102 = vsel %vm1101, %v1100, %v1098
  %s1103 = scalar_lea.vmem %s0, 337
  %v1104 = vld [vmem:[%s1103] sm:$0x4]
  %vm1105 = vcmask 1042434
  %v1106 = vsel %vm1105, %v1104, %v1102
  %s1107 = scalar_lea.vmem %s0, 368
  %v1108 = vld [vmem:[%s1107] sm:$0x8]
  %vm1109 = vcmask 1043459
  %v1110 = vsel %vm1109, %v1108, %v1106
  %s1111 = scalar_lea.vmem %s0, 399
  %v1112 = vld [vmem:[%s1111] sm:$0x10]
  %vm1113 = vcmask 1044484
  %v1114 = vsel %vm1113, %v1112, %v1110
  %s1115 = scalar_lea.vmem %s0, 430
  %v1116 = vld [vmem:[%s1115] sm:$0x20]
  %vm1117 = vcmask 1045509
  %v1118 = vsel %vm1117, %v1116, %v1114
  %s1119 = scalar_lea.vmem %s0, 461
  %v1120 = vld [vmem:[%s1119] sm:$0x40]
  %vm1121 = vcmask 1046534
  %v1122 = vsel %vm1121, %v1120, %v1118
  %s1123 = scalar_lea.vmem %s0, 492
  %v1124 = vld [vmem:[%s1123] sm:$0x80]
  %vm1125 = vcmask 1047559
  %v1126 = vsel %vm1125, %v1124, %v1122
  %1127 = vrot.lane.b32.xlu0 %v1126, 48
  %v1128 = vpop.permute.xlu0 %1127
  %vm1129 = vcmask 523648
  %s1130 = scalar_lea.vmem %s1, 48
  %1131 = vst.msk [vmem:[%s1130] sm:$0xff] %vm1129, %v1128
  %s1132 = scalar_lea.vmem %s0, 2
  %v1133 = vld [vmem:[%s1132] sm:$0x1]
  %s1134 = scalar_lea.vmem %s0, 33
  %v1135 = vld [vmem:[%s1134] sm:$0x2]
  %vm1136 = vcmask 1041409
  %v1137 = vsel %vm1136, %v1135, %v1133
  %s1138 = scalar_lea.vmem %s0, 64
  %v1139 = vld [vmem:[%s1138] sm:$0x4]
  %vm1140 = vcmask 1042434
  %v1141 = vsel %vm1140, %v1139, %v1137
  %s1142 = scalar_lea.vmem %s0, 95
  %v1143 = vld [vmem:[%s1142] sm:$0x8]
  %vm1144 = vcmask 1043459
  %v1145 = vsel %vm1144, %v1143, %v1141
  %s1146 = scalar_lea.vmem %s0, 126
  %v1147 = vld [vmem:[%s1146] sm:$0x10]
  %vm1148 = vcmask 1044484
  %v1149 = vsel %vm1148, %v1147, %v1145
  %s1150 = scalar_lea.vmem %s0, 157
  %v1151 = vld [vmem:[%s1150] sm:$0x20]
  %vm1152 = vcmask 1045509
  %v1153 = vsel %vm1152, %v1151, %v1149
  %s1154 = scalar_lea.vmem %s0, 188
  %v1155 = vld [vmem:[%s1154] sm:$0x40]
  %vm1156 = vcmask 1046534
  %v1157 = vsel %vm1156, %v1155, %v1153
  %s1158 = scalar_lea.vmem %s0, 219
  %v1159 = vld [vmem:[%s1158] sm:$0x80]
  %vm1160 = vcmask 1047559
  %v1161 = vsel %vm1160, %v1159, %v1157
  %1162 = vrot.lane.b32.xlu0 %v1161, 32
  %v1163 = vpop.permute.xlu0 %1162
  %vm1164 = vcmask 392448
  %1165 = vst.msk [vmem:[%s1] sm:$0xff] %vm1164, %v1163
  %s1166 = scalar_lea.vmem %s0, 258
  %v1167 = vld [vmem:[%s1166] sm:$0x1]
  %s1168 = scalar_lea.vmem %s0, 289
  %v1169 = vld [vmem:[%s1168] sm:$0x2]
  %vm1170 = vcmask 1041409
  %v1171 = vsel %vm1170, %v1169, %v1167
  %s1172 = scalar_lea.vmem %s0, 320
  %v1173 = vld [vmem:[%s1172] sm:$0x4]
  %vm1174 = vcmask 1042434
  %v1175 = vsel %vm1174, %v1173, %v1171
  %s1176 = scalar_lea.vmem %s0, 351
  %v1177 = vld [vmem:[%s1176] sm:$0x8]
  %vm1178 = vcmask 1043459
  %v1179 = vsel %vm1178, %v1177, %v1175
  %s1180 = scalar_lea.vmem %s0, 382
  %v1181 = vld [vmem:[%s1180] sm:$0x10]
  %vm1182 = vcmask 1044484
  %v1183 = vsel %vm1182, %v1181, %v1179
  %s1184 = scalar_lea.vmem %s0, 413
  %v1185 = vld [vmem:[%s1184] sm:$0x20]
  %vm1186 = vcmask 1045509
  %v1187 = vsel %vm1186, %v1185, %v1183
  %s1188 = scalar_lea.vmem %s0, 444
  %v1189 = vld [vmem:[%s1188] sm:$0x40]
  %vm1190 = vcmask 1046534
  %v1191 = vsel %vm1190, %v1189, %v1187
  %s1192 = scalar_lea.vmem %s0, 475
  %v1193 = vld [vmem:[%s1192] sm:$0x80]
  %vm1194 = vcmask 1047559
  %v1195 = vsel %vm1194, %v1193, %v1191
  %1196 = vrot.lane.b32.xlu0 %v1195, 32
  %v1197 = vpop.permute.xlu0 %1196
  %vm1198 = vcmask 392448
  %s1199 = scalar_lea.vmem %s1, 32
  %1200 = vst.msk [vmem:[%s1199] sm:$0xff] %vm1198, %v1197
  %s1201 = scalar_lea.vmem %s0, 10
  %v1202 = vld [vmem:[%s1201] sm:$0x1]
  %s1203 = scalar_lea.vmem %s0, 41
  %v1204 = vld [vmem:[%s1203] sm:$0x2]
  %vm1205 = vcmask 1041409
  %v1206 = vsel %vm1205, %v1204, %v1202
  %s1207 = scalar_lea.vmem %s0, 72
  %v1208 = vld [vmem:[%s1207] sm:$0x4]
  %vm1209 = vcmask 1042434
  %v1210 = vsel %vm1209, %v1208, %v1206
  %s1211 = scalar_lea.vmem %s0, 103
  %v1212 = vld [vmem:[%s1211] sm:$0x8]
  %vm1213 = vcmask 1043459
  %v1214 = vsel %vm1213, %v1212, %v1210
  %s1215 = scalar_lea.vmem %s0, 134
  %v1216 = vld [vmem:[%s1215] sm:$0x10]
  %vm1217 = vcmask 1044484
  %v1218 = vsel %vm1217, %v1216, %v1214
  %s1219 = scalar_lea.vmem %s0, 165
  %v1220 = vld [vmem:[%s1219] sm:$0x20]
  %vm1221 = vcmask 1045509
  %v1222 = vsel %vm1221, %v1220, %v1218
  %s1223 = scalar_lea.vmem %s0, 196
  %v1224 = vld [vmem:[%s1223] sm:$0x40]
  %vm1225 = vcmask 1046534
  %v1226 = vsel %vm1225, %v1224, %v1222
  %s1227 = scalar_lea.vmem %s0, 227
  %v1228 = vld [vmem:[%s1227] sm:$0x80]
  %vm1229 = vcmask 1047559
  %v1230 = vsel %vm1229, %v1228, %v1226
  %1231 = vrot.lane.b32.xlu0 %v1230, 32
  %v1232 = vpop.permute.xlu0 %1231
  %vm1233 = vcmask 392448
  %s1234 = scalar_lea.vmem %s1, 8
  %1235 = vst.msk [vmem:[%s1234] sm:$0xff] %vm1233, %v1232
  %s1236 = scalar_lea.vmem %s0, 266
  %v1237 = vld [vmem:[%s1236] sm:$0x1]
  %s1238 = scalar_lea.vmem %s0, 297
  %v1239 = vld [vmem:[%s1238] sm:$0x2]
  %vm1240 = vcmask 1041409
  %v1241 = vsel %vm1240, %v1239, %v1237
  %s1242 = scalar_lea.vmem %s0, 328
  %v1243 = vld [vmem:[%s1242] sm:$0x4]
  %vm1244 = vcmask 1042434
  %v1245 = vsel %vm1244, %v1243, %v1241
  %s1246 = scalar_lea.vmem %s0, 359
  %v1247 = vld [vmem:[%s1246] sm:$0x8]
  %vm1248 = vcmask 1043459
  %v1249 = vsel %vm1248, %v1247, %v1245
  %s1250 = scalar_lea.vmem %s0, 390
  %v1251 = vld [vmem:[%s1250] sm:$0x10]
  %vm1252 = vcmask 1044484
  %v1253 = vsel %vm1252, %v1251, %v1249
  %s1254 = scalar_lea.vmem %s0, 421
  %v1255 = vld [vmem:[%s1254] sm:$0x20]
  %vm1256 = vcmask 1045509
  %v1257 = vsel %vm1256, %v1255, %v1253
  %s1258 = scalar_lea.vmem %s0, 452
  %v1259 = vld [vmem:[%s1258] sm:$0x40]
  %vm1260 = vcmask 1046534
  %v1261 = vsel %vm1260, %v1259, %v1257
  %s1262 = scalar_lea.vmem %s0, 483
  %v1263 = vld [vmem:[%s1262] sm:$0x80]
  %vm1264 = vcmask 1047559
  %v1265 = vsel %vm1264, %v1263, %v1261
  %1266 = vrot.lane.b32.xlu0 %v1265, 32
  %v1267 = vpop.permute.xlu0 %1266
  %vm1268 = vcmask 392448
  %s1269 = scalar_lea.vmem %s1, 40
  %1270 = vst.msk [vmem:[%s1269] sm:$0xff] %vm1268, %v1267
  %s1271 = scalar_lea.vmem %s0, 18
  %v1272 = vld [vmem:[%s1271] sm:$0x1]
  %s1273 = scalar_lea.vmem %s0, 49
  %v1274 = vld [vmem:[%s1273] sm:$0x2]
  %vm1275 = vcmask 1041409
  %v1276 = vsel %vm1275, %v1274, %v1272
  %s1277 = scalar_lea.vmem %s0, 80
  %v1278 = vld [vmem:[%s1277] sm:$0x4]
  %vm1279 = vcmask 1042434
  %v1280 = vsel %vm1279, %v1278, %v1276
  %s1281 = scalar_lea.vmem %s0, 111
  %v1282 = vld [vmem:[%s1281] sm:$0x8]
  %vm1283 = vcmask 1043459
  %v1284 = vsel %vm1283, %v1282, %v1280
  %s1285 = scalar_lea.vmem %s0, 142
  %v1286 = vld [vmem:[%s1285] sm:$0x10]
  %vm1287 = vcmask 1044484
  %v1288 = vsel %vm1287, %v1286, %v1284
  %s1289 = scalar_lea.vmem %s0, 173
  %v1290 = vld [vmem:[%s1289] sm:$0x20]
  %vm1291 = vcmask 1045509
  %v1292 = vsel %vm1291, %v1290, %v1288
  %s1293 = scalar_lea.vmem %s0, 204
  %v1294 = vld [vmem:[%s1293] sm:$0x40]
  %vm1295 = vcmask 1046534
  %v1296 = vsel %vm1295, %v1294, %v1292
  %s1297 = scalar_lea.vmem %s0, 235
  %v1298 = vld [vmem:[%s1297] sm:$0x80]
  %vm1299 = vcmask 1047559
  %v1300 = vsel %vm1299, %v1298, %v1296
  %1301 = vrot.lane.b32.xlu0 %v1300, 32
  %v1302 = vpop.permute.xlu0 %1301
  %vm1303 = vcmask 392448
  %s1304 = scalar_lea.vmem %s1, 16
  %1305 = vst.msk [vmem:[%s1304] sm:$0xff] %vm1303, %v1302
  %s1306 = scalar_lea.vmem %s0, 274
  %v1307 = vld [vmem:[%s1306] sm:$0x1]
  %s1308 = scalar_lea.vmem %s0, 305
  %v1309 = vld [vmem:[%s1308] sm:$0x2]
  %vm1310 = vcmask 1041409
  %v1311 = vsel %vm1310, %v1309, %v1307
  %s1312 = scalar_lea.vmem %s0, 336
  %v1313 = vld [vmem:[%s1312] sm:$0x4]
  %vm1314 = vcmask 1042434
  %v1315 = vsel %vm1314, %v1313, %v1311
  %s1316 = scalar_lea.vmem %s0, 367
  %v1317 = vld [vmem:[%s1316] sm:$0x8]
  %vm1318 = vcmask 1043459
  %v1319 = vsel %vm1318, %v1317, %v1315
  %s1320 = scalar_lea.vmem %s0, 398
  %v1321 = vld [vmem:[%s1320] sm:$0x10]
  %vm1322 = vcmask 1044484
  %v1323 = vsel %vm1322, %v1321, %v1319
  %s1324 = scalar_lea.vmem %s0, 429
  %v1325 = vld [vmem:[%s1324] sm:$0x20]
  %vm1326 = vcmask 1045509
  %v1327 = vsel %vm1326, %v1325, %v1323
  %s1328 = scalar_lea.vmem %s0, 460
  %v1329 = vld [vmem:[%s1328] sm:$0x40]
  %vm1330 = vcmask 1046534
  %v1331 = vsel %vm1330, %v1329, %v1327
  %s1332 = scalar_lea.vmem %s0, 491
  %v1333 = vld [vmem:[%s1332] sm:$0x80]
  %vm1334 = vcmask 1047559
  %v1335 = vsel %vm1334, %v1333, %v1331
  %1336 = vrot.lane.b32.xlu0 %v1335, 32
  %v1337 = vpop.permute.xlu0 %1336
  %vm1338 = vcmask 392448
  %s1339 = scalar_lea.vmem %s1, 48
  %1340 = vst.msk [vmem:[%s1339] sm:$0xff] %vm1338, %v1337
  %s1341 = scalar_lea.vmem %s0, 26
  %v1342 = vld [vmem:[%s1341] sm:$0x1]
  %s1343 = scalar_lea.vmem %s0, 57
  %v1344 = vld [vmem:[%s1343] sm:$0x2]
  %vm1345 = vcmask 1041409
  %v1346 = vsel %vm1345, %v1344, %v1342
  %s1347 = scalar_lea.vmem %s0, 88
  %v1348 = vld [vmem:[%s1347] sm:$0x4]
  %vm1349 = vcmask 1042434
  %v1350 = vsel %vm1349, %v1348, %v1346
  %s1351 = scalar_lea.vmem %s0, 119
  %v1352 = vld [vmem:[%s1351] sm:$0x8]
  %vm1353 = vcmask 1043459
  %v1354 = vsel %vm1353, %v1352, %v1350
  %s1355 = scalar_lea.vmem %s0, 150
  %v1356 = vld [vmem:[%s1355] sm:$0x10]
  %vm1357 = vcmask 1044484
  %v1358 = vsel %vm1357, %v1356, %v1354
  %s1359 = scalar_lea.vmem %s0, 181
  %v1360 = vld [vmem:[%s1359] sm:$0x20]
  %vm1361 = vcmask 1045509
  %v1362 = vsel %vm1361, %v1360, %v1358
  %s1363 = scalar_lea.vmem %s0, 212
  %v1364 = vld [vmem:[%s1363] sm:$0x40]
  %vm1365 = vcmask 1046534
  %v1366 = vsel %vm1365, %v1364, %v1362
  %s1367 = scalar_lea.vmem %s0, 243
  %v1368 = vld [vmem:[%s1367] sm:$0x80]
  %vm1369 = vcmask 1047559
  %v1370 = vsel %vm1369, %v1368, %v1366
  %1371 = vrot.lane.b32.xlu0 %v1370, 32
  %v1372 = vpop.permute.xlu0 %1371
  %vm1373 = vcmask 392448
  %s1374 = scalar_lea.vmem %s1, 24
  %1375 = vst.msk [vmem:[%s1374] sm:$0xff] %vm1373, %v1372
  %s1376 = scalar_lea.vmem %s0, 282
  %v1377 = vld [vmem:[%s1376] sm:$0x1]
  %s1378 = scalar_lea.vmem %s0, 313
  %v1379 = vld [vmem:[%s1378] sm:$0x2]
  %vm1380 = vcmask 1041409
  %v1381 = vsel %vm1380, %v1379, %v1377
  %s1382 = scalar_lea.vmem %s0, 344
  %v1383 = vld [vmem:[%s1382] sm:$0x4]
  %vm1384 = vcmask 1042434
  %v1385 = vsel %vm1384, %v1383, %v1381
  %s1386 = scalar_lea.vmem %s0, 375
  %v1387 = vld [vmem:[%s1386] sm:$0x8]
  %vm1388 = vcmask 1043459
  %v1389 = vsel %vm1388, %v1387, %v1385
  %s1390 = scalar_lea.vmem %s0, 406
  %v1391 = vld [vmem:[%s1390] sm:$0x10]
  %vm1392 = vcmask 1044484
  %v1393 = vsel %vm1392, %v1391, %v1389
  %s1394 = scalar_lea.vmem %s0, 437
  %v1395 = vld [vmem:[%s1394] sm:$0x20]
  %vm1396 = vcmask 1045509
  %v1397 = vsel %vm1396, %v1395, %v1393
  %s1398 = scalar_lea.vmem %s0, 468
  %v1399 = vld [vmem:[%s1398] sm:$0x40]
  %vm1400 = vcmask 1046534
  %v1401 = vsel %vm1400, %v1399, %v1397
  %s1402 = scalar_lea.vmem %s0, 499
  %v1403 = vld [vmem:[%s1402] sm:$0x80]
  %vm1404 = vcmask 1047559
  %v1405 = vsel %vm1404, %v1403, %v1401
  %1406 = vrot.lane.b32.xlu0 %v1405, 32
  %v1407 = vpop.permute.xlu0 %1406
  %vm1408 = vcmask 392448
  %s1409 = scalar_lea.vmem %s1, 56
  %1410 = vst.msk [vmem:[%s1409] sm:$0xff] %vm1408, %v1407
  %s1411 = scalar_lea.vmem %s0, 1
  %v1412 = vld [vmem:[%s1411] sm:$0x1]
  %s1413 = scalar_lea.vmem %s0, 32
  %v1414 = vld [vmem:[%s1413] sm:$0x2]
  %vm1415 = vcmask 1041409
  %v1416 = vsel %vm1415, %v1414, %v1412
  %s1417 = scalar_lea.vmem %s0, 63
  %v1418 = vld [vmem:[%s1417] sm:$0x4]
  %vm1419 = vcmask 1042434
  %v1420 = vsel %vm1419, %v1418, %v1416
  %s1421 = scalar_lea.vmem %s0, 94
  %v1422 = vld [vmem:[%s1421] sm:$0x8]
  %vm1423 = vcmask 1043459
  %v1424 = vsel %vm1423, %v1422, %v1420
  %s1425 = scalar_lea.vmem %s0, 125
  %v1426 = vld [vmem:[%s1425] sm:$0x10]
  %vm1427 = vcmask 1044484
  %v1428 = vsel %vm1427, %v1426, %v1424
  %s1429 = scalar_lea.vmem %s0, 156
  %v1430 = vld [vmem:[%s1429] sm:$0x20]
  %vm1431 = vcmask 1045509
  %v1432 = vsel %vm1431, %v1430, %v1428
  %s1433 = scalar_lea.vmem %s0, 187
  %v1434 = vld [vmem:[%s1433] sm:$0x40]
  %vm1435 = vcmask 1046534
  %v1436 = vsel %vm1435, %v1434, %v1432
  %s1437 = scalar_lea.vmem %s0, 218
  %v1438 = vld [vmem:[%s1437] sm:$0x80]
  %vm1439 = vcmask 1047559
  %v1440 = vsel %vm1439, %v1438, %v1436
  %1441 = vrot.lane.b32.xlu0 %v1440, 16
  %v1442 = vpop.permute.xlu0 %1441
  %vm1443 = vcmask 261248
  %1444 = vst.msk [vmem:[%s1] sm:$0xff] %vm1443, %v1442
  %s1445 = scalar_lea.vmem %s0, 257
  %v1446 = vld [vmem:[%s1445] sm:$0x1]
  %s1447 = scalar_lea.vmem %s0, 288
  %v1448 = vld [vmem:[%s1447] sm:$0x2]
  %vm1449 = vcmask 1041409
  %v1450 = vsel %vm1449, %v1448, %v1446
  %s1451 = scalar_lea.vmem %s0, 319
  %v1452 = vld [vmem:[%s1451] sm:$0x4]
  %vm1453 = vcmask 1042434
  %v1454 = vsel %vm1453, %v1452, %v1450
  %s1455 = scalar_lea.vmem %s0, 350
  %v1456 = vld [vmem:[%s1455] sm:$0x8]
  %vm1457 = vcmask 1043459
  %v1458 = vsel %vm1457, %v1456, %v1454
  %s1459 = scalar_lea.vmem %s0, 381
  %v1460 = vld [vmem:[%s1459] sm:$0x10]
  %vm1461 = vcmask 1044484
  %v1462 = vsel %vm1461, %v1460, %v1458
  %s1463 = scalar_lea.vmem %s0, 412
  %v1464 = vld [vmem:[%s1463] sm:$0x20]
  %vm1465 = vcmask 1045509
  %v1466 = vsel %vm1465, %v1464, %v1462
  %s1467 = scalar_lea.vmem %s0, 443
  %v1468 = vld [vmem:[%s1467] sm:$0x40]
  %vm1469 = vcmask 1046534
  %v1470 = vsel %vm1469, %v1468, %v1466
  %s1471 = scalar_lea.vmem %s0, 474
  %v1472 = vld [vmem:[%s1471] sm:$0x80]
  %vm1473 = vcmask 1047559
  %v1474 = vsel %vm1473, %v1472, %v1470
  %1475 = vrot.lane.b32.xlu0 %v1474, 16
  %v1476 = vpop.permute.xlu0 %1475
  %vm1477 = vcmask 261248
  %s1478 = scalar_lea.vmem %s1, 32
  %1479 = vst.msk [vmem:[%s1478] sm:$0xff] %vm1477, %v1476
  %s1480 = scalar_lea.vmem %s0, 9
  %v1481 = vld [vmem:[%s1480] sm:$0x1]
  %s1482 = scalar_lea.vmem %s0, 40
  %v1483 = vld [vmem:[%s1482] sm:$0x2]
  %vm1484 = vcmask 1041409
  %v1485 = vsel %vm1484, %v1483, %v1481
  %s1486 = scalar_lea.vmem %s0, 71
  %v1487 = vld [vmem:[%s1486] sm:$0x4]
  %vm1488 = vcmask 1042434
  %v1489 = vsel %vm1488, %v1487, %v1485
  %s1490 = scalar_lea.vmem %s0, 102
  %v1491 = vld [vmem:[%s1490] sm:$0x8]
  %vm1492 = vcmask 1043459
  %v1493 = vsel %vm1492, %v1491, %v1489
  %s1494 = scalar_lea.vmem %s0, 133
  %v1495 = vld [vmem:[%s1494] sm:$0x10]
  %vm1496 = vcmask 1044484
  %v1497 = vsel %vm1496, %v1495, %v1493
  %s1498 = scalar_lea.vmem %s0, 164
  %v1499 = vld [vmem:[%s1498] sm:$0x20]
  %vm1500 = vcmask 1045509
  %v1501 = vsel %vm1500, %v1499, %v1497
  %s1502 = scalar_lea.vmem %s0, 195
  %v1503 = vld [vmem:[%s1502] sm:$0x40]
  %vm1504 = vcmask 1046534
  %v1505 = vsel %vm1504, %v1503, %v1501
  %s1506 = scalar_lea.vmem %s0, 226
  %v1507 = vld [vmem:[%s1506] sm:$0x80]
  %vm1508 = vcmask 1047559
  %v1509 = vsel %vm1508, %v1507, %v1505
  %1510 = vrot.lane.b32.xlu0 %v1509, 16
  %v1511 = vpop.permute.xlu0 %1510
  %vm1512 = vcmask 261248
  %s1513 = scalar_lea.vmem %s1, 8
  %1514 = vst.msk [vmem:[%s1513] sm:$0xff] %vm1512, %v1511
  %s1515 = scalar_lea.vmem %s0, 265
  %v1516 = vld [vmem:[%s1515] sm:$0x1]
  %s1517 = scalar_lea.vmem %s0, 296
  %v1518 = vld [vmem:[%s1517] sm:$0x2]
  %vm1519 = vcmask 1041409
  %v1520 = vsel %vm1519, %v1518, %v1516
  %s1521 = scalar_lea.vmem %s0, 327
  %v1522 = vld [vmem:[%s1521] sm:$0x4]
  %vm1523 = vcmask 1042434
  %v1524 = vsel %vm1523, %v1522, %v1520
  %s1525 = scalar_lea.vmem %s0, 358
  %v1526 = vld [vmem:[%s1525] sm:$0x8]
  %vm1527 = vcmask 1043459
  %v1528 = vsel %vm1527, %v1526, %v1524
  %s1529 = scalar_lea.vmem %s0, 389
  %v1530 = vld [vmem:[%s1529] sm:$0x10]
  %vm1531 = vcmask 1044484
  %v1532 = vsel %vm1531, %v1530, %v1528
  %s1533 = scalar_lea.vmem %s0, 420
  %v1534 = vld [vmem:[%s1533] sm:$0x20]
  %vm1535 = vcmask 1045509
  %v1536 = vsel %vm1535, %v1534, %v1532
  %s1537 = scalar_lea.vmem %s0, 451
  %v1538 = vld [vmem:[%s1537] sm:$0x40]
  %vm1539 = vcmask 1046534
  %v1540 = vsel %vm1539, %v1538, %v1536
  %s1541 = scalar_lea.vmem %s0, 482
  %v1542 = vld [vmem:[%s1541] sm:$0x80]
  %vm1543 = vcmask 1047559
  %v1544 = vsel %vm1543, %v1542, %v1540
  %1545 = vrot.lane.b32.xlu0 %v1544, 16
  %v1546 = vpop.permute.xlu0 %1545
  %vm1547 = vcmask 261248
  %s1548 = scalar_lea.vmem %s1, 40
  %1549 = vst.msk [vmem:[%s1548] sm:$0xff] %vm1547, %v1546
  %s1550 = scalar_lea.vmem %s0, 17
  %v1551 = vld [vmem:[%s1550] sm:$0x1]
  %s1552 = scalar_lea.vmem %s0, 48
  %v1553 = vld [vmem:[%s1552] sm:$0x2]
  %vm1554 = vcmask 1041409
  %v1555 = vsel %vm1554, %v1553, %v1551
  %s1556 = scalar_lea.vmem %s0, 79
  %v1557 = vld [vmem:[%s1556] sm:$0x4]
  %vm1558 = vcmask 1042434
  %v1559 = vsel %vm1558, %v1557, %v1555
  %s1560 = scalar_lea.vmem %s0, 110
  %v1561 = vld [vmem:[%s1560] sm:$0x8]
  %vm1562 = vcmask 1043459
  %v1563 = vsel %vm1562, %v1561, %v1559
  %s1564 = scalar_lea.vmem %s0, 141
  %v1565 = vld [vmem:[%s1564] sm:$0x10]
  %vm1566 = vcmask 1044484
  %v1567 = vsel %vm1566, %v1565, %v1563
  %s1568 = scalar_lea.vmem %s0, 172
  %v1569 = vld [vmem:[%s1568] sm:$0x20]
  %vm1570 = vcmask 1045509
  %v1571 = vsel %vm1570, %v1569, %v1567
  %s1572 = scalar_lea.vmem %s0, 203
  %v1573 = vld [vmem:[%s1572] sm:$0x40]
  %vm1574 = vcmask 1046534
  %v1575 = vsel %vm1574, %v1573, %v1571
  %s1576 = scalar_lea.vmem %s0, 234
  %v1577 = vld [vmem:[%s1576] sm:$0x80]
  %vm1578 = vcmask 1047559
  %v1579 = vsel %vm1578, %v1577, %v1575
  %1580 = vrot.lane.b32.xlu0 %v1579, 16
  %v1581 = vpop.permute.xlu0 %1580
  %vm1582 = vcmask 261248
  %s1583 = scalar_lea.vmem %s1, 16
  %1584 = vst.msk [vmem:[%s1583] sm:$0xff] %vm1582, %v1581
  %s1585 = scalar_lea.vmem %s0, 273
  %v1586 = vld [vmem:[%s1585] sm:$0x1]
  %s1587 = scalar_lea.vmem %s0, 304
  %v1588 = vld [vmem:[%s1587] sm:$0x2]
  %vm1589 = vcmask 1041409
  %v1590 = vsel %vm1589, %v1588, %v1586
  %s1591 = scalar_lea.vmem %s0, 335
  %v1592 = vld [vmem:[%s1591] sm:$0x4]
  %vm1593 = vcmask 1042434
  %v1594 = vsel %vm1593, %v1592, %v1590
  %s1595 = scalar_lea.vmem %s0, 366
  %v1596 = vld [vmem:[%s1595] sm:$0x8]
  %vm1597 = vcmask 1043459
  %v1598 = vsel %vm1597, %v1596, %v1594
  %s1599 = scalar_lea.vmem %s0, 397
  %v1600 = vld [vmem:[%s1599] sm:$0x10]
  %vm1601 = vcmask 1044484
  %v1602 = vsel %vm1601, %v1600, %v1598
  %s1603 = scalar_lea.vmem %s0, 428
  %v1604 = vld [vmem:[%s1603] sm:$0x20]
  %vm1605 = vcmask 1045509
  %v1606 = vsel %vm1605, %v1604, %v1602
  %s1607 = scalar_lea.vmem %s0, 459
  %v1608 = vld [vmem:[%s1607] sm:$0x40]
  %vm1609 = vcmask 1046534
  %v1610 = vsel %vm1609, %v1608, %v1606
  %s1611 = scalar_lea.vmem %s0, 490
  %v1612 = vld [vmem:[%s1611] sm:$0x80]
  %vm1613 = vcmask 1047559
  %v1614 = vsel %vm1613, %v1612, %v1610
  %1615 = vrot.lane.b32.xlu0 %v1614, 16
  %v1616 = vpop.permute.xlu0 %1615
  %vm1617 = vcmask 261248
  %s1618 = scalar_lea.vmem %s1, 48
  %1619 = vst.msk [vmem:[%s1618] sm:$0xff] %vm1617, %v1616
  %s1620 = scalar_lea.vmem %s0, 25
  %v1621 = vld [vmem:[%s1620] sm:$0x1]
  %s1622 = scalar_lea.vmem %s0, 56
  %v1623 = vld [vmem:[%s1622] sm:$0x2]
  %vm1624 = vcmask 1041409
  %v1625 = vsel %vm1624, %v1623, %v1621
  %s1626 = scalar_lea.vmem %s0, 87
  %v1627 = vld [vmem:[%s1626] sm:$0x4]
  %vm1628 = vcmask 1042434
  %v1629 = vsel %vm1628, %v1627, %v1625
  %s1630 = scalar_lea.vmem %s0, 118
  %v1631 = vld [vmem:[%s1630] sm:$0x8]
  %vm1632 = vcmask 1043459
  %v1633 = vsel %vm1632, %v1631, %v1629
  %s1634 = scalar_lea.vmem %s0, 149
  %v1635 = vld [vmem:[%s1634] sm:$0x10]
  %vm1636 = vcmask 1044484
  %v1637 = vsel %vm1636, %v1635, %v1633
  %s1638 = scalar_lea.vmem %s0, 180
  %v1639 = vld [vmem:[%s1638] sm:$0x20]
  %vm1640 = vcmask 1045509
  %v1641 = vsel %vm1640, %v1639, %v1637
  %s1642 = scalar_lea.vmem %s0, 211
  %v1643 = vld [vmem:[%s1642] sm:$0x40]
  %vm1644 = vcmask 1046534
  %v1645 = vsel %vm1644, %v1643, %v1641
  %s1646 = scalar_lea.vmem %s0, 242
  %v1647 = vld [vmem:[%s1646] sm:$0x80]
  %vm1648 = vcmask 1047559
  %v1649 = vsel %vm1648, %v1647, %v1645
  %1650 = vrot.lane.b32.xlu0 %v1649, 16
  %v1651 = vpop.permute.xlu0 %1650
  %vm1652 = vcmask 261248
  %s1653 = scalar_lea.vmem %s1, 24
  %1654 = vst.msk [vmem:[%s1653] sm:$0xff] %vm1652, %v1651
  %s1655 = scalar_lea.vmem %s0, 281
  %v1656 = vld [vmem:[%s1655] sm:$0x1]
  %s1657 = scalar_lea.vmem %s0, 312
  %v1658 = vld [vmem:[%s1657] sm:$0x2]
  %vm1659 = vcmask 1041409
  %v1660 = vsel %vm1659, %v1658, %v1656
  %s1661 = scalar_lea.vmem %s0, 343
  %v1662 = vld [vmem:[%s1661] sm:$0x4]
  %vm1663 = vcmask 1042434
  %v1664 = vsel %vm1663, %v1662, %v1660
  %s1665 = scalar_lea.vmem %s0, 374
  %v1666 = vld [vmem:[%s1665] sm:$0x8]
  %vm1667 = vcmask 1043459
  %v1668 = vsel %vm1667, %v1666, %v1664
  %s1669 = scalar_lea.vmem %s0, 405
  %v1670 = vld [vmem:[%s1669] sm:$0x10]
  %vm1671 = vcmask 1044484
  %v1672 = vsel %vm1671, %v1670, %v1668
  %s1673 = scalar_lea.vmem %s0, 436
  %v1674 = vld [vmem:[%s1673] sm:$0x20]
  %vm1675 = vcmask 1045509
  %v1676 = vsel %vm1675, %v1674, %v1672
  %s1677 = scalar_lea.vmem %s0, 467
  %v1678 = vld [vmem:[%s1677] sm:$0x40]
  %vm1679 = vcmask 1046534
  %v1680 = vsel %vm1679, %v1678, %v1676
  %s1681 = scalar_lea.vmem %s0, 498
  %v1682 = vld [vmem:[%s1681] sm:$0x80]
  %vm1683 = vcmask 1047559
  %v1684 = vsel %vm1683, %v1682, %v1680
  %1685 = vrot.lane.b32.xlu0 %v1684, 16
  %v1686 = vpop.permute.xlu0 %1685
  %vm1687 = vcmask 261248
  %s1688 = scalar_lea.vmem %s1, 56
  %1689 = vst.msk [vmem:[%s1688] sm:$0xff] %vm1687, %v1686

// kernel: tile.13
$region0: #{tile.13}
  #allocation0 [shape = 's32[1]{0}', space=sflag, size = 0x4, scoped, tag = 'scoped memory for tile.13']
  %s0 = inlined_call_operand.vmem [shape: f32[16], index: 0, kind: input, shape index: {}]
  %s1 = inlined_call_operand.vmem [shape: f32[8,16], index: 1, kind: output, shape index: {}]
  // Predicated region
  $region2: #{tile.13} parent=0 // pred_check
    _
  $region3: #{tile.13} parent=0 // pred_check_branch
    %3 = sbr.rel (0) target = $region5
  $region4: #{tile.13} parent=0 // pred_region
    _
  $region5: #{tile.13} parent=0 // pred_fallthru
    _
  %v4 = vld [vmem:[%s0] ss:$0 sm:$0xff]
  %5 = vst [vmem:[%s1] sm:$0xff] %v4

// kernel: tile.14
$region0: #{tile.14}
  %s0 = inlined_call_operand.vmem [shape: f32[8,16], index: 0, kind: input, shape index: {}]
  %s1 = inlined_call_operand.vmem [shape: f32[1,128], index: 1, kind: output, shape index: {}]
  $region1: #{tile.14} parent=0
    #allocation0 [shape = 'u8[4096]{0}', space=vmem, size = 0x1000, scoped, tag = 'scoped mem for output reshape']
    %v2 = vld [vmem:[%s0] sm:$0x1]
    %vm3 = vcmask 130048
    %4 = vst.msk [vmem:[#allocation0] sm:$0x1] %vm3, %v2
    %s5 = scalar_lea.vmem %s0, 7
    %v6 = vld [vmem:[%s5] sm:$0x1]
    %7 = vrot.lane.b32.xlu0 %v6, 112
    %v8 = vpop.permute.xlu0 %7
    %vm9 = vcmask 1048448
    %10 = vst.msk [vmem:[#allocation0] sm:$0x1] %vm9, %v8
    %s11 = scalar_lea.vmem %s0, 6
    %v12 = vld [vmem:[%s11] sm:$0x1]
    %13 = vrot.lane.b32.xlu0 %v12, 96
    %v14 = vpop.permute.xlu0 %13
    %vm15 = vcmask 917248
    %16 = vst.msk [vmem:[#allocation0] sm:$0x1] %vm15, %v14
    %s17 = scalar_lea.vmem %s0, 5
    %v18 = vld [vmem:[%s17] sm:$0x1]
    %19 = vrot.lane.b32.xlu0 %v18, 80
    %v20 = vpop.permute.xlu0 %19
    %vm21 = vcmask 786048
    %22 = vst.msk [vmem:[#allocation0] sm:$0x1] %vm21, %v20
    %s23 = scalar_lea.vmem %s0, 4
    %v24 = vld [vmem:[%s23] sm:$0x1]
    %25 = vrot.lane.b32.xlu0 %v24, 64
    %v26 = vpop.permute.xlu0 %25
    %vm27 = vcmask 654848
    %28 = vst.msk [vmem:[#allocation0] sm:$0x1] %vm27, %v26
    %s29 = scalar_lea.vmem %s0, 3
    %v30 = vld [vmem:[%s29] sm:$0x1]
    %31 = vrot.lane.b32.xlu0 %v30, 48
    %v32 = vpop.permute.xlu0 %31
    %vm33 = vcmask 523648
    %34 = vst.msk [vmem:[#allocation0] sm:$0x1] %vm33, %v32
    %s35 = scalar_lea.vmem %s0, 2
    %v36 = vld [vmem:[%s35] sm:$0x1]
    %37 = vrot.lane.b32.xlu0 %v36, 32
    %v38 = vpop.permute.xlu0 %37
    %vm39 = vcmask 392448
    %40 = vst.msk [vmem:[#allocation0] sm:$0x1] %vm39, %v38
    %s41 = scalar_lea.vmem %s0, 1
    %v42 = vld [vmem:[%s41] sm:$0x1]
    %43 = vrot.lane.b32.xlu0 %v42, 16
    %v44 = vpop.permute.xlu0 %43
    %vm45 = vcmask 261248
    %46 = vst.msk [vmem:[#allocation0] sm:$0x1] %vm45, %v44
    %s48 = sshll.u32 1, 1
    %s49 = ssub.s32 %s48, 1
    %v51 = vld [vmem:[#allocation0] sm:%s49]
    %s52 = sshll.u32 1, 1
    %s53 = ssub.s32 %s52, 1
    %54 = vst [vmem:[%s1] sm:%s53] %v51

// kernel: fcu_down_forward.1
$region0: #{fcu_down_forward.1}
  #allocation0 [shape = 'u32[]', space=smem, size = 0x4, offset = 0x4, fixed_abs, tag = 'smem constant byte address 0x4 - core index']
  #allocation1 [shape = 'u32[144,128]{1,0:T(1,128)}', space=vmem, size = 0x12000, scoped, tag = 'internal scratch']
  %s0 = inlined_call_operand.vmem [shape: bf16[2,512,3456], index: 0, kind: input, shape index: {}]
  %s1 = inlined_call_operand.vmem [shape: bf16[3456,128], index: 1, kind: input, shape index: {}]
  %s2 = inlined_call_operand.vmem [shape: f32[128,128], index: 2, kind: input, shape index: {}]
  %s3 = inlined_call_operand.vmem [shape: f32[512,128], index: 3, kind: input, shape index: {}]
  %s4 = inlined_call_operand.vmem [shape: f32[1,128], index: 4, kind: input, shape index: {}]
  %s5 = inlined_call_operand.vmem [shape: f32[1,128], index: 5, kind: input, shape index: {}]
  %s6 = inlined_call_operand.vmem [shape: f32[2,512,128], index: 6, kind: output, shape index: {}]
  %s7 = sld [smem:[#allocation0]]
  $region57: #{fcu_down_forward.1} parent=0
    _
  %s9 = ssub.s32 1, %s7
  %s10 = scalar_select 0, %s9, %s7
  loop: start=0, step=1, limit=10
  $region2: #{fcu_down_forward.1} parent=0 // loop_pre_header
    _
  $region3: #{fcu_down_forward.1} parent=0 // loop_header
    %s12 = sphi 0, %s16
    %p13 = scmp.ge.s32.totalorder %s12, 10
    %s19 = sphi 0, %s31
    %s20 = sphi 0, %s27
    %s21 = sphi 0, %s19
    %s22 = sphi 0, %s20
    %s23 = sphi 0, %s21
    %s24 = sphi 0, %s22
    %s36 = sphi 0, %s38
    %s39 = sphi 0, %s36
    %s40 = sphi 0, %s39
    %s56 = sphi 0, %s40
    %s60 = sphi 0, %s60
    %s62 = sphi 0, %s60
    %s63 = sphi 0, %s62
    %s77 = sphi 0, %s63
    %s81 = sphi 0, %s81
    %s83 = sphi 0, %s81
    %s84 = sphi 0, %s83
    %s98 = sphi 0, %s84
    %s104 = sphi 0, %s106
    %s107 = sphi 0, %s104
    %s108 = sphi 0, %s107
    %s124 = sphi 0, %s108
    %s128 = sphi 0, %s128
    %s130 = sphi 0, %s128
    %s131 = sphi 0, %s130
    %s145 = sphi 0, %s131
    %s149 = sphi 0, %s149
    %s151 = sphi 0, %s149
    %s152 = sphi 0, %s151
    %s166 = sphi 0, %s152
    %s174 = sphi 0, %s176
    %s177 = sphi 0, %s174
    %s178 = sphi 0, %s177
    %s194 = sphi 0, %s178
  $region4: #{fcu_down_forward.1} parent=0 // loop_header_branch
    %15 = sbr.rel (%p13) target = $region8
  $region5: #{fcu_down_forward.1} parent=0 // loop_body
    %s17 = ssub.s32 %s12, 1
    %s18 = ssub.s32 %s12, 2
    %s25 = sadd.s32 1, %s20
    %p26 = scmp.ge.s32.totalorder %s25, 4
    %s27 = scalar_select %p26, 0, %s25
    %s28 = sadd.s32 1, %s19
    %s29 = scalar_select %p26, %s28, %s19
    %p30 = scmp.ge.s32.totalorder %s29, 2
    %s31 = scalar_select %p30, 0, %s29
    %s32 = ssub.s32 %s19, %s31
    %s33 = ssub.s32 %s20, %s27
    %s34 = sor.u32 %s32, %s33
    %p35 = scmp.eq.s32.totalorder %s34, 0
    %s37 = sadd.s32 %s36, 1
    %s38 = scalar_select %p35, %s36, %s37
    %p41 = pneg %p35
    %p42 = scmp.eq.s32.totalorder %s12, 7
    %p43 = por %p41, %p42
    %p44 = scmp.ne.s32.totalorder %s36, %s39
    %p45 = scmp.eq.s32.totalorder %s12, 0
    %p46 = por %p44, %p45
    %p47 = scmp.ne.s32.totalorder %s36, %s39
    %p48 = scmp.eq.s32.totalorder %s17, 7
    %p49 = por %p47, %p48
    %p50 = scmp.ne.s32.totalorder %s39, %s40
    %p51 = scmp.eq.s32.totalorder %s17, 0
    %p52 = por %p50, %p51
    %p53 = scmp.ne.s32.totalorder %s39, %s40
    %p54 = scmp.eq.s32.totalorder %s18, 7
    %p55 = por %p53, %p54
    %p57 = scmp.ne.s32.totalorder %s40, %s56
    %p58 = scmp.eq.s32.totalorder %s18, 0
    %p59 = por %p57, %p58
    %s61 = sadd.s32 %s60, 1
    %p64 = scmp.eq.s32.totalorder %s12, 7
    %p65 = scmp.ne.s32.totalorder %s60, %s62
    %p66 = scmp.eq.s32.totalorder %s12, 0
    %p67 = por %p65, %p66
    %p68 = scmp.ne.s32.totalorder %s60, %s62
    %p69 = scmp.eq.s32.totalorder %s17, 7
    %p70 = por %p68, %p69
    %p71 = scmp.ne.s32.totalorder %s62, %s63
    %p72 = scmp.eq.s32.totalorder %s17, 0
    %p73 = por %p71, %p72
    %p74 = scmp.ne.s32.totalorder %s62, %s63
    %p75 = scmp.eq.s32.totalorder %s18, 7
    %p76 = por %p74, %p75
    %p78 = scmp.ne.s32.totalorder %s63, %s77
    %p79 = scmp.eq.s32.totalorder %s18, 0
    %p80 = por %p78, %p79
    %s82 = sadd.s32 %s81, 1
    %p85 = scmp.eq.s32.totalorder %s12, 7
    %p86 = scmp.ne.s32.totalorder %s81, %s83
    %p87 = scmp.eq.s32.totalorder %s12, 0
    %p88 = por %p86, %p87
    %p89 = scmp.ne.s32.totalorder %s81, %s83
    %p90 = scmp.eq.s32.totalorder %s17, 7
    %p91 = por %p89, %p90
    %p92 = scmp.ne.s32.totalorder %s83, %s84
    %p93 = scmp.eq.s32.totalorder %s17, 0
    %p94 = por %p92, %p93
    %p95 = scmp.ne.s32.totalorder %s83, %s84
    %p96 = scmp.eq.s32.totalorder %s18, 7
    %p97 = por %p95, %p96
    %p99 = scmp.ne.s32.totalorder %s84, %s98
    %p100 = scmp.eq.s32.totalorder %s18, 0
    %p101 = por %p99, %p100
    %s102 = ssub.s32 %s20, %s27
    %p103 = scmp.eq.s32.totalorder %s102, 0
    %s105 = sadd.s32 %s104, 1
    %s106 = scalar_select %p103, %s104, %s105
    %p109 = pneg %p103
    %p110 = scmp.eq.s32.totalorder %s12, 7
    %p111 = por %p109, %p110
    %p112 = scmp.ne.s32.totalorder %s104, %s107
    %p113 = scmp.eq.s32.totalorder %s12, 0
    %p114 = por %p112, %p113
    %p115 = scmp.ne.s32.totalorder %s104, %s107
    %p116 = scmp.eq.s32.totalorder %s17, 7
    %p117 = por %p115, %p116
    %p118 = scmp.ne.s32.totalorder %s107, %s108
    %p119 = scmp.eq.s32.totalorder %s17, 0
    %p120 = por %p118, %p119
    %p121 = scmp.ne.s32.totalorder %s107, %s108
    %p122 = scmp.eq.s32.totalorder %s18, 7
    %p123 = por %p121, %p122
    %p125 = scmp.ne.s32.totalorder %s108, %s124
    %p126 = scmp.eq.s32.totalorder %s18, 0
    %p127 = por %p125, %p126
    %s129 = sadd.s32 %s128, 1
    %p132 = scmp.eq.s32.totalorder %s12, 7
    %p133 = scmp.ne.s32.totalorder %s128, %s130
    %p134 = scmp.eq.s32.totalorder %s12, 0
    %p135 = por %p133, %p134
    %p136 = scmp.ne.s32.totalorder %s128, %s130
    %p137 = scmp.eq.s32.totalorder %s17, 7
    %p138 = por %p136, %p137
    %p139 = scmp.ne.s32.totalorder %s130, %s131
    %p140 = scmp.eq.s32.totalorder %s17, 0
    %p141 = por %p139, %p140
    %p142 = scmp.ne.s32.totalorder %s130, %s131
    %p143 = scmp.eq.s32.totalorder %s18, 7
    %p144 = por %p142, %p143
    %p146 = scmp.ne.s32.totalorder %s131, %s145
    %p147 = scmp.eq.s32.totalorder %s18, 0
    %p148 = por %p146, %p147
    %s150 = sadd.s32 %s149, 1
    %p153 = scmp.eq.s32.totalorder %s12, 7
    %p154 = scmp.ne.s32.totalorder %s149, %s151
    %p155 = scmp.eq.s32.totalorder %s12, 0
    %p156 = por %p154, %p155
    %p157 = scmp.ne.s32.totalorder %s149, %s151
    %p158 = scmp.eq.s32.totalorder %s17, 7
    %p159 = por %p157, %p158
    %p160 = scmp.ne.s32.totalorder %s151, %s152
    %p161 = scmp.eq.s32.totalorder %s17, 0
    %p162 = por %p160, %p161
    %p163 = scmp.ne.s32.totalorder %s151, %s152
    %p164 = scmp.eq.s32.totalorder %s18, 7
    %p165 = por %p163, %p164
    %p167 = scmp.ne.s32.totalorder %s152, %s166
    %p168 = scmp.eq.s32.totalorder %s18, 0
    %p169 = por %p167, %p168
    %s170 = ssub.s32 %s19, %s31
    %s171 = ssub.s32 %s20, %s27
    %s172 = sor.u32 %s170, %s171
    %p173 = scmp.eq.s32.totalorder %s172, 0
    %s175 = sadd.s32 %s174, 1
    %s176 = scalar_select %p173, %s174, %s175
    %p179 = pneg %p173
    %p180 = scmp.eq.s32.totalorder %s12, 7
    %p181 = por %p179, %p180
    %p182 = scmp.ne.s32.totalorder %s174, %s177
    %p183 = scmp.eq.s32.totalorder %s12, 0
    %p184 = por %p182, %p183
    %p185 = scmp.ne.s32.totalorder %s174, %s177
    %p186 = scmp.eq.s32.totalorder %s17, 7
    %p187 = por %p185, %p186
    %p188 = scmp.ne.s32.totalorder %s177, %s178
    %p189 = scmp.eq.s32.totalorder %s17, 0
    %p190 = por %p188, %p189
    %p191 = scmp.ne.s32.totalorder %s177, %s178
    %p192 = scmp.eq.s32.totalorder %s18, 7
    %p193 = por %p191, %p192
    %p195 = scmp.ne.s32.totalorder %s178, %s194
    %p196 = scmp.eq.s32.totalorder %s18, 0
    %p197 = por %p195, %p196
    %p198 = scmp.le.s32.totalorder 1, %s12
    %p199 = scmp.lt.s32.totalorder %s12, 9
    %p200 = pnand %p198, %p199
    %p201 = pneg %p200
    // Predicated region
    $region9: #{fcu_down_forward.1} parent=5 // pred_check
      _
    $region10: #{fcu_down_forward.1} parent=5 // pred_check_branch
      %203 = sbr.rel (%p200) target = $region12
    $region11: #{fcu_down_forward.1} parent=5 // pred_region
      %s204 = ssub.s32 %s12, 1
      // Predicated region
      $region13: #{fcu_down_forward.1} parent=11 // pred_check
        %p205 = pneg %p73
      $region14: #{fcu_down_forward.1} parent=11 // pred_check_branch
        %207 = sbr.rel (%p205) target = $region16
      $region15: #{fcu_down_forward.1} parent=11 // pred_region
        _
      $region16: #{fcu_down_forward.1} parent=11 // pred_fallthru
        _
      // Predicated region
      $region17: #{fcu_down_forward.1} parent=11 // pred_check
        %p208 = pneg %p94
      $region18: #{fcu_down_forward.1} parent=11 // pred_check_branch
        %210 = sbr.rel (%p208) target = $region20
      $region19: #{fcu_down_forward.1} parent=11 // pred_region
        _
      $region20: #{fcu_down_forward.1} parent=11 // pred_fallthru
        _
      // Predicated region
      $region21: #{fcu_down_forward.1} parent=11 // pred_check
        %p211 = pneg %p141
      $region22: #{fcu_down_forward.1} parent=11 // pred_check_branch
        %213 = sbr.rel (%p211) target = $region24
      $region23: #{fcu_down_forward.1} parent=11 // pred_region
        _
      $region24: #{fcu_down_forward.1} parent=11 // pred_fallthru
        _
      // Predicated region
      $region25: #{fcu_down_forward.1} parent=11 // pred_check
        %p214 = pneg %p162
      $region26: #{fcu_down_forward.1} parent=11 // pred_check_branch
        %216 = sbr.rel (%p214) target = $region28
      $region27: #{fcu_down_forward.1} parent=11 // pred_region
        _
      $region28: #{fcu_down_forward.1} parent=11 // pred_fallthru
        _
    $region12: #{fcu_down_forward.1} parent=5 // pred_fallthru
      _
    %p217 = scmp.lt.s32.totalorder %s12, 8
    // Predicated region
    $region29: #{fcu_down_forward.1} parent=5 // pred_check
      %p218 = pneg %p217
    $region30: #{fcu_down_forward.1} parent=5 // pred_check_branch
      %220 = sbr.rel (%p218) target = $region32
    $region31: #{fcu_down_forward.1} parent=5 // pred_region
      // Predicated region
      $region33: #{fcu_down_forward.1} parent=31 // pred_check
        %p221 = pneg %p46
      $region34: #{fcu_down_forward.1} parent=31 // pred_check_branch
        %223 = sbr.rel (%p221) target = $region36
      $region35: #{fcu_down_forward.1} parent=31 // pred_region
        %s224 = smul.u32 16, %s20
        %p225 = scmp.lt.s32.totalorder %s19, 1
        %s226 = scalar_select %p225, %s19, 1
        %p227 = scmp.lt.s32.totalorder %s224, 63
        %s228 = scalar_select %p227, %s224, 63
        %s229 = smul.addr %s228, 27
        %s230 = smul.addr %s226, 1728
        %s231 = sadd.s32 %s229, %s230
        %s232 = smul.addr %s231, 4
        %s233 = scalar_lea.vmem %s0, %s232
        %s234 = smul.u32 16, %s20
      $region36: #{fcu_down_forward.1} parent=31 // pred_fallthru
        _
      // Predicated region
      $region37: #{fcu_down_forward.1} parent=31 // pred_check
        %p235 = pneg %p114
      $region38: #{fcu_down_forward.1} parent=31 // pred_check_branch
        %237 = sbr.rel (%p235) target = $region40
      $region39: #{fcu_down_forward.1} parent=31 // pred_region
        %s238 = smul.u32 16, %s20
        %p239 = scmp.lt.s32.totalorder %s238, 63
        %s240 = scalar_select %p239, %s238, 63
        %s241 = smul.addr %s240, 8
        %s242 = scalar_lea.vmem %s3, %s241
        %s243 = smul.u32 16, %s20
      $region40: #{fcu_down_forward.1} parent=31 // pred_fallthru
        _
    $region32: #{fcu_down_forward.1} parent=5 // pred_fallthru
      _
    %p244 = scmp.le.s32.totalorder 1, %s12
    %p245 = scmp.lt.s32.totalorder %s12, 9
    %p246 = pnand %p244, %p245
    %p247 = pneg %p246
    // Predicated region
    $region41: #{fcu_down_forward.1} parent=5 // pred_check
      _
    $region42: #{fcu_down_forward.1} parent=5 // pred_check_branch
      %249 = sbr.rel (%p246) target = $region44
    $region43: #{fcu_down_forward.1} parent=5 // pred_region
      %s250 = ssub.s32 %s12, 1
      %s251 = smul.u32 16, %s22
      %p252 = scmp.lt.s32.totalorder %s21, 1
      %s253 = scalar_select %p252, %s21, 1
      %p254 = scmp.lt.s32.totalorder %s251, 63
      %s255 = scalar_select %p254, %s251, 63
      %s256 = smul.addr %s255, 27
      %s257 = smul.addr %s253, 1728
      %s258 = sadd.s32 %s256, %s257
      %s259 = smul.addr %s258, 4
      %s260 = scalar_lea.vmem %s0, %s259
      %p261 = pneg %p52
      %p262 = pneg %p49
      %p263 = pneg %p73
      %p264 = pneg %p70
      %p265 = pneg %p94
      %p266 = pneg %p91
      %s267 = smul.u32 16, %s22
      %p268 = scmp.lt.s32.totalorder %s267, 63
      %s269 = scalar_select %p268, %s267, 63
      %s270 = smul.addr %s269, 8
      %s271 = scalar_lea.vmem %s3, %s270
      %p272 = pneg %p120
      %p273 = pneg %p117
      %p274 = pneg %p141
      %p275 = pneg %p138
      %p276 = pneg %p162
      %p277 = pneg %p159
      %p278 = pneg %p190
      %p279 = pneg %p187
      %s280 = smul.u32 16, %s22
      %p281 = scmp.lt.s32.totalorder %s21, 1
      %s282 = scalar_select %p281, %s21, 1
      %p283 = scmp.lt.s32.totalorder %s280, 63
      %s284 = scalar_select %p283, %s280, 63
      %s285 = smul.addr %s282, 64
      %s286 = sadd.s32 %s284, %s285
      %s287 = smul.addr %s286, 8
      %s288 = scalar_lea.vmem %s6, %s287
      %s289 = smul.u32 16, %s22
      %p290 = scmp.lt.s32.totalorder %s21, 1
      %s291 = scalar_select %p290, %s21, 1
      %p292 = scmp.lt.s32.totalorder %s289, 63
      %s293 = scalar_select %p292, %s289, 63
      %s294 = smul.addr %s293, 27
      %s295 = smul.addr %s291, 1728
      %s296 = sadd.s32 %s294, %s295
      %s297 = smul.addr %s296, 4
      %s298 = scalar_lea.vmem %s0, %s297
      %s299 = smul.u32 16, %s22
      %s300 = smul.u32 16, %s22
      %p301 = scmp.lt.s32.totalorder %s300, 63
      %s302 = scalar_select %p301, %s300, 63
      %s303 = smul.addr %s302, 8
      %s304 = scalar_lea.vmem %s3, %s303
      %s305 = smul.u32 16, %s22
      %s306 = smul.u32 16, %s22
      %p307 = scmp.lt.s32.totalorder %s21, 1
      %s308 = scalar_select %p307, %s21, 1
      %p309 = scmp.lt.s32.totalorder %s306, 63
      %s310 = scalar_select %p309, %s306, 63
      %s311 = smul.addr %s308, 64
      %s312 = sadd.s32 %s310, %s311
      %s313 = smul.addr %s312, 8
      %s314 = scalar_lea.vmem %s6, %s313
      %s315 = smul.u32 16, %s22
      %v317 = vld [vmem:[%s298] sm:$0xff]
      %v318 = vld [vmem:[%s298 + $0x8] sm:$0xff]
      %v319 = vld [vmem:[%s298 + $0x10] sm:$0xff]
      %v320 = vld [vmem:[%s298 + $0x18] sm:$0xff]
      %v321 = vld [vmem:[%s298 + $0x20] sm:$0xff]
      %v322 = vld [vmem:[%s298 + $0x28] sm:$0xff]
      %v323 = vld [vmem:[%s298 + $0x30] sm:$0xff]
      %v324 = vld [vmem:[%s298 + $0x38] sm:$0xff]
      %v325 = vld [vmem:[%s298 + $0x40] sm:$0xff]
      %v326 = vld [vmem:[%s298 + $0x48] sm:$0xff]
      %v327 = vld [vmem:[%s298 + $0x50] sm:$0xff]
      %v328 = vld [vmem:[%s298 + $0x58] sm:$0xff]
      %v329 = vld [vmem:[%s298 + $0x60] sm:$0xff]
      %v330 = vld [vmem:[%s298 + $0x68] sm:$0xf]
      %v331 = vld [vmem:[%s298 + $0x6c] sm:$0xff]
      %v332 = vld [vmem:[%s298 + $0x74] sm:$0xff]
      %v333 = vld [vmem:[%s298 + $0x7c] sm:$0xff]
      %v334 = vld [vmem:[%s298 + $0x84] sm:$0xff]
      %v335 = vld [vmem:[%s298 + $0x8c] sm:$0xff]
      %v336 = vld [vmem:[%s298 + $0x94] sm:$0xff]
      %v337 = vld [vmem:[%s298 + $0x9c] sm:$0xff]
      %v338 = vld [vmem:[%s298 + $0xa4] sm:$0xff]
      %v339 = vld [vmem:[%s298 + $0xac] sm:$0xff]
      %v340 = vld [vmem:[%s298 + $0xb4] sm:$0xff]
      %v341 = vld [vmem:[%s298 + $0xbc] sm:$0xff]
      %v342 = vld [vmem:[%s298 + $0xc4] sm:$0xff]
      %v343 = vld [vmem:[%s298 + $0xcc] sm:$0xff]
      %v344 = vld [vmem:[%s298 + $0xd4] sm:$0xf]
      %v345 = vld [vmem:[%s298 + $0xd8] sm:$0xff]
      %v346 = vld [vmem:[%s298 + $0xe0] sm:$0xff]
      %v347 = vld [vmem:[%s298 + $0xe8] sm:$0xff]
      %v348 = vld [vmem:[%s298 + $0xf0] sm:$0xff]
      %v349 = vld [vmem:[%s298 + $0xf8] sm:$0xff]
      %v350 = vld [vmem:[%s298 + $0x100] sm:$0xff]
      %v351 = vld [vmem:[%s298 + $0x108] sm:$0xff]
      %v352 = vld [vmem:[%s298 + $0x110] sm:$0xff]
      %v353 = vld [vmem:[%s298 + $0x118] sm:$0xff]
      %v354 = vld [vmem:[%s298 + $0x120] sm:$0xff]
      %v355 = vld [vmem:[%s298 + $0x128] sm:$0xff]
      %v356 = vld [vmem:[%s298 + $0x130] sm:$0xff]
      %v357 = vld [vmem:[%s298 + $0x138] sm:$0xff]
      %v358 = vld [vmem:[%s298 + $0x140] sm:$0xf]
      %v359 = vld [vmem:[%s298 + $0x144] sm:$0xff]
      %v360 = vld [vmem:[%s298 + $0x14c] sm:$0xff]
      %v361 = vld [vmem:[%s298 + $0x154] sm:$0xff]
      %v362 = vld [vmem:[%s298 + $0x15c] sm:$0xff]
      %v363 = vld [vmem:[%s298 + $0x164] sm:$0xff]
      %v364 = vld [vmem:[%s298 + $0x16c] sm:$0xff]
      %v365 = vld [vmem:[%s298 + $0x174] sm:$0xff]
      %v366 = vld [vmem:[%s298 + $0x17c] sm:$0xff]
      %v367 = vld [vmem:[%s298 + $0x184] sm:$0xff]
      %v368 = vld [vmem:[%s298 + $0x18c] sm:$0xff]
      %v369 = vld [vmem:[%s298 + $0x194] sm:$0xff]
      %v370 = vld [vmem:[%s298 + $0x19c] sm:$0xff]
      %v371 = vld [vmem:[%s298 + $0x1a4] sm:$0xff]
      %v372 = vld [vmem:[%s298 + $0x1ac] sm:$0xf]
      %v373 = vld [vmem:[%s298 + $0x1b0] sm:$0xff]
      %v374 = vld [vmem:[%s298 + $0x1b8] sm:$0xff]
      %v375 = vld [vmem:[%s298 + $0x1c0] sm:$0xff]
      %v376 = vld [vmem:[%s298 + $0x1c8] sm:$0xff]
      %v377 = vld [vmem:[%s298 + $0x1d0] sm:$0xff]
      %v378 = vld [vmem:[%s298 + $0x1d8] sm:$0xff]
      %v379 = vld [vmem:[%s298 + $0x1e0] sm:$0xff]
      %v380 = vld [vmem:[%s298 + $0x1e8] sm:$0xff]
      %v381 = vld [vmem:[%s298 + $0x1f0] sm:$0xff]
      %v382 = vld [vmem:[%s298 + $0x1f8] sm:$0xff]
      %v383 = vld [vmem:[%s298 + $0x200] sm:$0xff]
      %v384 = vld [vmem:[%s298 + $0x208] sm:$0xff]
      %v385 = vld [vmem:[%s298 + $0x210] sm:$0xff]
      %v386 = vld [vmem:[%s298 + $0x218] sm:$0xf]
      %v387 = vld [vmem:[%s298 + $0x21c] sm:$0xff]
      %v388 = vld [vmem:[%s298 + $0x224] sm:$0xff]
      %v389 = vld [vmem:[%s298 + $0x22c] sm:$0xff]
      %v390 = vld [vmem:[%s298 + $0x234] sm:$0xff]
      %v391 = vld [vmem:[%s298 + $0x23c] sm:$0xff]
      %v392 = vld [vmem:[%s298 + $0x244] sm:$0xff]
      %v393 = vld [vmem:[%s298 + $0x24c] sm:$0xff]
      %v394 = vld [vmem:[%s298 + $0x254] sm:$0xff]
      %v395 = vld [vmem:[%s298 + $0x25c] sm:$0xff]
      %v396 = vld [vmem:[%s298 + $0x264] sm:$0xff]
      %v397 = vld [vmem:[%s298 + $0x26c] sm:$0xff]
      %v398 = vld [vmem:[%s298 + $0x274] sm:$0xff]
      %v399 = vld [vmem:[%s298 + $0x27c] sm:$0xff]
      %v400 = vld [vmem:[%s298 + $0x284] sm:$0xf]
      %v401 = vld [vmem:[%s298 + $0x288] sm:$0xff]
      %v402 = vld [vmem:[%s298 + $0x290] sm:$0xff]
      %v403 = vld [vmem:[%s298 + $0x298] sm:$0xff]
      %v404 = vld [vmem:[%s298 + $0x2a0] sm:$0xff]
      %v405 = vld [vmem:[%s298 + $0x2a8] sm:$0xff]
      %v406 = vld [vmem:[%s298 + $0x2b0] sm:$0xff]
      %v407 = vld [vmem:[%s298 + $0x2b8] sm:$0xff]
      %v408 = vld [vmem:[%s298 + $0x2c0] sm:$0xff]
      %v409 = vld [vmem:[%s298 + $0x2c8] sm:$0xff]
      %v410 = vld [vmem:[%s298 + $0x2d0] sm:$0xff]
      %v411 = vld [vmem:[%s298 + $0x2d8] sm:$0xff]
      %v412 = vld [vmem:[%s298 + $0x2e0] sm:$0xff]
      %v413 = vld [vmem:[%s298 + $0x2e8] sm:$0xff]
      %v414 = vld [vmem:[%s298 + $0x2f0] sm:$0xf]
      %v415 = vld [vmem:[%s298 + $0x2f4] sm:$0xff]
      %v416 = vld [vmem:[%s298 + $0x2fc] sm:$0xff]
      %v417 = vld [vmem:[%s298 + $0x304] sm:$0xff]
      %v418 = vld [vmem:[%s298 + $0x30c] sm:$0xff]
      %v419 = vld [vmem:[%s298 + $0x314] sm:$0xff]
      %v420 = vld [vmem:[%s298 + $0x31c] sm:$0xff]
      %v421 = vld [vmem:[%s298 + $0x324] sm:$0xff]
      %v422 = vld [vmem:[%s298 + $0x32c] sm:$0xff]
      %v423 = vld [vmem:[%s298 + $0x334] sm:$0xff]
      %v424 = vld [vmem:[%s298 + $0x33c] sm:$0xff]
      %v425 = vld [vmem:[%s298 + $0x344] sm:$0xff]
      %v426 = vld [vmem:[%s298 + $0x34c] sm:$0xff]
      %v427 = vld [vmem:[%s298 + $0x354] sm:$0xff]
      %v428 = vld [vmem:[%s298 + $0x35c] sm:$0xf]
      %v429 = vld [vmem:[%s298 + $0x360] sm:$0xff]
      %v430 = vld [vmem:[%s298 + $0x368] sm:$0xff]
      %v431 = vld [vmem:[%s298 + $0x370] sm:$0xff]
      %v432 = vld [vmem:[%s298 + $0x378] sm:$0xff]
      %v433 = vld [vmem:[%s298 + $0x380] sm:$0xff]
      %v434 = vld [vmem:[%s298 + $0x388] sm:$0xff]
      %v435 = vld [vmem:[%s298 + $0x390] sm:$0xff]
      %v436 = vld [vmem:[%s298 + $0x398] sm:$0xff]
      %v437 = vld [vmem:[%s298 + $0x3a0] sm:$0xff]
      %v438 = vld [vmem:[%s298 + $0x3a8] sm:$0xff]
      %v439 = vld [vmem:[%s298 + $0x3b0] sm:$0xff]
      %v440 = vld [vmem:[%s298 + $0x3b8] sm:$0xff]
      %v441 = vld [vmem:[%s298 + $0x3c0] sm:$0xff]
      %v442 = vld [vmem:[%s298 + $0x3c8] sm:$0xf]
      %v443 = vld [vmem:[%s298 + $0x3cc] sm:$0xff]
      %v444 = vld [vmem:[%s298 + $0x3d4] sm:$0xff]
      %v445 = vld [vmem:[%s298 + $0x3dc] sm:$0xff]
      %v446 = vld [vmem:[%s298 + $0x3e4] sm:$0xff]
      %v447 = vld [vmem:[%s298 + $0x3ec] sm:$0xff]
      %v448 = vld [vmem:[%s298 + $0x3f4] sm:$0xff]
      %v449 = vld [vmem:[%s298 + $0x3fc] sm:$0xff]
      %v450 = vld [vmem:[%s298 + $0x404] sm:$0xff]
      %v451 = vld [vmem:[%s298 + $0x40c] sm:$0xff]
      %v452 = vld [vmem:[%s298 + $0x414] sm:$0xff]
      %v453 = vld [vmem:[%s298 + $0x41c] sm:$0xff]
      %v454 = vld [vmem:[%s298 + $0x424] sm:$0xff]
      %v455 = vld [vmem:[%s298 + $0x42c] sm:$0xff]
      %v456 = vld [vmem:[%s298 + $0x434] sm:$0xf]
      %v457 = vld [vmem:[%s298 + $0x438] sm:$0xff]
      %v458 = vld [vmem:[%s298 + $0x440] sm:$0xff]
      %v459 = vld [vmem:[%s298 + $0x448] sm:$0xff]
      %v460 = vld [vmem:[%s298 + $0x450] sm:$0xff]
      %v461 = vld [vmem:[%s298 + $0x458] sm:$0xff]
      %v462 = vld [vmem:[%s298 + $0x460] sm:$0xff]
      %v463 = vld [vmem:[%s298 + $0x468] sm:$0xff]
      %v464 = vld [vmem:[%s298 + $0x470] sm:$0xff]
      %v465 = vld [vmem:[%s298 + $0x478] sm:$0xff]
      %v466 = vld [vmem:[%s298 + $0x480] sm:$0xff]
      %v467 = vld [vmem:[%s298 + $0x488] sm:$0xff]
      %v468 = vld [vmem:[%s298 + $0x490] sm:$0xff]
      %v469 = vld [vmem:[%s298 + $0x498] sm:$0xff]
      %v470 = vld [vmem:[%s298 + $0x4a0] sm:$0xf]
      %v471 = vld [vmem:[%s298 + $0x4a4] sm:$0xff]
      %v472 = vld [vmem:[%s298 + $0x4ac] sm:$0xff]
      %v473 = vld [vmem:[%s298 + $0x4b4] sm:$0xff]
      %v474 = vld [vmem:[%s298 + $0x4bc] sm:$0xff]
      %v475 = vld [vmem:[%s298 + $0x4c4] sm:$0xff]
      %v476 = vld [vmem:[%s298 + $0x4cc] sm:$0xff]
      %v477 = vld [vmem:[%s298 + $0x4d4] sm:$0xff]
      %v478 = vld [vmem:[%s298 + $0x4dc] sm:$0xff]
      %v479 = vld [vmem:[%s298 + $0x4e4] sm:$0xff]
      %v480 = vld [vmem:[%s298 + $0x4ec] sm:$0xff]
      %v481 = vld [vmem:[%s298 + $0x4f4] sm:$0xff]
      %v482 = vld [vmem:[%s298 + $0x4fc] sm:$0xff]
      %v483 = vld [vmem:[%s298 + $0x504] sm:$0xff]
      %v484 = vld [vmem:[%s298 + $0x50c] sm:$0xf]
      %v485 = vld [vmem:[%s298 + $0x510] sm:$0xff]
      %v486 = vld [vmem:[%s298 + $0x518] sm:$0xff]
      %v487 = vld [vmem:[%s298 + $0x520] sm:$0xff]
      %v488 = vld [vmem:[%s298 + $0x528] sm:$0xff]
      %v489 = vld [vmem:[%s298 + $0x530] sm:$0xff]
      %v490 = vld [vmem:[%s298 + $0x538] sm:$0xff]
      %v491 = vld [vmem:[%s298 + $0x540] sm:$0xff]
      %v492 = vld [vmem:[%s298 + $0x548] sm:$0xff]
      %v493 = vld [vmem:[%s298 + $0x550] sm:$0xff]
      %v494 = vld [vmem:[%s298 + $0x558] sm:$0xff]
      %v495 = vld [vmem:[%s298 + $0x560] sm:$0xff]
      %v496 = vld [vmem:[%s298 + $0x568] sm:$0xff]
      %v497 = vld [vmem:[%s298 + $0x570] sm:$0xff]
      %v498 = vld [vmem:[%s298 + $0x578] sm:$0xf]
      %v499 = vld [vmem:[%s298 + $0x57c] sm:$0xff]
      %v500 = vld [vmem:[%s298 + $0x584] sm:$0xff]
      %v501 = vld [vmem:[%s298 + $0x58c] sm:$0xff]
      %v502 = vld [vmem:[%s298 + $0x594] sm:$0xff]
      %v503 = vld [vmem:[%s298 + $0x59c] sm:$0xff]
      %v504 = vld [vmem:[%s298 + $0x5a4] sm:$0xff]
      %v505 = vld [vmem:[%s298 + $0x5ac] sm:$0xff]
      %v506 = vld [vmem:[%s298 + $0x5b4] sm:$0xff]
      %v507 = vld [vmem:[%s298 + $0x5bc] sm:$0xff]
      %v508 = vld [vmem:[%s298 + $0x5c4] sm:$0xff]
      %v509 = vld [vmem:[%s298 + $0x5cc] sm:$0xff]
      %v510 = vld [vmem:[%s298 + $0x5d4] sm:$0xff]
      %v511 = vld [vmem:[%s298 + $0x5dc] sm:$0xff]
      %v512 = vld [vmem:[%s298 + $0x5e4] sm:$0xf]
      %v513 = vld [vmem:[%s298 + $0x5e8] sm:$0xff]
      %v514 = vld [vmem:[%s298 + $0x5f0] sm:$0xff]
      %v515 = vld [vmem:[%s298 + $0x5f8] sm:$0xff]
      %v516 = vld [vmem:[%s298 + $0x600] sm:$0xff]
      %v517 = vld [vmem:[%s298 + $0x608] sm:$0xff]
      %v518 = vld [vmem:[%s298 + $0x610] sm:$0xff]
      %v519 = vld [vmem:[%s298 + $0x618] sm:$0xff]
      %v520 = vld [vmem:[%s298 + $0x620] sm:$0xff]
      %v521 = vld [vmem:[%s298 + $0x628] sm:$0xff]
      %v522 = vld [vmem:[%s298 + $0x630] sm:$0xff]
      %v523 = vld [vmem:[%s298 + $0x638] sm:$0xff]
      %v524 = vld [vmem:[%s298 + $0x640] sm:$0xff]
      %v525 = vld [vmem:[%s298 + $0x648] sm:$0xff]
      %v526 = vld [vmem:[%s298 + $0x650] sm:$0xf]
      %v527 = vld [vmem:[%s298 + $0x654] sm:$0xff]
      %v528 = vld [vmem:[%s298 + $0x65c] sm:$0xff]
      %v529 = vld [vmem:[%s298 + $0x664] sm:$0xff]
      %v530 = vld [vmem:[%s298 + $0x66c] sm:$0xff]
      %v531 = vld [vmem:[%s298 + $0x674] sm:$0xff]
      %v532 = vld [vmem:[%s298 + $0x67c] sm:$0xff]
      %v533 = vld [vmem:[%s298 + $0x684] sm:$0xff]
      %v534 = vld [vmem:[%s298 + $0x68c] sm:$0xff]
      %v535 = vld [vmem:[%s298 + $0x694] sm:$0xff]
      %v536 = vld [vmem:[%s298 + $0x69c] sm:$0xff]
      %v537 = vld [vmem:[%s298 + $0x6a4] sm:$0xff]
      %v538 = vld [vmem:[%s298 + $0x6ac] sm:$0xff]
      %v539 = vld [vmem:[%s298 + $0x6b4] sm:$0xff]
      %v540 = vld [vmem:[%s298 + $0x6bc] sm:$0xf]
      %v541 = vld [vmem:[%s1] sm:$0xf]
      %v542 = vld [vmem:[%s1 + $0x4] sm:$0xf]
      %v543 = vld [vmem:[%s1 + $0x8] sm:$0xf]
      %v544 = vld [vmem:[%s1 + $0xc] sm:$0xf]
      %v545 = vld [vmem:[%s1 + $0x10] sm:$0xf]
      %v546 = vld [vmem:[%s1 + $0x14] sm:$0xf]
      %v547 = vld [vmem:[%s1 + $0x18] sm:$0xf]
      %v548 = vld [vmem:[%s1 + $0x1c] sm:$0xf]
      %v549 = vld [vmem:[%s1 + $0x20] sm:$0xf]
      %v550 = vld [vmem:[%s1 + $0x24] sm:$0xf]
      %v551 = vld [vmem:[%s1 + $0x28] sm:$0xf]
      %v552 = vld [vmem:[%s1 + $0x2c] sm:$0xf]
      %v553 = vld [vmem:[%s1 + $0x30] sm:$0xf]
      %v554 = vld [vmem:[%s1 + $0x34] sm:$0xf]
      %v555 = vld [vmem:[%s1 + $0x38] sm:$0xf]
      %v556 = vld [vmem:[%s1 + $0x3c] sm:$0xf]
      %v557 = vld [vmem:[%s1 + $0x40] sm:$0xf]
      %v558 = vld [vmem:[%s1 + $0x44] sm:$0xf]
      %v559 = vld [vmem:[%s1 + $0x48] sm:$0xf]
      %v560 = vld [vmem:[%s1 + $0x4c] sm:$0xf]
      %v561 = vld [vmem:[%s1 + $0x50] sm:$0xf]
      %v562 = vld [vmem:[%s1 + $0x54] sm:$0xf]
      %v563 = vld [vmem:[%s1 + $0x58] sm:$0xf]
      %v564 = vld [vmem:[%s1 + $0x5c] sm:$0xf]
      %v565 = vld [vmem:[%s1 + $0x60] sm:$0xf]
      %v566 = vld [vmem:[%s1 + $0x64] sm:$0xf]
      %v567 = vld [vmem:[%s1 + $0x68] sm:$0xf]
      %v568 = vld [vmem:[%s1 + $0x6c] sm:$0xf]
      %v569 = vld [vmem:[%s1 + $0x70] sm:$0xf]
      %v570 = vld [vmem:[%s1 + $0x74] sm:$0xf]
      %v571 = vld [vmem:[%s1 + $0x78] sm:$0xf]
      %v572 = vld [vmem:[%s1 + $0x7c] sm:$0xf]
      %v573 = vld [vmem:[%s1 + $0x80] sm:$0xf]
      %v574 = vld [vmem:[%s1 + $0x84] sm:$0xf]
      %v575 = vld [vmem:[%s1 + $0x88] sm:$0xf]
      %v576 = vld [vmem:[%s1 + $0x8c] sm:$0xf]
      %v577 = vld [vmem:[%s1 + $0x90] sm:$0xf]
      %v578 = vld [vmem:[%s1 + $0x94] sm:$0xf]
      %v579 = vld [vmem:[%s1 + $0x98] sm:$0xf]
      %v580 = vld [vmem:[%s1 + $0x9c] sm:$0xf]
      %v581 = vld [vmem:[%s1 + $0xa0] sm:$0xf]
      %v582 = vld [vmem:[%s1 + $0xa4] sm:$0xf]
      %v583 = vld [vmem:[%s1 + $0xa8] sm:$0xf]
      %v584 = vld [vmem:[%s1 + $0xac] sm:$0xf]
      %v585 = vld [vmem:[%s1 + $0xb0] sm:$0xf]
      %v586 = vld [vmem:[%s1 + $0xb4] sm:$0xf]
      %v587 = vld [vmem:[%s1 + $0xb8] sm:$0xf]
      %v588 = vld [vmem:[%s1 + $0xbc] sm:$0xf]
      %v589 = vld [vmem:[%s1 + $0xc0] sm:$0xf]
      %v590 = vld [vmem:[%s1 + $0xc4] sm:$0xf]
      %v591 = vld [vmem:[%s1 + $0xc8] sm:$0xf]
      %v592 = vld [vmem:[%s1 + $0xcc] sm:$0xf]
      %v593 = vld [vmem:[%s1 + $0xd0] sm:$0xf]
      %v594 = vld [vmem:[%s1 + $0xd4] sm:$0xf]
      %v595 = vld [vmem:[%s1 + $0xd8] sm:$0xf]
      %v596 = vld [vmem:[%s1 + $0xdc] sm:$0xf]
      %v597 = vld [vmem:[%s1 + $0xe0] sm:$0xf]
      %v598 = vld [vmem:[%s1 + $0xe4] sm:$0xf]
      %v599 = vld [vmem:[%s1 + $0xe8] sm:$0xf]
      %v600 = vld [vmem:[%s1 + $0xec] sm:$0xf]
      %v601 = vld [vmem:[%s1 + $0xf0] sm:$0xf]
      %v602 = vld [vmem:[%s1 + $0xf4] sm:$0xf]
      %v603 = vld [vmem:[%s1 + $0xf8] sm:$0xf]
      %v604 = vld [vmem:[%s1 + $0xfc] sm:$0xf]
      %v605 = vld [vmem:[%s1 + $0x100] sm:$0xf]
      %v606 = vld [vmem:[%s1 + $0x104] sm:$0xf]
      %v607 = vld [vmem:[%s1 + $0x108] sm:$0xf]
      %v608 = vld [vmem:[%s1 + $0x10c] sm:$0xf]
      %v609 = vld [vmem:[%s1 + $0x110] sm:$0xf]
      %v610 = vld [vmem:[%s1 + $0x114] sm:$0xf]
      %v611 = vld [vmem:[%s1 + $0x118] sm:$0xf]
      %v612 = vld [vmem:[%s1 + $0x11c] sm:$0xf]
      %v613 = vld [vmem:[%s1 + $0x120] sm:$0xf]
      %v614 = vld [vmem:[%s1 + $0x124] sm:$0xf]
      %v615 = vld [vmem:[%s1 + $0x128] sm:$0xf]
      %v616 = vld [vmem:[%s1 + $0x12c] sm:$0xf]
      %v617 = vld [vmem:[%s1 + $0x130] sm:$0xf]
      %v618 = vld [vmem:[%s1 + $0x134] sm:$0xf]
      %v619 = vld [vmem:[%s1 + $0x138] sm:$0xf]
      %v620 = vld [vmem:[%s1 + $0x13c] sm:$0xf]
      %v621 = vld [vmem:[%s1 + $0x140] sm:$0xf]
      %v622 = vld [vmem:[%s1 + $0x144] sm:$0xf]
      %v623 = vld [vmem:[%s1 + $0x148] sm:$0xf]
      %v624 = vld [vmem:[%s1 + $0x14c] sm:$0xf]
      %v625 = vld [vmem:[%s1 + $0x150] sm:$0xf]
      %v626 = vld [vmem:[%s1 + $0x154] sm:$0xf]
      %v627 = vld [vmem:[%s1 + $0x158] sm:$0xf]
      %v628 = vld [vmem:[%s1 + $0x15c] sm:$0xf]
      %v629 = vld [vmem:[%s1 + $0x160] sm:$0xf]
      %v630 = vld [vmem:[%s1 + $0x164] sm:$0xf]
      %v631 = vld [vmem:[%s1 + $0x168] sm:$0xf]
      %v632 = vld [vmem:[%s1 + $0x16c] sm:$0xf]
      %v633 = vld [vmem:[%s1 + $0x170] sm:$0xf]
      %v634 = vld [vmem:[%s1 + $0x174] sm:$0xf]
      %v635 = vld [vmem:[%s1 + $0x178] sm:$0xf]
      %v636 = vld [vmem:[%s1 + $0x17c] sm:$0xf]
      %v637 = vld [vmem:[%s1 + $0x180] sm:$0xf]
      %v638 = vld [vmem:[%s1 + $0x184] sm:$0xf]
      %v639 = vld [vmem:[%s1 + $0x188] sm:$0xf]
      %v640 = vld [vmem:[%s1 + $0x18c] sm:$0xf]
      %v641 = vld [vmem:[%s1 + $0x190] sm:$0xf]
      %v642 = vld [vmem:[%s1 + $0x194] sm:$0xf]
      %v643 = vld [vmem:[%s1 + $0x198] sm:$0xf]
      %v644 = vld [vmem:[%s1 + $0x19c] sm:$0xf]
      %v645 = vld [vmem:[%s1 + $0x1a0] sm:$0xf]
      %v646 = vld [vmem:[%s1 + $0x1a4] sm:$0xf]
      %v647 = vld [vmem:[%s1 + $0x1a8] sm:$0xf]
      %v648 = vld [vmem:[%s1 + $0x1ac] sm:$0xf]
      %v649 = vld [vmem:[%s1 + $0x1b0] sm:$0xf]
      %v650 = vld [vmem:[%s1 + $0x1b4] sm:$0xf]
      %v651 = vld [vmem:[%s1 + $0x1b8] sm:$0xf]
      %v652 = vld [vmem:[%s1 + $0x1bc] sm:$0xf]
      %v653 = vld [vmem:[%s1 + $0x1c0] sm:$0xf]
      %v654 = vld [vmem:[%s1 + $0x1c4] sm:$0xf]
      %v655 = vld [vmem:[%s1 + $0x1c8] sm:$0xf]
      %v656 = vld [vmem:[%s1 + $0x1cc] sm:$0xf]
      %v657 = vld [vmem:[%s1 + $0x1d0] sm:$0xf]
      %v658 = vld [vmem:[%s1 + $0x1d4] sm:$0xf]
      %v659 = vld [vmem:[%s1 + $0x1d8] sm:$0xf]
      %v660 = vld [vmem:[%s1 + $0x1dc] sm:$0xf]
      %v661 = vld [vmem:[%s1 + $0x1e0] sm:$0xf]
      %v662 = vld [vmem:[%s1 + $0x1e4] sm:$0xf]
      %v663 = vld [vmem:[%s1 + $0x1e8] sm:$0xf]
      %v664 = vld [vmem:[%s1 + $0x1ec] sm:$0xf]
      %v665 = vld [vmem:[%s1 + $0x1f0] sm:$0xf]
      %v666 = vld [vmem:[%s1 + $0x1f4] sm:$0xf]
      %v667 = vld [vmem:[%s1 + $0x1f8] sm:$0xf]
      %v668 = vld [vmem:[%s1 + $0x1fc] sm:$0xf]
      %v669 = vld [vmem:[%s1 + $0x200] sm:$0xf]
      %v670 = vld [vmem:[%s1 + $0x204] sm:$0xf]
      %v671 = vld [vmem:[%s1 + $0x208] sm:$0xf]
      %v672 = vld [vmem:[%s1 + $0x20c] sm:$0xf]
      %v673 = vld [vmem:[%s1 + $0x210] sm:$0xf]
      %v674 = vld [vmem:[%s1 + $0x214] sm:$0xf]
      %v675 = vld [vmem:[%s1 + $0x218] sm:$0xf]
      %v676 = vld [vmem:[%s1 + $0x21c] sm:$0xf]
      %v677 = vld [vmem:[%s1 + $0x220] sm:$0xf]
      %v678 = vld [vmem:[%s1 + $0x224] sm:$0xf]
      %v679 = vld [vmem:[%s1 + $0x228] sm:$0xf]
      %v680 = vld [vmem:[%s1 + $0x22c] sm:$0xf]
      %v681 = vld [vmem:[%s1 + $0x230] sm:$0xf]
      %v682 = vld [vmem:[%s1 + $0x234] sm:$0xf]
      %v683 = vld [vmem:[%s1 + $0x238] sm:$0xf]
      %v684 = vld [vmem:[%s1 + $0x23c] sm:$0xf]
      %v685 = vld [vmem:[%s1 + $0x240] sm:$0xf]
      %v686 = vld [vmem:[%s1 + $0x244] sm:$0xf]
      %v687 = vld [vmem:[%s1 + $0x248] sm:$0xf]
      %v688 = vld [vmem:[%s1 + $0x24c] sm:$0xf]
      %v689 = vld [vmem:[%s1 + $0x250] sm:$0xf]
      %v690 = vld [vmem:[%s1 + $0x254] sm:$0xf]
      %v691 = vld [vmem:[%s1 + $0x258] sm:$0xf]
      %v692 = vld [vmem:[%s1 + $0x25c] sm:$0xf]
      %v693 = vld [vmem:[%s1 + $0x260] sm:$0xf]
      %v694 = vld [vmem:[%s1 + $0x264] sm:$0xf]
      %v695 = vld [vmem:[%s1 + $0x268] sm:$0xf]
      %v696 = vld [vmem:[%s1 + $0x26c] sm:$0xf]
      %v697 = vld [vmem:[%s1 + $0x270] sm:$0xf]
      %v698 = vld [vmem:[%s1 + $0x274] sm:$0xf]
      %v699 = vld [vmem:[%s1 + $0x278] sm:$0xf]
      %v700 = vld [vmem:[%s1 + $0x27c] sm:$0xf]
      %v701 = vld [vmem:[%s1 + $0x280] sm:$0xf]
      %v702 = vld [vmem:[%s1 + $0x284] sm:$0xf]
      %v703 = vld [vmem:[%s1 + $0x288] sm:$0xf]
      %v704 = vld [vmem:[%s1 + $0x28c] sm:$0xf]
      %v705 = vld [vmem:[%s1 + $0x290] sm:$0xf]
      %v706 = vld [vmem:[%s1 + $0x294] sm:$0xf]
      %v707 = vld [vmem:[%s1 + $0x298] sm:$0xf]
      %v708 = vld [vmem:[%s1 + $0x29c] sm:$0xf]
      %v709 = vld [vmem:[%s1 + $0x2a0] sm:$0xf]
      %v710 = vld [vmem:[%s1 + $0x2a4] sm:$0xf]
      %v711 = vld [vmem:[%s1 + $0x2a8] sm:$0xf]
      %v712 = vld [vmem:[%s1 + $0x2ac] sm:$0xf]
      %v713 = vld [vmem:[%s1 + $0x2b0] sm:$0xf]
      %v714 = vld [vmem:[%s1 + $0x2b4] sm:$0xf]
      %v715 = vld [vmem:[%s1 + $0x2b8] sm:$0xf]
      %v716 = vld [vmem:[%s1 + $0x2bc] sm:$0xf]
      %v717 = vld [vmem:[%s1 + $0x2c0] sm:$0xf]
      %v718 = vld [vmem:[%s1 + $0x2c4] sm:$0xf]
      %v719 = vld [vmem:[%s1 + $0x2c8] sm:$0xf]
      %v720 = vld [vmem:[%s1 + $0x2cc] sm:$0xf]
      %v721 = vld [vmem:[%s1 + $0x2d0] sm:$0xf]
      %v722 = vld [vmem:[%s1 + $0x2d4] sm:$0xf]
      %v723 = vld [vmem:[%s1 + $0x2d8] sm:$0xf]
      %v724 = vld [vmem:[%s1 + $0x2dc] sm:$0xf]
      %v725 = vld [vmem:[%s1 + $0x2e0] sm:$0xf]
      %v726 = vld [vmem:[%s1 + $0x2e4] sm:$0xf]
      %v727 = vld [vmem:[%s1 + $0x2e8] sm:$0xf]
      %v728 = vld [vmem:[%s1 + $0x2ec] sm:$0xf]
      %v729 = vld [vmem:[%s1 + $0x2f0] sm:$0xf]
      %v730 = vld [vmem:[%s1 + $0x2f4] sm:$0xf]
      %v731 = vld [vmem:[%s1 + $0x2f8] sm:$0xf]
      %v732 = vld [vmem:[%s1 + $0x2fc] sm:$0xf]
      %v733 = vld [vmem:[%s1 + $0x300] sm:$0xf]
      %v734 = vld [vmem:[%s1 + $0x304] sm:$0xf]
      %v735 = vld [vmem:[%s1 + $0x308] sm:$0xf]
      %v736 = vld [vmem:[%s1 + $0x30c] sm:$0xf]
      %v737 = vld [vmem:[%s1 + $0x310] sm:$0xf]
      %v738 = vld [vmem:[%s1 + $0x314] sm:$0xf]
      %v739 = vld [vmem:[%s1 + $0x318] sm:$0xf]
      %v740 = vld [vmem:[%s1 + $0x31c] sm:$0xf]
      %v741 = vld [vmem:[%s1 + $0x320] sm:$0xf]
      %v742 = vld [vmem:[%s1 + $0x324] sm:$0xf]
      %v743 = vld [vmem:[%s1 + $0x328] sm:$0xf]
      %v744 = vld [vmem:[%s1 + $0x32c] sm:$0xf]
      %v745 = vld [vmem:[%s1 + $0x330] sm:$0xf]
      %v746 = vld [vmem:[%s1 + $0x334] sm:$0xf]
      %v747 = vld [vmem:[%s1 + $0x338] sm:$0xf]
      %v748 = vld [vmem:[%s1 + $0x33c] sm:$0xf]
      %v749 = vld [vmem:[%s1 + $0x340] sm:$0xf]
      %v750 = vld [vmem:[%s1 + $0x344] sm:$0xf]
      %v751 = vld [vmem:[%s1 + $0x348] sm:$0xf]
      %v752 = vld [vmem:[%s1 + $0x34c] sm:$0xf]
      %v753 = vld [vmem:[%s1 + $0x350] sm:$0xf]
      %v754 = vld [vmem:[%s1 + $0x354] sm:$0xf]
      %v755 = vld [vmem:[%s1 + $0x358] sm:$0xf]
      %v756 = vld [vmem:[%s1 + $0x35c] sm:$0xf]
      %v757 = vld [vmem:[%s1 + $0x360] sm:$0xf]
      %v758 = vld [vmem:[%s1 + $0x364] sm:$0xf]
      %v759 = vld [vmem:[%s1 + $0x368] sm:$0xf]
      %v760 = vld [vmem:[%s1 + $0x36c] sm:$0xf]
      %v761 = vld [vmem:[%s1 + $0x370] sm:$0xf]
      %v762 = vld [vmem:[%s1 + $0x374] sm:$0xf]
      %v763 = vld [vmem:[%s1 + $0x378] sm:$0xf]
      %v764 = vld [vmem:[%s1 + $0x37c] sm:$0xf]
      %v765 = vld [vmem:[%s1 + $0x380] sm:$0xf]
      %v766 = vld [vmem:[%s1 + $0x384] sm:$0xf]
      %v767 = vld [vmem:[%s1 + $0x388] sm:$0xf]
      %v768 = vld [vmem:[%s1 + $0x38c] sm:$0xf]
      %v769 = vld [vmem:[%s1 + $0x390] sm:$0xf]
      %v770 = vld [vmem:[%s1 + $0x394] sm:$0xf]
      %v771 = vld [vmem:[%s1 + $0x398] sm:$0xf]
      %v772 = vld [vmem:[%s1 + $0x39c] sm:$0xf]
      %v773 = vld [vmem:[%s1 + $0x3a0] sm:$0xf]
      %v774 = vld [vmem:[%s1 + $0x3a4] sm:$0xf]
      %v775 = vld [vmem:[%s1 + $0x3a8] sm:$0xf]
      %v776 = vld [vmem:[%s1 + $0x3ac] sm:$0xf]
      %v777 = vld [vmem:[%s1 + $0x3b0] sm:$0xf]
      %v778 = vld [vmem:[%s1 + $0x3b4] sm:$0xf]
      %v779 = vld [vmem:[%s1 + $0x3b8] sm:$0xf]
      %v780 = vld [vmem:[%s1 + $0x3bc] sm:$0xf]
      %v781 = vld [vmem:[%s1 + $0x3c0] sm:$0xf]
      %v782 = vld [vmem:[%s1 + $0x3c4] sm:$0xf]
      %v783 = vld [vmem:[%s1 + $0x3c8] sm:$0xf]
      %v784 = vld [vmem:[%s1 + $0x3cc] sm:$0xf]
      %v785 = vld [vmem:[%s1 + $0x3d0] sm:$0xf]
      %v786 = vld [vmem:[%s1 + $0x3d4] sm:$0xf]
      %v787 = vld [vmem:[%s1 + $0x3d8] sm:$0xf]
      %v788 = vld [vmem:[%s1 + $0x3dc] sm:$0xf]
      %v789 = vld [vmem:[%s1 + $0x3e0] sm:$0xf]
      %v790 = vld [vmem:[%s1 + $0x3e4] sm:$0xf]
      %v791 = vld [vmem:[%s1 + $0x3e8] sm:$0xf]
      %v792 = vld [vmem:[%s1 + $0x3ec] sm:$0xf]
      %v793 = vld [vmem:[%s1 + $0x3f0] sm:$0xf]
      %v794 = vld [vmem:[%s1 + $0x3f4] sm:$0xf]
      %v795 = vld [vmem:[%s1 + $0x3f8] sm:$0xf]
      %v796 = vld [vmem:[%s1 + $0x3fc] sm:$0xf]
      %v797 = vld [vmem:[%s1 + $0x400] sm:$0xf]
      %v798 = vld [vmem:[%s1 + $0x404] sm:$0xf]
      %v799 = vld [vmem:[%s1 + $0x408] sm:$0xf]
      %v800 = vld [vmem:[%s1 + $0x40c] sm:$0xf]
      %v801 = vld [vmem:[%s1 + $0x410] sm:$0xf]
      %v802 = vld [vmem:[%s1 + $0x414] sm:$0xf]
      %v803 = vld [vmem:[%s1 + $0x418] sm:$0xf]
      %v804 = vld [vmem:[%s1 + $0x41c] sm:$0xf]
      %v805 = vld [vmem:[%s1 + $0x420] sm:$0xf]
      %v806 = vld [vmem:[%s1 + $0x424] sm:$0xf]
      %v807 = vld [vmem:[%s1 + $0x428] sm:$0xf]
      %v808 = vld [vmem:[%s1 + $0x42c] sm:$0xf]
      %v809 = vld [vmem:[%s1 + $0x430] sm:$0xf]
      %v810 = vld [vmem:[%s1 + $0x434] sm:$0xf]
      %v811 = vld [vmem:[%s1 + $0x438] sm:$0xf]
      %v812 = vld [vmem:[%s1 + $0x43c] sm:$0xf]
      %v813 = vld [vmem:[%s1 + $0x440] sm:$0xf]
      %v814 = vld [vmem:[%s1 + $0x444] sm:$0xf]
      %v815 = vld [vmem:[%s1 + $0x448] sm:$0xf]
      %v816 = vld [vmem:[%s1 + $0x44c] sm:$0xf]
      %v817 = vld [vmem:[%s1 + $0x450] sm:$0xf]
      %v818 = vld [vmem:[%s1 + $0x454] sm:$0xf]
      %v819 = vld [vmem:[%s1 + $0x458] sm:$0xf]
      %v820 = vld [vmem:[%s1 + $0x45c] sm:$0xf]
      %v821 = vld [vmem:[%s1 + $0x460] sm:$0xf]
      %v822 = vld [vmem:[%s1 + $0x464] sm:$0xf]
      %v823 = vld [vmem:[%s1 + $0x468] sm:$0xf]
      %v824 = vld [vmem:[%s1 + $0x46c] sm:$0xf]
      %v825 = vld [vmem:[%s1 + $0x470] sm:$0xf]
      %v826 = vld [vmem:[%s1 + $0x474] sm:$0xf]
      %v827 = vld [vmem:[%s1 + $0x478] sm:$0xf]
      %v828 = vld [vmem:[%s1 + $0x47c] sm:$0xf]
      %v829 = vld [vmem:[%s1 + $0x480] sm:$0xf]
      %v830 = vld [vmem:[%s1 + $0x484] sm:$0xf]
      %v831 = vld [vmem:[%s1 + $0x488] sm:$0xf]
      %v832 = vld [vmem:[%s1 + $0x48c] sm:$0xf]
      %v833 = vld [vmem:[%s1 + $0x490] sm:$0xf]
      %v834 = vld [vmem:[%s1 + $0x494] sm:$0xf]
      %v835 = vld [vmem:[%s1 + $0x498] sm:$0xf]
      %v836 = vld [vmem:[%s1 + $0x49c] sm:$0xf]
      %v837 = vld [vmem:[%s1 + $0x4a0] sm:$0xf]
      %v838 = vld [vmem:[%s1 + $0x4a4] sm:$0xf]
      %v839 = vld [vmem:[%s1 + $0x4a8] sm:$0xf]
      %v840 = vld [vmem:[%s1 + $0x4ac] sm:$0xf]
      %v841 = vld [vmem:[%s1 + $0x4b0] sm:$0xf]
      %v842 = vld [vmem:[%s1 + $0x4b4] sm:$0xf]
      %v843 = vld [vmem:[%s1 + $0x4b8] sm:$0xf]
      %v844 = vld [vmem:[%s1 + $0x4bc] sm:$0xf]
      %v845 = vld [vmem:[%s1 + $0x4c0] sm:$0xf]
      %v846 = vld [vmem:[%s1 + $0x4c4] sm:$0xf]
      %v847 = vld [vmem:[%s1 + $0x4c8] sm:$0xf]
      %v848 = vld [vmem:[%s1 + $0x4cc] sm:$0xf]
      %v849 = vld [vmem:[%s1 + $0x4d0] sm:$0xf]
      %v850 = vld [vmem:[%s1 + $0x4d4] sm:$0xf]
      %v851 = vld [vmem:[%s1 + $0x4d8] sm:$0xf]
      %v852 = vld [vmem:[%s1 + $0x4dc] sm:$0xf]
      %v853 = vld [vmem:[%s1 + $0x4e0] sm:$0xf]
      %v854 = vld [vmem:[%s1 + $0x4e4] sm:$0xf]
      %v855 = vld [vmem:[%s1 + $0x4e8] sm:$0xf]
      %v856 = vld [vmem:[%s1 + $0x4ec] sm:$0xf]
      %v857 = vld [vmem:[%s1 + $0x4f0] sm:$0xf]
      %v858 = vld [vmem:[%s1 + $0x4f4] sm:$0xf]
      %v859 = vld [vmem:[%s1 + $0x4f8] sm:$0xf]
      %v860 = vld [vmem:[%s1 + $0x4fc] sm:$0xf]
      %v861 = vld [vmem:[%s1 + $0x500] sm:$0xf]
      %v862 = vld [vmem:[%s1 + $0x504] sm:$0xf]
      %v863 = vld [vmem:[%s1 + $0x508] sm:$0xf]
      %v864 = vld [vmem:[%s1 + $0x50c] sm:$0xf]
      %v865 = vld [vmem:[%s1 + $0x510] sm:$0xf]
      %v866 = vld [vmem:[%s1 + $0x514] sm:$0xf]
      %v867 = vld [vmem:[%s1 + $0x518] sm:$0xf]
      %v868 = vld [vmem:[%s1 + $0x51c] sm:$0xf]
      %v869 = vld [vmem:[%s1 + $0x520] sm:$0xf]
      %v870 = vld [vmem:[%s1 + $0x524] sm:$0xf]
      %v871 = vld [vmem:[%s1 + $0x528] sm:$0xf]
      %v872 = vld [vmem:[%s1 + $0x52c] sm:$0xf]
      %v873 = vld [vmem:[%s1 + $0x530] sm:$0xf]
      %v874 = vld [vmem:[%s1 + $0x534] sm:$0xf]
      %v875 = vld [vmem:[%s1 + $0x538] sm:$0xf]
      %v876 = vld [vmem:[%s1 + $0x53c] sm:$0xf]
      %v877 = vld [vmem:[%s1 + $0x540] sm:$0xf]
      %v878 = vld [vmem:[%s1 + $0x544] sm:$0xf]
      %v879 = vld [vmem:[%s1 + $0x548] sm:$0xf]
      %v880 = vld [vmem:[%s1 + $0x54c] sm:$0xf]
      %v881 = vld [vmem:[%s1 + $0x550] sm:$0xf]
      %v882 = vld [vmem:[%s1 + $0x554] sm:$0xf]
      %v883 = vld [vmem:[%s1 + $0x558] sm:$0xf]
      %v884 = vld [vmem:[%s1 + $0x55c] sm:$0xf]
      %v885 = vld [vmem:[%s1 + $0x560] sm:$0xf]
      %v886 = vld [vmem:[%s1 + $0x564] sm:$0xf]
      %v887 = vld [vmem:[%s1 + $0x568] sm:$0xf]
      %v888 = vld [vmem:[%s1 + $0x56c] sm:$0xf]
      %v889 = vld [vmem:[%s1 + $0x570] sm:$0xf]
      %v890 = vld [vmem:[%s1 + $0x574] sm:$0xf]
      %v891 = vld [vmem:[%s1 + $0x578] sm:$0xf]
      %v892 = vld [vmem:[%s1 + $0x57c] sm:$0xf]
      %v893 = vld [vmem:[%s1 + $0x580] sm:$0xf]
      %v894 = vld [vmem:[%s1 + $0x584] sm:$0xf]
      %v895 = vld [vmem:[%s1 + $0x588] sm:$0xf]
      %v896 = vld [vmem:[%s1 + $0x58c] sm:$0xf]
      %v897 = vld [vmem:[%s1 + $0x590] sm:$0xf]
      %v898 = vld [vmem:[%s1 + $0x594] sm:$0xf]
      %v899 = vld [vmem:[%s1 + $0x598] sm:$0xf]
      %v900 = vld [vmem:[%s1 + $0x59c] sm:$0xf]
      %v901 = vld [vmem:[%s1 + $0x5a0] sm:$0xf]
      %v902 = vld [vmem:[%s1 + $0x5a4] sm:$0xf]
      %v903 = vld [vmem:[%s1 + $0x5a8] sm:$0xf]
      %v904 = vld [vmem:[%s1 + $0x5ac] sm:$0xf]
      %v905 = vld [vmem:[%s1 + $0x5b0] sm:$0xf]
      %v906 = vld [vmem:[%s1 + $0x5b4] sm:$0xf]
      %v907 = vld [vmem:[%s1 + $0x5b8] sm:$0xf]
      %v908 = vld [vmem:[%s1 + $0x5bc] sm:$0xf]
      %v909 = vld [vmem:[%s1 + $0x5c0] sm:$0xf]
      %v910 = vld [vmem:[%s1 + $0x5c4] sm:$0xf]
      %v911 = vld [vmem:[%s1 + $0x5c8] sm:$0xf]
      %v912 = vld [vmem:[%s1 + $0x5cc] sm:$0xf]
      %v913 = vld [vmem:[%s1 + $0x5d0] sm:$0xf]
      %v914 = vld [vmem:[%s1 + $0x5d4] sm:$0xf]
      %v915 = vld [vmem:[%s1 + $0x5d8] sm:$0xf]
      %v916 = vld [vmem:[%s1 + $0x5dc] sm:$0xf]
      %v917 = vld [vmem:[%s1 + $0x5e0] sm:$0xf]
      %v918 = vld [vmem:[%s1 + $0x5e4] sm:$0xf]
      %v919 = vld [vmem:[%s1 + $0x5e8] sm:$0xf]
      %v920 = vld [vmem:[%s1 + $0x5ec] sm:$0xf]
      %v921 = vld [vmem:[%s1 + $0x5f0] sm:$0xf]
      %v922 = vld [vmem:[%s1 + $0x5f4] sm:$0xf]
      %v923 = vld [vmem:[%s1 + $0x5f8] sm:$0xf]
      %v924 = vld [vmem:[%s1 + $0x5fc] sm:$0xf]
      %v925 = vld [vmem:[%s1 + $0x600] sm:$0xf]
      %v926 = vld [vmem:[%s1 + $0x604] sm:$0xf]
      %v927 = vld [vmem:[%s1 + $0x608] sm:$0xf]
      %v928 = vld [vmem:[%s1 + $0x60c] sm:$0xf]
      %v929 = vld [vmem:[%s1 + $0x610] sm:$0xf]
      %v930 = vld [vmem:[%s1 + $0x614] sm:$0xf]
      %v931 = vld [vmem:[%s1 + $0x618] sm:$0xf]
      %v932 = vld [vmem:[%s1 + $0x61c] sm:$0xf]
      %v933 = vld [vmem:[%s1 + $0x620] sm:$0xf]
      %v934 = vld [vmem:[%s1 + $0x624] sm:$0xf]
      %v935 = vld [vmem:[%s1 + $0x628] sm:$0xf]
      %v936 = vld [vmem:[%s1 + $0x62c] sm:$0xf]
      %v937 = vld [vmem:[%s1 + $0x630] sm:$0xf]
      %v938 = vld [vmem:[%s1 + $0x634] sm:$0xf]
      %v939 = vld [vmem:[%s1 + $0x638] sm:$0xf]
      %v940 = vld [vmem:[%s1 + $0x63c] sm:$0xf]
      %v941 = vld [vmem:[%s1 + $0x640] sm:$0xf]
      %v942 = vld [vmem:[%s1 + $0x644] sm:$0xf]
      %v943 = vld [vmem:[%s1 + $0x648] sm:$0xf]
      %v944 = vld [vmem:[%s1 + $0x64c] sm:$0xf]
      %v945 = vld [vmem:[%s1 + $0x650] sm:$0xf]
      %v946 = vld [vmem:[%s1 + $0x654] sm:$0xf]
      %v947 = vld [vmem:[%s1 + $0x658] sm:$0xf]
      %v948 = vld [vmem:[%s1 + $0x65c] sm:$0xf]
      %v949 = vld [vmem:[%s1 + $0x660] sm:$0xf]
      %v950 = vld [vmem:[%s1 + $0x664] sm:$0xf]
      %v951 = vld [vmem:[%s1 + $0x668] sm:$0xf]
      %v952 = vld [vmem:[%s1 + $0x66c] sm:$0xf]
      %v953 = vld [vmem:[%s1 + $0x670] sm:$0xf]
      %v954 = vld [vmem:[%s1 + $0x674] sm:$0xf]
      %v955 = vld [vmem:[%s1 + $0x678] sm:$0xf]
      %v956 = vld [vmem:[%s1 + $0x67c] sm:$0xf]
      %v957 = vld [vmem:[%s1 + $0x680] sm:$0xf]
      %v958 = vld [vmem:[%s1 + $0x684] sm:$0xf]
      %v959 = vld [vmem:[%s1 + $0x688] sm:$0xf]
      %v960 = vld [vmem:[%s1 + $0x68c] sm:$0xf]
      %v961 = vld [vmem:[%s1 + $0x690] sm:$0xf]
      %v962 = vld [vmem:[%s1 + $0x694] sm:$0xf]
      %v963 = vld [vmem:[%s1 + $0x698] sm:$0xf]
      %v964 = vld [vmem:[%s1 + $0x69c] sm:$0xf]
      %v965 = vld [vmem:[%s1 + $0x6a0] sm:$0xf]
      %v966 = vld [vmem:[%s1 + $0x6a4] sm:$0xf]
      %v967 = vld [vmem:[%s1 + $0x6a8] sm:$0xf]
      %v968 = vld [vmem:[%s1 + $0x6ac] sm:$0xf]
      %v969 = vld [vmem:[%s1 + $0x6b0] sm:$0xf]
      %v970 = vld [vmem:[%s1 + $0x6b4] sm:$0xf]
      %v971 = vld [vmem:[%s1 + $0x6b8] sm:$0xf]
      %v972 = vld [vmem:[%s1 + $0x6bc] sm:$0xf]
      %v973 = vld [vmem:[%s304] sm:$0xff]
      %v974 = vld [vmem:[%s304 + $0x8] sm:$0xff]
      %v975 = vld [vmem:[%s304 + $0x10] sm:$0xff]
      %v976 = vld [vmem:[%s304 + $0x18] sm:$0xff]
      %v977 = vld [vmem:[%s304 + $0x20] sm:$0xff]
      %v978 = vld [vmem:[%s304 + $0x28] sm:$0xff]
      %v979 = vld [vmem:[%s304 + $0x30] sm:$0xff]
      %v980 = vld [vmem:[%s304 + $0x38] sm:$0xff]
      %v981 = vld [vmem:[%s304 + $0x40] sm:$0xff]
      %v982 = vld [vmem:[%s304 + $0x48] sm:$0xff]
      %v983 = vld [vmem:[%s304 + $0x50] sm:$0xff]
      %v984 = vld [vmem:[%s304 + $0x58] sm:$0xff]
      %v985 = vld [vmem:[%s304 + $0x60] sm:$0xff]
      %v986 = vld [vmem:[%s304 + $0x68] sm:$0xff]
      %v987 = vld [vmem:[%s304 + $0x70] sm:$0xff]
      %v988 = vld [vmem:[%s304 + $0x78] sm:$0xff]
      %v1213 = vunpack.c.l.b16 %v317
      %v1214 = vunpack.c.h.b16 %v317
      %v1215 = vunpack.c.l.b16 %v318
      %v1216 = vunpack.c.h.b16 %v318
      %v1217 = vunpack.c.l.b16 %v319
      %v1218 = vunpack.c.h.b16 %v319
      %v1219 = vunpack.c.l.b16 %v320
      %v1220 = vunpack.c.h.b16 %v320
      %v1221 = vunpack.c.l.b16 %v321
      %v1222 = vunpack.c.h.b16 %v321
      %v1223 = vunpack.c.l.b16 %v322
      %v1224 = vunpack.c.h.b16 %v322
      %v1225 = vunpack.c.l.b16 %v323
      %v1226 = vunpack.c.h.b16 %v323
      %v1227 = vunpack.c.l.b16 %v324
      %v1228 = vunpack.c.h.b16 %v324
      %v1229 = vunpack.c.l.b16 %v325
      %v1230 = vunpack.c.h.b16 %v325
      %v1231 = vunpack.c.l.b16 %v326
      %v1232 = vunpack.c.h.b16 %v326
      %v1233 = vunpack.c.l.b16 %v327
      %v1234 = vunpack.c.h.b16 %v327
      %v1235 = vunpack.c.l.b16 %v328
      %v1236 = vunpack.c.h.b16 %v328
      %v1237 = vunpack.c.l.b16 %v329
      %v1238 = vunpack.c.h.b16 %v329
      %v1239 = vunpack.c.l.b16 %v330
      %v1240 = vunpack.c.l.b16 %v331
      %v1241 = vunpack.c.h.b16 %v331
      %v1242 = vunpack.c.l.b16 %v332
      %v1243 = vunpack.c.h.b16 %v332
      %v1244 = vunpack.c.l.b16 %v333
      %v1245 = vunpack.c.h.b16 %v333
      %v1246 = vunpack.c.l.b16 %v334
      %v1247 = vunpack.c.h.b16 %v334
      %v1248 = vunpack.c.l.b16 %v335
      %v1249 = vunpack.c.h.b16 %v335
      %v1250 = vunpack.c.l.b16 %v336
      %v1251 = vunpack.c.h.b16 %v336
      %v1252 = vunpack.c.l.b16 %v337
      %v1253 = vunpack.c.h.b16 %v337
      %v1254 = vunpack.c.l.b16 %v338
      %v1255 = vunpack.c.h.b16 %v338
      %v1256 = vunpack.c.l.b16 %v339
      %v1257 = vunpack.c.h.b16 %v339
      %v1258 = vunpack.c.l.b16 %v340
      %v1259 = vunpack.c.h.b16 %v340
      %v1260 = vunpack.c.l.b16 %v341
      %v1261 = vunpack.c.h.b16 %v341
      %v1262 = vunpack.c.l.b16 %v342
      %v1263 = vunpack.c.h.b16 %v342
      %v1264 = vunpack.c.l.b16 %v343
      %v1265 = vunpack.c.h.b16 %v343
      %v1266 = vunpack.c.l.b16 %v344
      %v1267 = vunpack.c.l.b16 %v345
      %v1268 = vunpack.c.h.b16 %v345
      %v1269 = vunpack.c.l.b16 %v346
      %v1270 = vunpack.c.h.b16 %v346
      %v1271 = vunpack.c.l.b16 %v347
      %v1272 = vunpack.c.h.b16 %v347
      %v1273 = vunpack.c.l.b16 %v348
      %v1274 = vunpack.c.h.b16 %v348
      %v1275 = vunpack.c.l.b16 %v349
      %v1276 = vunpack.c.h.b16 %v349
      %v1277 = vunpack.c.l.b16 %v350
      %v1278 = vunpack.c.h.b16 %v350
      %v1279 = vunpack.c.l.b16 %v351
      %v1280 = vunpack.c.h.b16 %v351
      %v1281 = vunpack.c.l.b16 %v352
      %v1282 = vunpack.c.h.b16 %v352
      %v1283 = vunpack.c.l.b16 %v353
      %v1284 = vunpack.c.h.b16 %v353
      %v1285 = vunpack.c.l.b16 %v354
      %v1286 = vunpack.c.h.b16 %v354
      %v1287 = vunpack.c.l.b16 %v355
      %v1288 = vunpack.c.h.b16 %v355
      %v1289 = vunpack.c.l.b16 %v356
      %v1290 = vunpack.c.h.b16 %v356
      %v1291 = vunpack.c.l.b16 %v357
      %v1292 = vunpack.c.h.b16 %v357
      %v1293 = vunpack.c.l.b16 %v358
      %v1294 = vunpack.c.l.b16 %v359
      %v1295 = vunpack.c.h.b16 %v359
      %v1296 = vunpack.c.l.b16 %v360
      %v1297 = vunpack.c.h.b16 %v360
      %v1298 = vunpack.c.l.b16 %v361
      %v1299 = vunpack.c.h.b16 %v361
      %v1300 = vunpack.c.l.b16 %v362
      %v1301 = vunpack.c.h.b16 %v362
      %v1302 = vunpack.c.l.b16 %v363
      %v1303 = vunpack.c.h.b16 %v363
      %v1304 = vunpack.c.l.b16 %v364
      %v1305 = vunpack.c.h.b16 %v364
      %v1306 = vunpack.c.l.b16 %v365
      %v1307 = vunpack.c.h.b16 %v365
      %v1308 = vunpack.c.l.b16 %v366
      %v1309 = vunpack.c.h.b16 %v366
      %v1310 = vunpack.c.l.b16 %v367
      %v1311 = vunpack.c.h.b16 %v367
      %v1312 = vunpack.c.l.b16 %v368
      %v1313 = vunpack.c.h.b16 %v368
      %v1314 = vunpack.c.l.b16 %v369
      %v1315 = vunpack.c.h.b16 %v369
      %v1316 = vunpack.c.l.b16 %v370
      %v1317 = vunpack.c.h.b16 %v370
      %v1318 = vunpack.c.l.b16 %v371
      %v1319 = vunpack.c.h.b16 %v371
      %v1320 = vunpack.c.l.b16 %v372
      %v1321 = vunpack.c.l.b16 %v373
      %v1322 = vunpack.c.h.b16 %v373
      %v1323 = vunpack.c.l.b16 %v374
      %v1324 = vunpack.c.h.b16 %v374
      %v1325 = vunpack.c.l.b16 %v375
      %v1326 = vunpack.c.h.b16 %v375
      %v1327 = vunpack.c.l.b16 %v376
      %v1328 = vunpack.c.h.b16 %v376
      %v1329 = vunpack.c.l.b16 %v377
      %v1330 = vunpack.c.h.b16 %v377
      %v1331 = vunpack.c.l.b16 %v378
      %v1332 = vunpack.c.h.b16 %v378
      %v1333 = vunpack.c.l.b16 %v379
      %v1334 = vunpack.c.h.b16 %v379
      %v1335 = vunpack.c.l.b16 %v380
      %v1336 = vunpack.c.h.b16 %v380
      %v1337 = vunpack.c.l.b16 %v381
      %v1338 = vunpack.c.h.b16 %v381
      %v1339 = vunpack.c.l.b16 %v382
      %v1340 = vunpack.c.h.b16 %v382
      %v1341 = vunpack.c.l.b16 %v383
      %v1342 = vunpack.c.h.b16 %v383
      %v1343 = vunpack.c.l.b16 %v384
      %v1344 = vunpack.c.h.b16 %v384
      %v1345 = vunpack.c.l.b16 %v385
      %v1346 = vunpack.c.h.b16 %v385
      %v1347 = vunpack.c.l.b16 %v386
      %v1348 = vunpack.c.l.b16 %v387
      %v1349 = vunpack.c.h.b16 %v387
      %v1350 = vunpack.c.l.b16 %v388
      %v1351 = vunpack.c.h.b16 %v388
      %v1352 = vunpack.c.l.b16 %v389
      %v1353 = vunpack.c.h.b16 %v389
      %v1354 = vunpack.c.l.b16 %v390
      %v1355 = vunpack.c.h.b16 %v390
      %v1356 = vunpack.c.l.b16 %v391
      %v1357 = vunpack.c.h.b16 %v391
      %v1358 = vunpack.c.l.b16 %v392
      %v1359 = vunpack.c.h.b16 %v392
      %v1360 = vunpack.c.l.b16 %v393
      %v1361 = vunpack.c.h.b16 %v393
      %v1362 = vunpack.c.l.b16 %v394
      %v1363 = vunpack.c.h.b16 %v394
      %v1364 = vunpack.c.l.b16 %v395
      %v1365 = vunpack.c.h.b16 %v395
      %v1366 = vunpack.c.l.b16 %v396
      %v1367 = vunpack.c.h.b16 %v396
      %v1368 = vunpack.c.l.b16 %v397
      %v1369 = vunpack.c.h.b16 %v397
      %v1370 = vunpack.c.l.b16 %v398
      %v1371 = vunpack.c.h.b16 %v398
      %v1372 = vunpack.c.l.b16 %v399
      %v1373 = vunpack.c.h.b16 %v399
      %v1374 = vunpack.c.l.b16 %v400
      %v1375 = vunpack.c.l.b16 %v401
      %v1376 = vunpack.c.h.b16 %v401
      %v1377 = vunpack.c.l.b16 %v402
      %v1378 = vunpack.c.h.b16 %v402
      %v1379 = vunpack.c.l.b16 %v403
      %v1380 = vunpack.c.h.b16 %v403
      %v1381 = vunpack.c.l.b16 %v404
      %v1382 = vunpack.c.h.b16 %v404
      %v1383 = vunpack.c.l.b16 %v405
      %v1384 = vunpack.c.h.b16 %v405
      %v1385 = vunpack.c.l.b16 %v406
      %v1386 = vunpack.c.h.b16 %v406
      %v1387 = vunpack.c.l.b16 %v407
      %v1388 = vunpack.c.h.b16 %v407
      %v1389 = vunpack.c.l.b16 %v408
      %v1390 = vunpack.c.h.b16 %v408
      %v1391 = vunpack.c.l.b16 %v409
      %v1392 = vunpack.c.h.b16 %v409
      %v1393 = vunpack.c.l.b16 %v410
      %v1394 = vunpack.c.h.b16 %v410
      %v1395 = vunpack.c.l.b16 %v411
      %v1396 = vunpack.c.h.b16 %v411
      %v1397 = vunpack.c.l.b16 %v412
      %v1398 = vunpack.c.h.b16 %v412
      %v1399 = vunpack.c.l.b16 %v413
      %v1400 = vunpack.c.h.b16 %v413
      %v1401 = vunpack.c.l.b16 %v414
      %v1402 = vunpack.c.l.b16 %v415
      %v1403 = vunpack.c.h.b16 %v415
      %v1404 = vunpack.c.l.b16 %v416
      %v1405 = vunpack.c.h.b16 %v416
      %v1406 = vunpack.c.l.b16 %v417
      %v1407 = vunpack.c.h.b16 %v417
      %v1408 = vunpack.c.l.b16 %v418
      %v1409 = vunpack.c.h.b16 %v418
      %v1410 = vunpack.c.l.b16 %v419
      %v1411 = vunpack.c.h.b16 %v419
      %v1412 = vunpack.c.l.b16 %v420
      %v1413 = vunpack.c.h.b16 %v420
      %v1414 = vunpack.c.l.b16 %v421
      %v1415 = vunpack.c.h.b16 %v421
      %v1416 = vunpack.c.l.b16 %v422
      %v1417 = vunpack.c.h.b16 %v422
      %v1418 = vunpack.c.l.b16 %v423
      %v1419 = vunpack.c.h.b16 %v423
      %v1420 = vunpack.c.l.b16 %v424
      %v1421 = vunpack.c.h.b16 %v424
      %v1422 = vunpack.c.l.b16 %v425
      %v1423 = vunpack.c.h.b16 %v425
      %v1424 = vunpack.c.l.b16 %v426
      %v1425 = vunpack.c.h.b16 %v426
      %v1426 = vunpack.c.l.b16 %v427
      %v1427 = vunpack.c.h.b16 %v427
      %v1428 = vunpack.c.l.b16 %v428
      %v1429 = vunpack.c.l.b16 %v429
      %v1430 = vunpack.c.h.b16 %v429
      %v1431 = vunpack.c.l.b16 %v430
      %v1432 = vunpack.c.h.b16 %v430
      %v1433 = vunpack.c.l.b16 %v431
      %v1434 = vunpack.c.h.b16 %v431
      %v1435 = vunpack.c.l.b16 %v432
      %v1436 = vunpack.c.h.b16 %v432
      %v1437 = vunpack.c.l.b16 %v433
      %v1438 = vunpack.c.h.b16 %v433
      %v1439 = vunpack.c.l.b16 %v434
      %v1440 = vunpack.c.h.b16 %v434
      %v1441 = vunpack.c.l.b16 %v435
      %v1442 = vunpack.c.h.b16 %v435
      %v1443 = vunpack.c.l.b16 %v436
      %v1444 = vunpack.c.h.b16 %v436
      %v1445 = vunpack.c.l.b16 %v437
      %v1446 = vunpack.c.h.b16 %v437
      %v1447 = vunpack.c.l.b16 %v438
      %v1448 = vunpack.c.h.b16 %v438
      %v1449 = vunpack.c.l.b16 %v439
      %v1450 = vunpack.c.h.b16 %v439
      %v1451 = vunpack.c.l.b16 %v440
      %v1452 = vunpack.c.h.b16 %v440
      %v1453 = vunpack.c.l.b16 %v441
      %v1454 = vunpack.c.h.b16 %v441
      %v1455 = vunpack.c.l.b16 %v442
      %v1456 = vunpack.c.l.b16 %v443
      %v1457 = vunpack.c.h.b16 %v443
      %v1458 = vunpack.c.l.b16 %v444
      %v1459 = vunpack.c.h.b16 %v444
      %v1460 = vunpack.c.l.b16 %v445
      %v1461 = vunpack.c.h.b16 %v445
      %v1462 = vunpack.c.l.b16 %v446
      %v1463 = vunpack.c.h.b16 %v446
      %v1464 = vunpack.c.l.b16 %v447
      %v1465 = vunpack.c.h.b16 %v447
      %v1466 = vunpack.c.l.b16 %v448
      %v1467 = vunpack.c.h.b16 %v448
      %v1468 = vunpack.c.l.b16 %v449
      %v1469 = vunpack.c.h.b16 %v449
      %v1470 = vunpack.c.l.b16 %v450
      %v1471 = vunpack.c.h.b16 %v450
      %v1472 = vunpack.c.l.b16 %v451
      %v1473 = vunpack.c.h.b16 %v451
      %v1474 = vunpack.c.l.b16 %v452
      %v1475 = vunpack.c.h.b16 %v452
      %v1476 = vunpack.c.l.b16 %v453
      %v1477 = vunpack.c.h.b16 %v453
      %v1478 = vunpack.c.l.b16 %v454
      %v1479 = vunpack.c.h.b16 %v454
      %v1480 = vunpack.c.l.b16 %v455
      %v1481 = vunpack.c.h.b16 %v455
      %v1482 = vunpack.c.l.b16 %v456
      %v1483 = vunpack.c.l.b16 %v457
      %v1484 = vunpack.c.h.b16 %v457
      %v1485 = vunpack.c.l.b16 %v458
      %v1486 = vunpack.c.h.b16 %v458
      %v1487 = vunpack.c.l.b16 %v459
      %v1488 = vunpack.c.h.b16 %v459
      %v1489 = vunpack.c.l.b16 %v460
      %v1490 = vunpack.c.h.b16 %v460
      %v1491 = vunpack.c.l.b16 %v461
      %v1492 = vunpack.c.h.b16 %v461
      %v1493 = vunpack.c.l.b16 %v462
      %v1494 = vunpack.c.h.b16 %v462
      %v1495 = vunpack.c.l.b16 %v463
      %v1496 = vunpack.c.h.b16 %v463
      %v1497 = vunpack.c.l.b16 %v464
      %v1498 = vunpack.c.h.b16 %v464
      %v1499 = vunpack.c.l.b16 %v465
      %v1500 = vunpack.c.h.b16 %v465
      %v1501 = vunpack.c.l.b16 %v466
      %v1502 = vunpack.c.h.b16 %v466
      %v1503 = vunpack.c.l.b16 %v467
      %v1504 = vunpack.c.h.b16 %v467
      %v1505 = vunpack.c.l.b16 %v468
      %v1506 = vunpack.c.h.b16 %v468
      %v1507 = vunpack.c.l.b16 %v469
      %v1508 = vunpack.c.h.b16 %v469
      %v1509 = vunpack.c.l.b16 %v470
      %v1510 = vunpack.c.l.b16 %v471
      %v1511 = vunpack.c.h.b16 %v471
      %v1512 = vunpack.c.l.b16 %v472
      %v1513 = vunpack.c.h.b16 %v472
      %v1514 = vunpack.c.l.b16 %v473
      %v1515 = vunpack.c.h.b16 %v473
      %v1516 = vunpack.c.l.b16 %v474
      %v1517 = vunpack.c.h.b16 %v474
      %v1518 = vunpack.c.l.b16 %v475
      %v1519 = vunpack.c.h.b16 %v475
      %v1520 = vunpack.c.l.b16 %v476
      %v1521 = vunpack.c.h.b16 %v476
      %v1522 = vunpack.c.l.b16 %v477
      %v1523 = vunpack.c.h.b16 %v477
      %v1524 = vunpack.c.l.b16 %v478
      %v1525 = vunpack.c.h.b16 %v478
      %v1526 = vunpack.c.l.b16 %v479
      %v1527 = vunpack.c.h.b16 %v479
      %v1528 = vunpack.c.l.b16 %v480
      %v1529 = vunpack.c.h.b16 %v480
      %v1530 = vunpack.c.l.b16 %v481
      %v1531 = vunpack.c.h.b16 %v481
      %v1532 = vunpack.c.l.b16 %v482
      %v1533 = vunpack.c.h.b16 %v482
      %v1534 = vunpack.c.l.b16 %v483
      %v1535 = vunpack.c.h.b16 %v483
      %v1536 = vunpack.c.l.b16 %v484
      %v1537 = vunpack.c.l.b16 %v485
      %v1538 = vunpack.c.h.b16 %v485
      %v1539 = vunpack.c.l.b16 %v486
      %v1540 = vunpack.c.h.b16 %v486
      %v1541 = vunpack.c.l.b16 %v487
      %v1542 = vunpack.c.h.b16 %v487
      %v1543 = vunpack.c.l.b16 %v488
      %v1544 = vunpack.c.h.b16 %v488
      %v1545 = vunpack.c.l.b16 %v489
      %v1546 = vunpack.c.h.b16 %v489
      %v1547 = vunpack.c.l.b16 %v490
      %v1548 = vunpack.c.h.b16 %v490
      %v1549 = vunpack.c.l.b16 %v491
      %v1550 = vunpack.c.h.b16 %v491
      %v1551 = vunpack.c.l.b16 %v492
      %v1552 = vunpack.c.h.b16 %v492
      %v1553 = vunpack.c.l.b16 %v493
      %v1554 = vunpack.c.h.b16 %v493
      %v1555 = vunpack.c.l.b16 %v494
      %v1556 = vunpack.c.h.b16 %v494
      %v1557 = vunpack.c.l.b16 %v495
      %v1558 = vunpack.c.h.b16 %v495
      %v1559 = vunpack.c.l.b16 %v496
      %v1560 = vunpack.c.h.b16 %v496
      %v1561 = vunpack.c.l.b16 %v497
      %v1562 = vunpack.c.h.b16 %v497
      %v1563 = vunpack.c.l.b16 %v498
      %v1564 = vunpack.c.l.b16 %v499
      %v1565 = vunpack.c.h.b16 %v499
      %v1566 = vunpack.c.l.b16 %v500
      %v1567 = vunpack.c.h.b16 %v500
      %v1568 = vunpack.c.l.b16 %v501
      %v1569 = vunpack.c.h.b16 %v501
      %v1570 = vunpack.c.l.b16 %v502
      %v1571 = vunpack.c.h.b16 %v502
      %v1572 = vunpack.c.l.b16 %v503
      %v1573 = vunpack.c.h.b16 %v503
      %v1574 = vunpack.c.l.b16 %v504
      %v1575 = vunpack.c.h.b16 %v504
      %v1576 = vunpack.c.l.b16 %v505
      %v1577 = vunpack.c.h.b16 %v505
      %v1578 = vunpack.c.l.b16 %v506
      %v1579 = vunpack.c.h.b16 %v506
      %v1580 = vunpack.c.l.b16 %v507
      %v1581 = vunpack.c.h.b16 %v507
      %v1582 = vunpack.c.l.b16 %v508
      %v1583 = vunpack.c.h.b16 %v508
      %v1584 = vunpack.c.l.b16 %v509
      %v1585 = vunpack.c.h.b16 %v509
      %v1586 = vunpack.c.l.b16 %v510
      %v1587 = vunpack.c.h.b16 %v510
      %v1588 = vunpack.c.l.b16 %v511
      %v1589 = vunpack.c.h.b16 %v511
      %v1590 = vunpack.c.l.b16 %v512
      %v1591 = vunpack.c.l.b16 %v513
      %v1592 = vunpack.c.h.b16 %v513
      %v1593 = vunpack.c.l.b16 %v514
      %v1594 = vunpack.c.h.b16 %v514
      %v1595 = vunpack.c.l.b16 %v515
      %v1596 = vunpack.c.h.b16 %v515
      %v1597 = vunpack.c.l.b16 %v516
      %v1598 = vunpack.c.h.b16 %v516
      %v1599 = vunpack.c.l.b16 %v517
      %v1600 = vunpack.c.h.b16 %v517
      %v1601 = vunpack.c.l.b16 %v518
      %v1602 = vunpack.c.h.b16 %v518
      %v1603 = vunpack.c.l.b16 %v519
      %v1604 = vunpack.c.h.b16 %v519
      %v1605 = vunpack.c.l.b16 %v520
      %v1606 = vunpack.c.h.b16 %v520
      %v1607 = vunpack.c.l.b16 %v521
      %v1608 = vunpack.c.h.b16 %v521
      %v1609 = vunpack.c.l.b16 %v522
      %v1610 = vunpack.c.h.b16 %v522
      %v1611 = vunpack.c.l.b16 %v523
      %v1612 = vunpack.c.h.b16 %v523
      %v1613 = vunpack.c.l.b16 %v524
      %v1614 = vunpack.c.h.b16 %v524
      %v1615 = vunpack.c.l.b16 %v525
      %v1616 = vunpack.c.h.b16 %v525
      %v1617 = vunpack.c.l.b16 %v526
      %v1618 = vunpack.c.l.b16 %v527
      %v1619 = vunpack.c.h.b16 %v527
      %v1620 = vunpack.c.l.b16 %v528
      %v1621 = vunpack.c.h.b16 %v528
      %v1622 = vunpack.c.l.b16 %v529
      %v1623 = vunpack.c.h.b16 %v529
      %v1624 = vunpack.c.l.b16 %v530
      %v1625 = vunpack.c.h.b16 %v530
      %v1626 = vunpack.c.l.b16 %v531
      %v1627 = vunpack.c.h.b16 %v531
      %v1628 = vunpack.c.l.b16 %v532
      %v1629 = vunpack.c.h.b16 %v532
      %v1630 = vunpack.c.l.b16 %v533
      %v1631 = vunpack.c.h.b16 %v533
      %v1632 = vunpack.c.l.b16 %v534
      %v1633 = vunpack.c.h.b16 %v534
      %v1634 = vunpack.c.l.b16 %v535
      %v1635 = vunpack.c.h.b16 %v535
      %v1636 = vunpack.c.l.b16 %v536
      %v1637 = vunpack.c.h.b16 %v536
      %v1638 = vunpack.c.l.b16 %v537
      %v1639 = vunpack.c.h.b16 %v537
      %v1640 = vunpack.c.l.b16 %v538
      %v1641 = vunpack.c.h.b16 %v538
      %v1642 = vunpack.c.l.b16 %v539
      %v1643 = vunpack.c.h.b16 %v539
      %v1644 = vunpack.c.l.b16 %v540
      %v1645 = vpack.c.b16 %v1240, %v1213
      %v1646 = vpack.c.b16 %v1241, %v1214
      %v1647 = vpack.c.b16 %v1242, %v1215
      %v1648 = vpack.c.b16 %v1243, %v1216
      %v1649 = vpack.c.b16 %v1244, %v1217
      %v1650 = vpack.c.b16 %v1245, %v1218
      %v1651 = vpack.c.b16 %v1246, %v1219
      %v1652 = vpack.c.b16 %v1247, %v1220
      %v1653 = vpack.c.b16 %v1248, %v1221
      %v1654 = vpack.c.b16 %v1249, %v1222
      %v1655 = vpack.c.b16 %v1250, %v1223
      %v1656 = vpack.c.b16 %v1251, %v1224
      %v1657 = vpack.c.b16 %v1252, %v1225
      %v1658 = vpack.c.b16 %v1253, %v1226
      %v1659 = vpack.c.b16 %v1254, %v1227
      %v1660 = vpack.c.b16 %v1255, %v1228
      %v1661 = vpack.c.b16 %v1256, %v1229
      %v1662 = vpack.c.b16 %v1257, %v1230
      %v1663 = vpack.c.b16 %v1258, %v1231
      %v1664 = vpack.c.b16 %v1259, %v1232
      %v1665 = vpack.c.b16 %v1260, %v1233
      %v1666 = vpack.c.b16 %v1261, %v1234
      %v1667 = vpack.c.b16 %v1262, %v1235
      %v1668 = vpack.c.b16 %v1263, %v1236
      %v1669 = vpack.c.b16 %v1264, %v1237
      %v1670 = vpack.c.b16 %v1265, %v1238
      %v1671 = vpack.c.b16 %v1266, %v1239
      %v1672 = vpack.c.b16 %v1294, %v1267
      %v1673 = vpack.c.b16 %v1295, %v1268
      %v1674 = vpack.c.b16 %v1296, %v1269
      %v1675 = vpack.c.b16 %v1297, %v1270
      %v1676 = vpack.c.b16 %v1298, %v1271
      %v1677 = vpack.c.b16 %v1299, %v1272
      %v1678 = vpack.c.b16 %v1300, %v1273
      %v1679 = vpack.c.b16 %v1301, %v1274
      %v1680 = vpack.c.b16 %v1302, %v1275
      %v1681 = vpack.c.b16 %v1303, %v1276
      %v1682 = vpack.c.b16 %v1304, %v1277
      %v1683 = vpack.c.b16 %v1305, %v1278
      %v1684 = vpack.c.b16 %v1306, %v1279
      %v1685 = vpack.c.b16 %v1307, %v1280
      %v1686 = vpack.c.b16 %v1308, %v1281
      %v1687 = vpack.c.b16 %v1309, %v1282
      %v1688 = vpack.c.b16 %v1310, %v1283
      %v1689 = vpack.c.b16 %v1311, %v1284
      %v1690 = vpack.c.b16 %v1312, %v1285
      %v1691 = vpack.c.b16 %v1313, %v1286
      %v1692 = vpack.c.b16 %v1314, %v1287
      %v1693 = vpack.c.b16 %v1315, %v1288
      %v1694 = vpack.c.b16 %v1316, %v1289
      %v1695 = vpack.c.b16 %v1317, %v1290
      %v1696 = vpack.c.b16 %v1318, %v1291
      %v1697 = vpack.c.b16 %v1319, %v1292
      %v1698 = vpack.c.b16 %v1320, %v1293
      %v1699 = vpack.c.b16 %v1348, %v1321
      %v1700 = vpack.c.b16 %v1349, %v1322
      %v1701 = vpack.c.b16 %v1350, %v1323
      %v1702 = vpack.c.b16 %v1351, %v1324
      %v1703 = vpack.c.b16 %v1352, %v1325
      %v1704 = vpack.c.b16 %v1353, %v1326
      %v1705 = vpack.c.b16 %v1354, %v1327
      %v1706 = vpack.c.b16 %v1355, %v1328
      %v1707 = vpack.c.b16 %v1356, %v1329
      %v1708 = vpack.c.b16 %v1357, %v1330
      %v1709 = vpack.c.b16 %v1358, %v1331
      %v1710 = vpack.c.b16 %v1359, %v1332
      %v1711 = vpack.c.b16 %v1360, %v1333
      %v1712 = vpack.c.b16 %v1361, %v1334
      %v1713 = vpack.c.b16 %v1362, %v1335
      %v1714 = vpack.c.b16 %v1363, %v1336
      %v1715 = vpack.c.b16 %v1364, %v1337
      %v1716 = vpack.c.b16 %v1365, %v1338
      %v1717 = vpack.c.b16 %v1366, %v1339
      %v1718 = vpack.c.b16 %v1367, %v1340
      %v1719 = vpack.c.b16 %v1368, %v1341
      %v1720 = vpack.c.b16 %v1369, %v1342
      %v1721 = vpack.c.b16 %v1370, %v1343
      %v1722 = vpack.c.b16 %v1371, %v1344
      %v1723 = vpack.c.b16 %v1372, %v1345
      %v1724 = vpack.c.b16 %v1373, %v1346
      %v1725 = vpack.c.b16 %v1374, %v1347
      %v1726 = vpack.c.b16 %v1402, %v1375
      %v1727 = vpack.c.b16 %v1403, %v1376
      %v1728 = vpack.c.b16 %v1404, %v1377
      %v1729 = vpack.c.b16 %v1405, %v1378
      %v1730 = vpack.c.b16 %v1406, %v1379
      %v1731 = vpack.c.b16 %v1407, %v1380
      %v1732 = vpack.c.b16 %v1408, %v1381
      %v1733 = vpack.c.b16 %v1409, %v1382
      %v1734 = vpack.c.b16 %v1410, %v1383
      %v1735 = vpack.c.b16 %v1411, %v1384
      %v1736 = vpack.c.b16 %v1412, %v1385
      %v1737 = vpack.c.b16 %v1413, %v1386
      %v1738 = vpack.c.b16 %v1414, %v1387
      %v1739 = vpack.c.b16 %v1415, %v1388
      %v1740 = vpack.c.b16 %v1416, %v1389
      %v1741 = vpack.c.b16 %v1417, %v1390
      %v1742 = vpack.c.b16 %v1418, %v1391
      %v1743 = vpack.c.b16 %v1419, %v1392
      %v1744 = vpack.c.b16 %v1420, %v1393
      %v1745 = vpack.c.b16 %v1421, %v1394
      %v1746 = vpack.c.b16 %v1422, %v1395
      %v1747 = vpack.c.b16 %v1423, %v1396
      %v1748 = vpack.c.b16 %v1424, %v1397
      %v1749 = vpack.c.b16 %v1425, %v1398
      %v1750 = vpack.c.b16 %v1426, %v1399
      %v1751 = vpack.c.b16 %v1427, %v1400
      %v1752 = vpack.c.b16 %v1428, %v1401
      %v1753 = vpack.c.b16 %v1456, %v1429
      %v1754 = vpack.c.b16 %v1457, %v1430
      %v1755 = vpack.c.b16 %v1458, %v1431
      %v1756 = vpack.c.b16 %v1459, %v1432
      %v1757 = vpack.c.b16 %v1460, %v1433
      %v1758 = vpack.c.b16 %v1461, %v1434
      %v1759 = vpack.c.b16 %v1462, %v1435
      %v1760 = vpack.c.b16 %v1463, %v1436
      %v1761 = vpack.c.b16 %v1464, %v1437
      %v1762 = vpack.c.b16 %v1465, %v1438
      %v1763 = vpack.c.b16 %v1466, %v1439
      %v1764 = vpack.c.b16 %v1467, %v1440
      %v1765 = vpack.c.b16 %v1468, %v1441
      %v1766 = vpack.c.b16 %v1469, %v1442
      %v1767 = vpack.c.b16 %v1470, %v1443
      %v1768 = vpack.c.b16 %v1471, %v1444
      %v1769 = vpack.c.b16 %v1472, %v1445
      %v1770 = vpack.c.b16 %v1473, %v1446
      %v1771 = vpack.c.b16 %v1474, %v1447
      %v1772 = vpack.c.b16 %v1475, %v1448
      %v1773 = vpack.c.b16 %v1476, %v1449
      %v1774 = vpack.c.b16 %v1477, %v1450
      %v1775 = vpack.c.b16 %v1478, %v1451
      %v1776 = vpack.c.b16 %v1479, %v1452
      %v1777 = vpack.c.b16 %v1480, %v1453
      %v1778 = vpack.c.b16 %v1481, %v1454
      %v1779 = vpack.c.b16 %v1482, %v1455
      %v1780 = vpack.c.b16 %v1510, %v1483
      %v1781 = vpack.c.b16 %v1511, %v1484
      %v1782 = vpack.c.b16 %v1512, %v1485
      %v1783 = vpack.c.b16 %v1513, %v1486
      %v1784 = vpack.c.b16 %v1514, %v1487
      %v1785 = vpack.c.b16 %v1515, %v1488
      %v1786 = vpack.c.b16 %v1516, %v1489
      %v1787 = vpack.c.b16 %v1517, %v1490
      %v1788 = vpack.c.b16 %v1518, %v1491
      %v1789 = vpack.c.b16 %v1519, %v1492
      %v1790 = vpack.c.b16 %v1520, %v1493
      %v1791 = vpack.c.b16 %v1521, %v1494
      %v1792 = vpack.c.b16 %v1522, %v1495
      %v1793 = vpack.c.b16 %v1523, %v1496
      %v1794 = vpack.c.b16 %v1524, %v1497
      %v1795 = vpack.c.b16 %v1525, %v1498
      %v1796 = vpack.c.b16 %v1526, %v1499
      %v1797 = vpack.c.b16 %v1527, %v1500
      %v1798 = vpack.c.b16 %v1528, %v1501
      %v1799 = vpack.c.b16 %v1529, %v1502
      %v1800 = vpack.c.b16 %v1530, %v1503
      %v1801 = vpack.c.b16 %v1531, %v1504
      %v1802 = vpack.c.b16 %v1532, %v1505
      %v1803 = vpack.c.b16 %v1533, %v1506
      %v1804 = vpack.c.b16 %v1534, %v1507
      %v1805 = vpack.c.b16 %v1535, %v1508
      %v1806 = vpack.c.b16 %v1536, %v1509
      %v1807 = vpack.c.b16 %v1564, %v1537
      %v1808 = vpack.c.b16 %v1565, %v1538
      %v1809 = vpack.c.b16 %v1566, %v1539
      %v1810 = vpack.c.b16 %v1567, %v1540
      %v1811 = vpack.c.b16 %v1568, %v1541
      %v1812 = vpack.c.b16 %v1569, %v1542
      %v1813 = vpack.c.b16 %v1570, %v1543
      %v1814 = vpack.c.b16 %v1571, %v1544
      %v1815 = vpack.c.b16 %v1572, %v1545
      %v1816 = vpack.c.b16 %v1573, %v1546
      %v1817 = vpack.c.b16 %v1574, %v1547
      %v1818 = vpack.c.b16 %v1575, %v1548
      %v1819 = vpack.c.b16 %v1576, %v1549
      %v1820 = vpack.c.b16 %v1577, %v1550
      %v1821 = vpack.c.b16 %v1578, %v1551
      %v1822 = vpack.c.b16 %v1579, %v1552
      %v1823 = vpack.c.b16 %v1580, %v1553
      %v1824 = vpack.c.b16 %v1581, %v1554
      %v1825 = vpack.c.b16 %v1582, %v1555
      %v1826 = vpack.c.b16 %v1583, %v1556
      %v1827 = vpack.c.b16 %v1584, %v1557
      %v1828 = vpack.c.b16 %v1585, %v1558
      %v1829 = vpack.c.b16 %v1586, %v1559
      %v1830 = vpack.c.b16 %v1587, %v1560
      %v1831 = vpack.c.b16 %v1588, %v1561
      %v1832 = vpack.c.b16 %v1589, %v1562
      %v1833 = vpack.c.b16 %v1590, %v1563
      %v1834 = vpack.c.b16 %v1618, %v1591
      %v1835 = vpack.c.b16 %v1619, %v1592
      %v1836 = vpack.c.b16 %v1620, %v1593
      %v1837 = vpack.c.b16 %v1621, %v1594
      %v1838 = vpack.c.b16 %v1622, %v1595
      %v1839 = vpack.c.b16 %v1623, %v1596
      %v1840 = vpack.c.b16 %v1624, %v1597
      %v1841 = vpack.c.b16 %v1625, %v1598
      %v1842 = vpack.c.b16 %v1626, %v1599
      %v1843 = vpack.c.b16 %v1627, %v1600
      %v1844 = vpack.c.b16 %v1628, %v1601
      %v1845 = vpack.c.b16 %v1629, %v1602
      %v1846 = vpack.c.b16 %v1630, %v1603
      %v1847 = vpack.c.b16 %v1631, %v1604
      %v1848 = vpack.c.b16 %v1632, %v1605
      %v1849 = vpack.c.b16 %v1633, %v1606
      %v1850 = vpack.c.b16 %v1634, %v1607
      %v1851 = vpack.c.b16 %v1635, %v1608
      %v1852 = vpack.c.b16 %v1636, %v1609
      %v1853 = vpack.c.b16 %v1637, %v1610
      %v1854 = vpack.c.b16 %v1638, %v1611
      %v1855 = vpack.c.b16 %v1639, %v1612
      %v1856 = vpack.c.b16 %v1640, %v1613
      %v1857 = vpack.c.b16 %v1641, %v1614
      %v1858 = vpack.c.b16 %v1642, %v1615
      %v1859 = vpack.c.b16 %v1643, %v1616
      %v1860 = vpack.c.b16 %v1644, %v1617
      %v2509 = vunpack.c.l.b16 %v541
      %v2510 = vunpack.c.l.b16 %v542
      %v2511 = vunpack.c.l.b16 %v543
      %v2512 = vunpack.c.l.b16 %v544
      %v2513 = vunpack.c.l.b16 %v545
      %v2514 = vunpack.c.l.b16 %v546
      %v2515 = vunpack.c.l.b16 %v547
      %v2516 = vunpack.c.l.b16 %v548
      %v2517 = vunpack.c.l.b16 %v549
      %v2518 = vunpack.c.l.b16 %v550
      %v2519 = vunpack.c.l.b16 %v551
      %v2520 = vunpack.c.l.b16 %v552
      %v2521 = vunpack.c.l.b16 %v553
      %v2522 = vunpack.c.l.b16 %v554
      %v2523 = vunpack.c.l.b16 %v555
      %v2524 = vunpack.c.l.b16 %v556
      %v2525 = vunpack.c.l.b16 %v557
      %v2526 = vunpack.c.l.b16 %v558
      %v2527 = vunpack.c.l.b16 %v559
      %v2528 = vunpack.c.l.b16 %v560
      %v2529 = vunpack.c.l.b16 %v561
      %v2530 = vunpack.c.l.b16 %v562
      %v2531 = vunpack.c.l.b16 %v563
      %v2532 = vunpack.c.l.b16 %v564
      %v2533 = vunpack.c.l.b16 %v565
      %v2534 = vunpack.c.l.b16 %v566
      %v2535 = vunpack.c.l.b16 %v567
      %v2536 = vunpack.c.l.b16 %v568
      %v2537 = vunpack.c.l.b16 %v569
      %v2538 = vunpack.c.l.b16 %v570
      %v2539 = vunpack.c.l.b16 %v571
      %v2540 = vunpack.c.l.b16 %v572
      %v2541 = vunpack.c.l.b16 %v573
      %v2542 = vunpack.c.l.b16 %v574
      %v2543 = vunpack.c.l.b16 %v575
      %v2544 = vunpack.c.l.b16 %v576
      %v2545 = vunpack.c.l.b16 %v577
      %v2546 = vunpack.c.l.b16 %v578
      %v2547 = vunpack.c.l.b16 %v579
      %v2548 = vunpack.c.l.b16 %v580
      %v2549 = vunpack.c.l.b16 %v581
      %v2550 = vunpack.c.l.b16 %v582
      %v2551 = vunpack.c.l.b16 %v583
      %v2552 = vunpack.c.l.b16 %v584
      %v2553 = vunpack.c.l.b16 %v585
      %v2554 = vunpack.c.l.b16 %v586
      %v2555 = vunpack.c.l.b16 %v587
      %v2556 = vunpack.c.l.b16 %v588
      %v2557 = vunpack.c.l.b16 %v589
      %v2558 = vunpack.c.l.b16 %v590
      %v2559 = vunpack.c.l.b16 %v591
      %v2560 = vunpack.c.l.b16 %v592
      %v2561 = vunpack.c.l.b16 %v593
      %v2562 = vunpack.c.l.b16 %v594
      %v2563 = vunpack.c.l.b16 %v595
      %v2564 = vunpack.c.l.b16 %v596
      %v2565 = vunpack.c.l.b16 %v597
      %v2566 = vunpack.c.l.b16 %v598
      %v2567 = vunpack.c.l.b16 %v599
      %v2568 = vunpack.c.l.b16 %v600
      %v2569 = vunpack.c.l.b16 %v601
      %v2570 = vunpack.c.l.b16 %v602
      %v2571 = vunpack.c.l.b16 %v603
      %v2572 = vunpack.c.l.b16 %v604
      %v2573 = vunpack.c.l.b16 %v605
      %v2574 = vunpack.c.l.b16 %v606
      %v2575 = vunpack.c.l.b16 %v607
      %v2576 = vunpack.c.l.b16 %v608
      %v2577 = vunpack.c.l.b16 %v609
      %v2578 = vunpack.c.l.b16 %v610
      %v2579 = vunpack.c.l.b16 %v611
      %v2580 = vunpack.c.l.b16 %v612
      %v2581 = vunpack.c.l.b16 %v613
      %v2582 = vunpack.c.l.b16 %v614
      %v2583 = vunpack.c.l.b16 %v615
      %v2584 = vunpack.c.l.b16 %v616
      %v2585 = vunpack.c.l.b16 %v617
      %v2586 = vunpack.c.l.b16 %v618
      %v2587 = vunpack.c.l.b16 %v619
      %v2588 = vunpack.c.l.b16 %v620
      %v2589 = vunpack.c.l.b16 %v621
      %v2590 = vunpack.c.l.b16 %v622
      %v2591 = vunpack.c.l.b16 %v623
      %v2592 = vunpack.c.l.b16 %v624
      %v2593 = vunpack.c.l.b16 %v625
      %v2594 = vunpack.c.l.b16 %v626
      %v2595 = vunpack.c.l.b16 %v627
      %v2596 = vunpack.c.l.b16 %v628
      %v2597 = vunpack.c.l.b16 %v629
      %v2598 = vunpack.c.l.b16 %v630
      %v2599 = vunpack.c.l.b16 %v631
      %v2600 = vunpack.c.l.b16 %v632
      %v2601 = vunpack.c.l.b16 %v633
      %v2602 = vunpack.c.l.b16 %v634
      %v2603 = vunpack.c.l.b16 %v635
      %v2604 = vunpack.c.l.b16 %v636
      %v2605 = vunpack.c.l.b16 %v637
      %v2606 = vunpack.c.l.b16 %v638
      %v2607 = vunpack.c.l.b16 %v639
      %v2608 = vunpack.c.l.b16 %v640
      %v2609 = vunpack.c.l.b16 %v641
      %v2610 = vunpack.c.l.b16 %v642
      %v2611 = vunpack.c.l.b16 %v643
      %v2612 = vunpack.c.l.b16 %v644
      %v2613 = vunpack.c.l.b16 %v645
      %v2614 = vunpack.c.l.b16 %v646
      %v2615 = vunpack.c.l.b16 %v647
      %v2616 = vunpack.c.l.b16 %v648
      %v2617 = vunpack.c.l.b16 %v649
      %v2618 = vunpack.c.l.b16 %v650
      %v2619 = vunpack.c.l.b16 %v651
      %v2620 = vunpack.c.l.b16 %v652
      %v2621 = vunpack.c.l.b16 %v653
      %v2622 = vunpack.c.l.b16 %v654
      %v2623 = vunpack.c.l.b16 %v655
      %v2624 = vunpack.c.l.b16 %v656
      %v2625 = vunpack.c.l.b16 %v657
      %v2626 = vunpack.c.l.b16 %v658
      %v2627 = vunpack.c.l.b16 %v659
      %v2628 = vunpack.c.l.b16 %v660
      %v2629 = vunpack.c.l.b16 %v661
      %v2630 = vunpack.c.l.b16 %v662
      %v2631 = vunpack.c.l.b16 %v663
      %v2632 = vunpack.c.l.b16 %v664
      %v2633 = vunpack.c.l.b16 %v665
      %v2634 = vunpack.c.l.b16 %v666
      %v2635 = vunpack.c.l.b16 %v667
      %v2636 = vunpack.c.l.b16 %v668
      %v2637 = vunpack.c.l.b16 %v669
      %v2638 = vunpack.c.l.b16 %v670
      %v2639 = vunpack.c.l.b16 %v671
      %v2640 = vunpack.c.l.b16 %v672
      %v2641 = vunpack.c.l.b16 %v673
      %v2642 = vunpack.c.l.b16 %v674
      %v2643 = vunpack.c.l.b16 %v675
      %v2644 = vunpack.c.l.b16 %v676
      %v2645 = vunpack.c.l.b16 %v677
      %v2646 = vunpack.c.l.b16 %v678
      %v2647 = vunpack.c.l.b16 %v679
      %v2648 = vunpack.c.l.b16 %v680
      %v2649 = vunpack.c.l.b16 %v681
      %v2650 = vunpack.c.l.b16 %v682
      %v2651 = vunpack.c.l.b16 %v683
      %v2652 = vunpack.c.l.b16 %v684
      %v2653 = vunpack.c.l.b16 %v685
      %v2654 = vunpack.c.l.b16 %v686
      %v2655 = vunpack.c.l.b16 %v687
      %v2656 = vunpack.c.l.b16 %v688
      %v2657 = vunpack.c.l.b16 %v689
      %v2658 = vunpack.c.l.b16 %v690
      %v2659 = vunpack.c.l.b16 %v691
      %v2660 = vunpack.c.l.b16 %v692
      %v2661 = vunpack.c.l.b16 %v693
      %v2662 = vunpack.c.l.b16 %v694
      %v2663 = vunpack.c.l.b16 %v695
      %v2664 = vunpack.c.l.b16 %v696
      %v2665 = vunpack.c.l.b16 %v697
      %v2666 = vunpack.c.l.b16 %v698
      %v2667 = vunpack.c.l.b16 %v699
      %v2668 = vunpack.c.l.b16 %v700
      %v2669 = vunpack.c.l.b16 %v701
      %v2670 = vunpack.c.l.b16 %v702
      %v2671 = vunpack.c.l.b16 %v703
      %v2672 = vunpack.c.l.b16 %v704
      %v2673 = vunpack.c.l.b16 %v705
      %v2674 = vunpack.c.l.b16 %v706
      %v2675 = vunpack.c.l.b16 %v707
      %v2676 = vunpack.c.l.b16 %v708
      %v2677 = vunpack.c.l.b16 %v709
      %v2678 = vunpack.c.l.b16 %v710
      %v2679 = vunpack.c.l.b16 %v711
      %v2680 = vunpack.c.l.b16 %v712
      %v2681 = vunpack.c.l.b16 %v713
      %v2682 = vunpack.c.l.b16 %v714
      %v2683 = vunpack.c.l.b16 %v715
      %v2684 = vunpack.c.l.b16 %v716
      %v2685 = vunpack.c.l.b16 %v717
      %v2686 = vunpack.c.l.b16 %v718
      %v2687 = vunpack.c.l.b16 %v719
      %v2688 = vunpack.c.l.b16 %v720
      %v2689 = vunpack.c.l.b16 %v721
      %v2690 = vunpack.c.l.b16 %v722
      %v2691 = vunpack.c.l.b16 %v723
      %v2692 = vunpack.c.l.b16 %v724
      %v2693 = vunpack.c.l.b16 %v725
      %v2694 = vunpack.c.l.b16 %v726
      %v2695 = vunpack.c.l.b16 %v727
      %v2696 = vunpack.c.l.b16 %v728
      %v2697 = vunpack.c.l.b16 %v729
      %v2698 = vunpack.c.l.b16 %v730
      %v2699 = vunpack.c.l.b16 %v731
      %v2700 = vunpack.c.l.b16 %v732
      %v2701 = vunpack.c.l.b16 %v733
      %v2702 = vunpack.c.l.b16 %v734
      %v2703 = vunpack.c.l.b16 %v735
      %v2704 = vunpack.c.l.b16 %v736
      %v2705 = vunpack.c.l.b16 %v737
      %v2706 = vunpack.c.l.b16 %v738
      %v2707 = vunpack.c.l.b16 %v739
      %v2708 = vunpack.c.l.b16 %v740
      %v2709 = vunpack.c.l.b16 %v741
      %v2710 = vunpack.c.l.b16 %v742
      %v2711 = vunpack.c.l.b16 %v743
      %v2712 = vunpack.c.l.b16 %v744
      %v2713 = vunpack.c.l.b16 %v745
      %v2714 = vunpack.c.l.b16 %v746
      %v2715 = vunpack.c.l.b16 %v747
      %v2716 = vunpack.c.l.b16 %v748
      %v2717 = vunpack.c.l.b16 %v749
      %v2718 = vunpack.c.l.b16 %v750
      %v2719 = vunpack.c.l.b16 %v751
      %v2720 = vunpack.c.l.b16 %v752
      %v2721 = vunpack.c.l.b16 %v753
      %v2722 = vunpack.c.l.b16 %v754
      %v2723 = vunpack.c.l.b16 %v755
      %v2724 = vunpack.c.l.b16 %v756
      %v2725 = vunpack.c.l.b16 %v757
      %v2726 = vunpack.c.l.b16 %v758
      %v2727 = vunpack.c.l.b16 %v759
      %v2728 = vunpack.c.l.b16 %v760
      %v2729 = vunpack.c.l.b16 %v761
      %v2730 = vunpack.c.l.b16 %v762
      %v2731 = vunpack.c.l.b16 %v763
      %v2732 = vunpack.c.l.b16 %v764
      %v2733 = vunpack.c.l.b16 %v765
      %v2734 = vunpack.c.l.b16 %v766
      %v2735 = vunpack.c.l.b16 %v767
      %v2736 = vunpack.c.l.b16 %v768
      %v2737 = vunpack.c.l.b16 %v769
      %v2738 = vunpack.c.l.b16 %v770
      %v2739 = vunpack.c.l.b16 %v771
      %v2740 = vunpack.c.l.b16 %v772
      %v2741 = vunpack.c.l.b16 %v773
      %v2742 = vunpack.c.l.b16 %v774
      %v2743 = vunpack.c.l.b16 %v775
      %v2744 = vunpack.c.l.b16 %v776
      %v2745 = vunpack.c.l.b16 %v777
      %v2746 = vunpack.c.l.b16 %v778
      %v2747 = vunpack.c.l.b16 %v779
      %v2748 = vunpack.c.l.b16 %v780
      %v2749 = vunpack.c.l.b16 %v781
      %v2750 = vunpack.c.l.b16 %v782
      %v2751 = vunpack.c.l.b16 %v783
      %v2752 = vunpack.c.l.b16 %v784
      %v2753 = vunpack.c.l.b16 %v785
      %v2754 = vunpack.c.l.b16 %v786
      %v2755 = vunpack.c.l.b16 %v787
      %v2756 = vunpack.c.l.b16 %v788
      %v2757 = vunpack.c.l.b16 %v789
      %v2758 = vunpack.c.l.b16 %v790
      %v2759 = vunpack.c.l.b16 %v791
      %v2760 = vunpack.c.l.b16 %v792
      %v2761 = vunpack.c.l.b16 %v793
      %v2762 = vunpack.c.l.b16 %v794
      %v2763 = vunpack.c.l.b16 %v795
      %v2764 = vunpack.c.l.b16 %v796
      %v2765 = vunpack.c.l.b16 %v797
      %v2766 = vunpack.c.l.b16 %v798
      %v2767 = vunpack.c.l.b16 %v799
      %v2768 = vunpack.c.l.b16 %v800
      %v2769 = vunpack.c.l.b16 %v801
      %v2770 = vunpack.c.l.b16 %v802
      %v2771 = vunpack.c.l.b16 %v803
      %v2772 = vunpack.c.l.b16 %v804
      %v2773 = vunpack.c.l.b16 %v805
      %v2774 = vunpack.c.l.b16 %v806
      %v2775 = vunpack.c.l.b16 %v807
      %v2776 = vunpack.c.l.b16 %v808
      %v2777 = vunpack.c.l.b16 %v809
      %v2778 = vunpack.c.l.b16 %v810
      %v2779 = vunpack.c.l.b16 %v811
      %v2780 = vunpack.c.l.b16 %v812
      %v2781 = vunpack.c.l.b16 %v813
      %v2782 = vunpack.c.l.b16 %v814
      %v2783 = vunpack.c.l.b16 %v815
      %v2784 = vunpack.c.l.b16 %v816
      %v2785 = vunpack.c.l.b16 %v817
      %v2786 = vunpack.c.l.b16 %v818
      %v2787 = vunpack.c.l.b16 %v819
      %v2788 = vunpack.c.l.b16 %v820
      %v2789 = vunpack.c.l.b16 %v821
      %v2790 = vunpack.c.l.b16 %v822
      %v2791 = vunpack.c.l.b16 %v823
      %v2792 = vunpack.c.l.b16 %v824
      %v2793 = vunpack.c.l.b16 %v825
      %v2794 = vunpack.c.l.b16 %v826
      %v2795 = vunpack.c.l.b16 %v827
      %v2796 = vunpack.c.l.b16 %v828
      %v2797 = vunpack.c.l.b16 %v829
      %v2798 = vunpack.c.l.b16 %v830
      %v2799 = vunpack.c.l.b16 %v831
      %v2800 = vunpack.c.l.b16 %v832
      %v2801 = vunpack.c.l.b16 %v833
      %v2802 = vunpack.c.l.b16 %v834
      %v2803 = vunpack.c.l.b16 %v835
      %v2804 = vunpack.c.l.b16 %v836
      %v2805 = vunpack.c.l.b16 %v837
      %v2806 = vunpack.c.l.b16 %v838
      %v2807 = vunpack.c.l.b16 %v839
      %v2808 = vunpack.c.l.b16 %v840
      %v2809 = vunpack.c.l.b16 %v841
      %v2810 = vunpack.c.l.b16 %v842
      %v2811 = vunpack.c.l.b16 %v843
      %v2812 = vunpack.c.l.b16 %v844
      %v2813 = vunpack.c.l.b16 %v845
      %v2814 = vunpack.c.l.b16 %v846
      %v2815 = vunpack.c.l.b16 %v847
      %v2816 = vunpack.c.l.b16 %v848
      %v2817 = vunpack.c.l.b16 %v849
      %v2818 = vunpack.c.l.b16 %v850
      %v2819 = vunpack.c.l.b16 %v851
      %v2820 = vunpack.c.l.b16 %v852
      %v2821 = vunpack.c.l.b16 %v853
      %v2822 = vunpack.c.l.b16 %v854
      %v2823 = vunpack.c.l.b16 %v855
      %v2824 = vunpack.c.l.b16 %v856
      %v2825 = vunpack.c.l.b16 %v857
      %v2826 = vunpack.c.l.b16 %v858
      %v2827 = vunpack.c.l.b16 %v859
      %v2828 = vunpack.c.l.b16 %v860
      %v2829 = vunpack.c.l.b16 %v861
      %v2830 = vunpack.c.l.b16 %v862
      %v2831 = vunpack.c.l.b16 %v863
      %v2832 = vunpack.c.l.b16 %v864
      %v2833 = vunpack.c.l.b16 %v865
      %v2834 = vunpack.c.l.b16 %v866
      %v2835 = vunpack.c.l.b16 %v867
      %v2836 = vunpack.c.l.b16 %v868
      %v2837 = vunpack.c.l.b16 %v869
      %v2838 = vunpack.c.l.b16 %v870
      %v2839 = vunpack.c.l.b16 %v871
      %v2840 = vunpack.c.l.b16 %v872
      %v2841 = vunpack.c.l.b16 %v873
      %v2842 = vunpack.c.l.b16 %v874
      %v2843 = vunpack.c.l.b16 %v875
      %v2844 = vunpack.c.l.b16 %v876
      %v2845 = vunpack.c.l.b16 %v877
      %v2846 = vunpack.c.l.b16 %v878
      %v2847 = vunpack.c.l.b16 %v879
      %v2848 = vunpack.c.l.b16 %v880
      %v2849 = vunpack.c.l.b16 %v881
      %v2850 = vunpack.c.l.b16 %v882
      %v2851 = vunpack.c.l.b16 %v883
      %v2852 = vunpack.c.l.b16 %v884
      %v2853 = vunpack.c.l.b16 %v885
      %v2854 = vunpack.c.l.b16 %v886
      %v2855 = vunpack.c.l.b16 %v887
      %v2856 = vunpack.c.l.b16 %v888
      %v2857 = vunpack.c.l.b16 %v889
      %v2858 = vunpack.c.l.b16 %v890
      %v2859 = vunpack.c.l.b16 %v891
      %v2860 = vunpack.c.l.b16 %v892
      %v2861 = vunpack.c.l.b16 %v893
      %v2862 = vunpack.c.l.b16 %v894
      %v2863 = vunpack.c.l.b16 %v895
      %v2864 = vunpack.c.l.b16 %v896
      %v2865 = vunpack.c.l.b16 %v897
      %v2866 = vunpack.c.l.b16 %v898
      %v2867 = vunpack.c.l.b16 %v899
      %v2868 = vunpack.c.l.b16 %v900
      %v2869 = vunpack.c.l.b16 %v901
      %v2870 = vunpack.c.l.b16 %v902
      %v2871 = vunpack.c.l.b16 %v903
      %v2872 = vunpack.c.l.b16 %v904
      %v2873 = vunpack.c.l.b16 %v905
      %v2874 = vunpack.c.l.b16 %v906
      %v2875 = vunpack.c.l.b16 %v907
      %v2876 = vunpack.c.l.b16 %v908
      %v2877 = vunpack.c.l.b16 %v909
      %v2878 = vunpack.c.l.b16 %v910
      %v2879 = vunpack.c.l.b16 %v911
      %v2880 = vunpack.c.l.b16 %v912
      %v2881 = vunpack.c.l.b16 %v913
      %v2882 = vunpack.c.l.b16 %v914
      %v2883 = vunpack.c.l.b16 %v915
      %v2884 = vunpack.c.l.b16 %v916
      %v2885 = vunpack.c.l.b16 %v917
      %v2886 = vunpack.c.l.b16 %v918
      %v2887 = vunpack.c.l.b16 %v919
      %v2888 = vunpack.c.l.b16 %v920
      %v2889 = vunpack.c.l.b16 %v921
      %v2890 = vunpack.c.l.b16 %v922
      %v2891 = vunpack.c.l.b16 %v923
      %v2892 = vunpack.c.l.b16 %v924
      %v2893 = vunpack.c.l.b16 %v925
      %v2894 = vunpack.c.l.b16 %v926
      %v2895 = vunpack.c.l.b16 %v927
      %v2896 = vunpack.c.l.b16 %v928
      %v2897 = vunpack.c.l.b16 %v929
      %v2898 = vunpack.c.l.b16 %v930
      %v2899 = vunpack.c.l.b16 %v931
      %v2900 = vunpack.c.l.b16 %v932
      %v2901 = vunpack.c.l.b16 %v933
      %v2902 = vunpack.c.l.b16 %v934
      %v2903 = vunpack.c.l.b16 %v935
      %v2904 = vunpack.c.l.b16 %v936
      %v2905 = vunpack.c.l.b16 %v937
      %v2906 = vunpack.c.l.b16 %v938
      %v2907 = vunpack.c.l.b16 %v939
      %v2908 = vunpack.c.l.b16 %v940
      %v2909 = vunpack.c.l.b16 %v941
      %v2910 = vunpack.c.l.b16 %v942
      %v2911 = vunpack.c.l.b16 %v943
      %v2912 = vunpack.c.l.b16 %v944
      %v2913 = vunpack.c.l.b16 %v945
      %v2914 = vunpack.c.l.b16 %v946
      %v2915 = vunpack.c.l.b16 %v947
      %v2916 = vunpack.c.l.b16 %v948
      %v2917 = vunpack.c.l.b16 %v949
      %v2918 = vunpack.c.l.b16 %v950
      %v2919 = vunpack.c.l.b16 %v951
      %v2920 = vunpack.c.l.b16 %v952
      %v2921 = vunpack.c.l.b16 %v953
      %v2922 = vunpack.c.l.b16 %v954
      %v2923 = vunpack.c.l.b16 %v955
      %v2924 = vunpack.c.l.b16 %v956
      %v2925 = vunpack.c.l.b16 %v957
      %v2926 = vunpack.c.l.b16 %v958
      %v2927 = vunpack.c.l.b16 %v959
      %v2928 = vunpack.c.l.b16 %v960
      %v2929 = vunpack.c.l.b16 %v961
      %v2930 = vunpack.c.l.b16 %v962
      %v2931 = vunpack.c.l.b16 %v963
      %v2932 = vunpack.c.l.b16 %v964
      %v2933 = vunpack.c.l.b16 %v965
      %v2934 = vunpack.c.l.b16 %v966
      %v2935 = vunpack.c.l.b16 %v967
      %v2936 = vunpack.c.l.b16 %v968
      %v2937 = vunpack.c.l.b16 %v969
      %v2938 = vunpack.c.l.b16 %v970
      %v2939 = vunpack.c.l.b16 %v971
      %v2940 = vunpack.c.l.b16 %v972
      %v2941 = vpack.c.b16 %v2510, %v2509
      %v2942 = vpack.c.b16 %v2512, %v2511
      %v2943 = vpack.c.b16 %v2514, %v2513
      %v2944 = vpack.c.b16 %v2516, %v2515
      %v2945 = vpack.c.b16 %v2518, %v2517
      %v2946 = vpack.c.b16 %v2520, %v2519
      %v2947 = vpack.c.b16 %v2522, %v2521
      %v2948 = vpack.c.b16 %v2524, %v2523
      %v2949 = vpack.c.b16 %v2526, %v2525
      %v2950 = vpack.c.b16 %v2528, %v2527
      %v2951 = vpack.c.b16 %v2530, %v2529
      %v2952 = vpack.c.b16 %v2532, %v2531
      %v2953 = vpack.c.b16 %v2534, %v2533
      %v2954 = vpack.c.b16 %v2536, %v2535
      %v2955 = vpack.c.b16 %v2538, %v2537
      %v2956 = vpack.c.b16 %v2540, %v2539
      %v2957 = vpack.c.b16 %v2542, %v2541
      %v2958 = vpack.c.b16 %v2544, %v2543
      %v2959 = vpack.c.b16 %v2546, %v2545
      %v2960 = vpack.c.b16 %v2548, %v2547
      %v2961 = vpack.c.b16 %v2550, %v2549
      %v2962 = vpack.c.b16 %v2552, %v2551
      %v2963 = vpack.c.b16 %v2554, %v2553
      %v2964 = vpack.c.b16 %v2556, %v2555
      %v2965 = vpack.c.b16 %v2558, %v2557
      %v2966 = vpack.c.b16 %v2560, %v2559
      %v2967 = vpack.c.b16 %v2562, %v2561
      %v2968 = vpack.c.b16 %v2564, %v2563
      %v2969 = vpack.c.b16 %v2566, %v2565
      %v2970 = vpack.c.b16 %v2568, %v2567
      %v2971 = vpack.c.b16 %v2570, %v2569
      %v2972 = vpack.c.b16 %v2572, %v2571
      %v2973 = vpack.c.b16 %v2574, %v2573
      %v2974 = vpack.c.b16 %v2576, %v2575
      %v2975 = vpack.c.b16 %v2578, %v2577
      %v2976 = vpack.c.b16 %v2580, %v2579
      %v2977 = vpack.c.b16 %v2582, %v2581
      %v2978 = vpack.c.b16 %v2584, %v2583
      %v2979 = vpack.c.b16 %v2586, %v2585
      %v2980 = vpack.c.b16 %v2588, %v2587
      %v2981 = vpack.c.b16 %v2590, %v2589
      %v2982 = vpack.c.b16 %v2592, %v2591
      %v2983 = vpack.c.b16 %v2594, %v2593
      %v2984 = vpack.c.b16 %v2596, %v2595
      %v2985 = vpack.c.b16 %v2598, %v2597
      %v2986 = vpack.c.b16 %v2600, %v2599
      %v2987 = vpack.c.b16 %v2602, %v2601
      %v2988 = vpack.c.b16 %v2604, %v2603
      %v2989 = vpack.c.b16 %v2606, %v2605
      %v2990 = vpack.c.b16 %v2608, %v2607
      %v2991 = vpack.c.b16 %v2610, %v2609
      %v2992 = vpack.c.b16 %v2612, %v2611
      %v2993 = vpack.c.b16 %v2614, %v2613
      %v2994 = vpack.c.b16 %v2616, %v2615
      %v2995 = vpack.c.b16 %v2618, %v2617
      %v2996 = vpack.c.b16 %v2620, %v2619
      %v2997 = vpack.c.b16 %v2622, %v2621
      %v2998 = vpack.c.b16 %v2624, %v2623
      %v2999 = vpack.c.b16 %v2626, %v2625
      %v3000 = vpack.c.b16 %v2628, %v2627
      %v3001 = vpack.c.b16 %v2630, %v2629
      %v3002 = vpack.c.b16 %v2632, %v2631
      %v3003 = vpack.c.b16 %v2634, %v2633
      %v3004 = vpack.c.b16 %v2636, %v2635
      %v3005 = vpack.c.b16 %v2638, %v2637
      %v3006 = vpack.c.b16 %v2640, %v2639
      %v3007 = vpack.c.b16 %v2642, %v2641
      %v3008 = vpack.c.b16 %v2644, %v2643
      %v3009 = vpack.c.b16 %v2646, %v2645
      %v3010 = vpack.c.b16 %v2648, %v2647
      %v3011 = vpack.c.b16 %v2650, %v2649
      %v3012 = vpack.c.b16 %v2652, %v2651
      %v3013 = vpack.c.b16 %v2654, %v2653
      %v3014 = vpack.c.b16 %v2656, %v2655
      %v3015 = vpack.c.b16 %v2658, %v2657
      %v3016 = vpack.c.b16 %v2660, %v2659
      %v3017 = vpack.c.b16 %v2662, %v2661
      %v3018 = vpack.c.b16 %v2664, %v2663
      %v3019 = vpack.c.b16 %v2666, %v2665
      %v3020 = vpack.c.b16 %v2668, %v2667
      %v3021 = vpack.c.b16 %v2670, %v2669
      %v3022 = vpack.c.b16 %v2672, %v2671
      %v3023 = vpack.c.b16 %v2674, %v2673
      %v3024 = vpack.c.b16 %v2676, %v2675
      %v3025 = vpack.c.b16 %v2678, %v2677
      %v3026 = vpack.c.b16 %v2680, %v2679
      %v3027 = vpack.c.b16 %v2682, %v2681
      %v3028 = vpack.c.b16 %v2684, %v2683
      %v3029 = vpack.c.b16 %v2686, %v2685
      %v3030 = vpack.c.b16 %v2688, %v2687
      %v3031 = vpack.c.b16 %v2690, %v2689
      %v3032 = vpack.c.b16 %v2692, %v2691
      %v3033 = vpack.c.b16 %v2694, %v2693
      %v3034 = vpack.c.b16 %v2696, %v2695
      %v3035 = vpack.c.b16 %v2698, %v2697
      %v3036 = vpack.c.b16 %v2700, %v2699
      %v3037 = vpack.c.b16 %v2702, %v2701
      %v3038 = vpack.c.b16 %v2704, %v2703
      %v3039 = vpack.c.b16 %v2706, %v2705
      %v3040 = vpack.c.b16 %v2708, %v2707
      %v3041 = vpack.c.b16 %v2710, %v2709
      %v3042 = vpack.c.b16 %v2712, %v2711
      %v3043 = vpack.c.b16 %v2714, %v2713
      %v3044 = vpack.c.b16 %v2716, %v2715
      %v3045 = vpack.c.b16 %v2718, %v2717
      %v3046 = vpack.c.b16 %v2720, %v2719
      %v3047 = vpack.c.b16 %v2722, %v2721
      %v3048 = vpack.c.b16 %v2724, %v2723
      %v3049 = vpack.c.b16 %v2726, %v2725
      %v3050 = vpack.c.b16 %v2728, %v2727
      %v3051 = vpack.c.b16 %v2730, %v2729
      %v3052 = vpack.c.b16 %v2732, %v2731
      %v3053 = vpack.c.b16 %v2734, %v2733
      %v3054 = vpack.c.b16 %v2736, %v2735
      %v3055 = vpack.c.b16 %v2738, %v2737
      %v3056 = vpack.c.b16 %v2740, %v2739
      %v3057 = vpack.c.b16 %v2742, %v2741
      %v3058 = vpack.c.b16 %v2744, %v2743
      %v3059 = vpack.c.b16 %v2746, %v2745
      %v3060 = vpack.c.b16 %v2748, %v2747
      %v3061 = vpack.c.b16 %v2750, %v2749
      %v3062 = vpack.c.b16 %v2752, %v2751
      %v3063 = vpack.c.b16 %v2754, %v2753
      %v3064 = vpack.c.b16 %v2756, %v2755
      %v3065 = vpack.c.b16 %v2758, %v2757
      %v3066 = vpack.c.b16 %v2760, %v2759
      %v3067 = vpack.c.b16 %v2762, %v2761
      %v3068 = vpack.c.b16 %v2764, %v2763
      %v3069 = vpack.c.b16 %v2766, %v2765
      %v3070 = vpack.c.b16 %v2768, %v2767
      %v3071 = vpack.c.b16 %v2770, %v2769
      %v3072 = vpack.c.b16 %v2772, %v2771
      %v3073 = vpack.c.b16 %v2774, %v2773
      %v3074 = vpack.c.b16 %v2776, %v2775
      %v3075 = vpack.c.b16 %v2778, %v2777
      %v3076 = vpack.c.b16 %v2780, %v2779
      %v3077 = vpack.c.b16 %v2782, %v2781
      %v3078 = vpack.c.b16 %v2784, %v2783
      %v3079 = vpack.c.b16 %v2786, %v2785
      %v3080 = vpack.c.b16 %v2788, %v2787
      %v3081 = vpack.c.b16 %v2790, %v2789
      %v3082 = vpack.c.b16 %v2792, %v2791
      %v3083 = vpack.c.b16 %v2794, %v2793
      %v3084 = vpack.c.b16 %v2796, %v2795
      %v3085 = vpack.c.b16 %v2798, %v2797
      %v3086 = vpack.c.b16 %v2800, %v2799
      %v3087 = vpack.c.b16 %v2802, %v2801
      %v3088 = vpack.c.b16 %v2804, %v2803
      %v3089 = vpack.c.b16 %v2806, %v2805
      %v3090 = vpack.c.b16 %v2808, %v2807
      %v3091 = vpack.c.b16 %v2810, %v2809
      %v3092 = vpack.c.b16 %v2812, %v2811
      %v3093 = vpack.c.b16 %v2814, %v2813
      %v3094 = vpack.c.b16 %v2816, %v2815
      %v3095 = vpack.c.b16 %v2818, %v2817
      %v3096 = vpack.c.b16 %v2820, %v2819
      %v3097 = vpack.c.b16 %v2822, %v2821
      %v3098 = vpack.c.b16 %v2824, %v2823
      %v3099 = vpack.c.b16 %v2826, %v2825
      %v3100 = vpack.c.b16 %v2828, %v2827
      %v3101 = vpack.c.b16 %v2830, %v2829
      %v3102 = vpack.c.b16 %v2832, %v2831
      %v3103 = vpack.c.b16 %v2834, %v2833
      %v3104 = vpack.c.b16 %v2836, %v2835
      %v3105 = vpack.c.b16 %v2838, %v2837
      %v3106 = vpack.c.b16 %v2840, %v2839
      %v3107 = vpack.c.b16 %v2842, %v2841
      %v3108 = vpack.c.b16 %v2844, %v2843
      %v3109 = vpack.c.b16 %v2846, %v2845
      %v3110 = vpack.c.b16 %v2848, %v2847
      %v3111 = vpack.c.b16 %v2850, %v2849
      %v3112 = vpack.c.b16 %v2852, %v2851
      %v3113 = vpack.c.b16 %v2854, %v2853
      %v3114 = vpack.c.b16 %v2856, %v2855
      %v3115 = vpack.c.b16 %v2858, %v2857
      %v3116 = vpack.c.b16 %v2860, %v2859
      %v3117 = vpack.c.b16 %v2862, %v2861
      %v3118 = vpack.c.b16 %v2864, %v2863
      %v3119 = vpack.c.b16 %v2866, %v2865
      %v3120 = vpack.c.b16 %v2868, %v2867
      %v3121 = vpack.c.b16 %v2870, %v2869
      %v3122 = vpack.c.b16 %v2872, %v2871
      %v3123 = vpack.c.b16 %v2874, %v2873
      %v3124 = vpack.c.b16 %v2876, %v2875
      %v3125 = vpack.c.b16 %v2878, %v2877
      %v3126 = vpack.c.b16 %v2880, %v2879
      %v3127 = vpack.c.b16 %v2882, %v2881
      %v3128 = vpack.c.b16 %v2884, %v2883
      %v3129 = vpack.c.b16 %v2886, %v2885
      %v3130 = vpack.c.b16 %v2888, %v2887
      %v3131 = vpack.c.b16 %v2890, %v2889
      %v3132 = vpack.c.b16 %v2892, %v2891
      %v3133 = vpack.c.b16 %v2894, %v2893
      %v3134 = vpack.c.b16 %v2896, %v2895
      %v3135 = vpack.c.b16 %v2898, %v2897
      %v3136 = vpack.c.b16 %v2900, %v2899
      %v3137 = vpack.c.b16 %v2902, %v2901
      %v3138 = vpack.c.b16 %v2904, %v2903
      %v3139 = vpack.c.b16 %v2906, %v2905
      %v3140 = vpack.c.b16 %v2908, %v2907
      %v3141 = vpack.c.b16 %v2910, %v2909
      %v3142 = vpack.c.b16 %v2912, %v2911
      %v3143 = vpack.c.b16 %v2914, %v2913
      %v3144 = vpack.c.b16 %v2916, %v2915
      %v3145 = vpack.c.b16 %v2918, %v2917
      %v3146 = vpack.c.b16 %v2920, %v2919
      %v3147 = vpack.c.b16 %v2922, %v2921
      %v3148 = vpack.c.b16 %v2924, %v2923
      %v3149 = vpack.c.b16 %v2926, %v2925
      %v3150 = vpack.c.b16 %v2928, %v2927
      %v3151 = vpack.c.b16 %v2930, %v2929
      %v3152 = vpack.c.b16 %v2932, %v2931
      %v3153 = vpack.c.b16 %v2934, %v2933
      %v3154 = vpack.c.b16 %v2936, %v2935
      %v3155 = vpack.c.b16 %v2938, %v2937
      %v3156 = vpack.c.b16 %v2940, %v2939
      %3373 = vmatprep.subr.bf16.mxu0 0
      %3374 = vmatpush1.bf16.msra.mxu0 %v2948
      %3375 = vmatprep.subr.bf16.mxu0 0
      %3376 = vmatpush1.bf16.msra.mxu0 %v2947
      %3377 = vmatprep.subr.bf16.mxu0 0
      %3378 = vmatpush1.bf16.msra.mxu0 %v2946
      %3379 = vmatprep.subr.bf16.mxu0 0
      %3380 = vmatpush1.bf16.msra.mxu0 %v2945
      %3381 = vmatprep.subr.bf16.mxu0 0
      %3382 = vmatpush1.bf16.msra.mxu0 %v2944
      %3383 = vmatprep.subr.bf16.mxu0 0
      %3384 = vmatpush1.bf16.msra.mxu0 %v2943
      %3385 = vmatprep.subr.bf16.mxu0 0
      %3386 = vmatpush1.bf16.msra.mxu0 %v2942
      %3387 = vmatprep.subr.bf16.mxu0 0
      %3388 = vmatpush1.bf16.msra.mxu0 %v2941
      %3389 = vmatprep.subr.bf16.mxu0 0
      %3390 = vmatpush2.bf16.msra.mxu0 %v2956
      %3391 = vmatprep.subr.bf16.mxu0 0
      %3392 = vmatpush2.bf16.msra.mxu0 %v2955
      %3393 = vmatprep.subr.bf16.mxu0 0
      %3394 = vmatpush2.bf16.msra.mxu0 %v2954
      %3395 = vmatprep.subr.bf16.mxu0 0
      %3396 = vmatpush2.bf16.msra.mxu0 %v2953
      %3397 = vmatprep.subr.bf16.mxu0 0
      %3398 = vmatpush2.bf16.msra.mxu0 %v2952
      %3399 = vmatprep.subr.bf16.mxu0 0
      %3400 = vmatpush2.bf16.msra.mxu0 %v2951
      %3401 = vmatprep.subr.bf16.mxu0 0
      %3402 = vmatpush2.bf16.msra.mxu0 %v2950
      %3403 = vmatprep.subr.bf16.mxu0 0
      %3404 = vmatpush2.bf16.msra.mxu0 %v2949
      %3405 = vmatprep.mubr.bf16.mxu0 %v1646
      %3406 = vmatmul.mubr.bf16.gmra.mxu0 %v1645
      %v3407 = vpop.f32.mrf.mxu0
      %v3408 = vadd.f32 %v973, %v3407
      %v3409 = vpop.f32.mrf.mxu0
      %v3410 = vpop.f32.mrf.mxu0
      %v3411 = vadd.f32 %v974, %v3410
      %v3412 = vpop.f32.mrf.mxu0
      %3413 = vmatprep.mubr.bf16.mxu0 %v1673
      %3414 = vmatmul.mubr.bf16.gmra.mxu0 %v1672
      %v3415 = vpop.f32.mrf.mxu0
      %v3416 = vadd.f32 %v975, %v3415
      %v3417 = vpop.f32.mrf.mxu0
      %v3418 = vpop.f32.mrf.mxu0
      %v3419 = vadd.f32 %v976, %v3418
      %v3420 = vpop.f32.mrf.mxu0
      %3421 = vmatprep.mubr.bf16.mxu0 %v1700
      %3422 = vmatmul.mubr.bf16.gmra.mxu0 %v1699
      %v3423 = vpop.f32.mrf.mxu0
      %v3424 = vadd.f32 %v977, %v3423
      %v3425 = vpop.f32.mrf.mxu0
      %v3426 = vpop.f32.mrf.mxu0
      %v3427 = vadd.f32 %v978, %v3426
      %v3428 = vpop.f32.mrf.mxu0
      %3429 = vmatprep.mubr.bf16.mxu0 %v1727
      %3430 = vmatmul.mubr.bf16.gmra.mxu0 %v1726
      %v3431 = vpop.f32.mrf.mxu0
      %v3432 = vadd.f32 %v979, %v3431
      %v3433 = vpop.f32.mrf.mxu0
      %v3434 = vpop.f32.mrf.mxu0
      %v3435 = vadd.f32 %v980, %v3434
      %v3436 = vpop.f32.mrf.mxu0
      %3437 = vmatprep.mubr.bf16.mxu0 %v1754
      %3438 = vmatmul.mubr.bf16.gmra.mxu0 %v1753
      %v3439 = vpop.f32.mrf.mxu0
      %v3440 = vadd.f32 %v981, %v3439
      %v3441 = vpop.f32.mrf.mxu0
      %v3442 = vpop.f32.mrf.mxu0
      %v3443 = vadd.f32 %v982, %v3442
      %v3444 = vpop.f32.mrf.mxu0
      %3445 = vmatprep.mubr.bf16.mxu0 %v1781
      %3446 = vmatmul.mubr.bf16.gmra.mxu0 %v1780
      %v3447 = vpop.f32.mrf.mxu0
      %v3448 = vadd.f32 %v983, %v3447
      %v3449 = vpop.f32.mrf.mxu0
      %v3450 = vpop.f32.mrf.mxu0
      %v3451 = vadd.f32 %v984, %v3450
      %v3452 = vpop.f32.mrf.mxu0
      %3453 = vmatprep.mubr.bf16.mxu0 %v1808
      %3454 = vmatmul.mubr.bf16.gmra.mxu0 %v1807
      %v3455 = vpop.f32.mrf.mxu0
      %v3456 = vadd.f32 %v985, %v3455
      %v3457 = vpop.f32.mrf.mxu0
      %v3458 = vpop.f32.mrf.mxu0
      %v3459 = vadd.f32 %v986, %v3458
      %v3460 = vpop.f32.mrf.mxu0
      %3461 = vmatprep.mubr.bf16.mxu0 %v1835
      %3462 = vmatmul.mubr.bf16.gmra.mxu0 %v1834
      %v3463 = vpop.f32.mrf.mxu0
      %v3464 = vadd.f32 %v987, %v3463
      %v3465 = vpop.f32.mrf.mxu0
      %v3466 = vpop.f32.mrf.mxu0
      %v3467 = vadd.f32 %v988, %v3466
      %v3468 = vpop.f32.mrf.mxu0
      %3469 = vdwg.mxu0
      %3470 = vmatprep.subr.bf16.mxu0 0
      %3471 = vmatpush1.bf16.msra.mxu0 %v2964
      %3472 = vmatprep.subr.bf16.mxu0 0
      %3473 = vmatpush1.bf16.msra.mxu0 %v2963
      %3474 = vmatprep.subr.bf16.mxu0 0
      %3475 = vmatpush1.bf16.msra.mxu0 %v2962
      %3476 = vmatprep.subr.bf16.mxu0 0
      %3477 = vmatpush1.bf16.msra.mxu0 %v2961
      %3478 = vmatprep.subr.bf16.mxu0 0
      %3479 = vmatpush1.bf16.msra.mxu0 %v2960
      %3480 = vmatprep.subr.bf16.mxu0 0
      %3481 = vmatpush1.bf16.msra.mxu0 %v2959
      %3482 = vmatprep.subr.bf16.mxu0 0
      %3483 = vmatpush1.bf16.msra.mxu0 %v2958
      %3484 = vmatprep.subr.bf16.mxu0 0
      %3485 = vmatpush1.bf16.msra.mxu0 %v2957
      %3486 = vmatprep.subr.bf16.mxu0 0
      %3487 = vmatpush2.bf16.msra.mxu0 %v2972
      %3488 = vmatprep.subr.bf16.mxu0 0
      %3489 = vmatpush2.bf16.msra.mxu0 %v2971
      %3490 = vmatprep.subr.bf16.mxu0 0
      %3491 = vmatpush2.bf16.msra.mxu0 %v2970
      %3492 = vmatprep.subr.bf16.mxu0 0
      %3493 = vmatpush2.bf16.msra.mxu0 %v2969
      %3494 = vmatprep.subr.bf16.mxu0 0
      %3495 = vmatpush2.bf16.msra.mxu0 %v2968
      %3496 = vmatprep.subr.bf16.mxu0 0
      %3497 = vmatpush2.bf16.msra.mxu0 %v2967
      %3498 = vmatprep.subr.bf16.mxu0 0
      %3499 = vmatpush2.bf16.msra.mxu0 %v2966
      %3500 = vmatprep.subr.bf16.mxu0 0
      %3501 = vmatpush2.bf16.msra.mxu0 %v2965
      %3502 = vmatprep.mubr.bf16.mxu0 %v1648
      %3503 = vmatmul.mubr.bf16.gmra.mxu0 %v1647
      %v3504 = vpop.f32.mrf.mxu0
      %v3505 = vadd.f32 %v3408, %v3504
      %v3506 = vpop.f32.mrf.mxu0
      %v3507 = vpop.f32.mrf.mxu0
      %v3508 = vadd.f32 %v3411, %v3507
      %v3509 = vpop.f32.mrf.mxu0
      %3510 = vmatprep.mubr.bf16.mxu0 %v1675
      %3511 = vmatmul.mubr.bf16.gmra.mxu0 %v1674
      %v3512 = vpop.f32.mrf.mxu0
      %v3513 = vadd.f32 %v3416, %v3512
      %v3514 = vpop.f32.mrf.mxu0
      %v3515 = vpop.f32.mrf.mxu0
      %v3516 = vadd.f32 %v3419, %v3515
      %v3517 = vpop.f32.mrf.mxu0
      %3518 = vmatprep.mubr.bf16.mxu0 %v1702
      %3519 = vmatmul.mubr.bf16.gmra.mxu0 %v1701
      %v3520 = vpop.f32.mrf.mxu0
      %v3521 = vadd.f32 %v3424, %v3520
      %v3522 = vpop.f32.mrf.mxu0
      %v3523 = vpop.f32.mrf.mxu0
      %v3524 = vadd.f32 %v3427, %v3523
      %v3525 = vpop.f32.mrf.mxu0
      %3526 = vmatprep.mubr.bf16.mxu0 %v1729
      %3527 = vmatmul.mubr.bf16.gmra.mxu0 %v1728
      %v3528 = vpop.f32.mrf.mxu0
      %v3529 = vadd.f32 %v3432, %v3528
      %v3530 = vpop.f32.mrf.mxu0
      %v3531 = vpop.f32.mrf.mxu0
      %v3532 = vadd.f32 %v3435, %v3531
      %v3533 = vpop.f32.mrf.mxu0
      %3534 = vmatprep.mubr.bf16.mxu0 %v1756
      %3535 = vmatmul.mubr.bf16.gmra.mxu0 %v1755
      %v3536 = vpop.f32.mrf.mxu0
      %v3537 = vadd.f32 %v3440, %v3536
      %v3538 = vpop.f32.mrf.mxu0
      %v3539 = vpop.f32.mrf.mxu0
      %v3540 = vadd.f32 %v3443, %v3539
      %v3541 = vpop.f32.mrf.mxu0
      %3542 = vmatprep.mubr.bf16.mxu0 %v1783
      %3543 = vmatmul.mubr.bf16.gmra.mxu0 %v1782
      %v3544 = vpop.f32.mrf.mxu0
      %v3545 = vadd.f32 %v3448, %v3544
      %v3546 = vpop.f32.mrf.mxu0
      %v3547 = vpop.f32.mrf.mxu0
      %v3548 = vadd.f32 %v3451, %v3547
      %v3549 = vpop.f32.mrf.mxu0
      %3550 = vmatprep.mubr.bf16.mxu0 %v1810
      %3551 = vmatmul.mubr.bf16.gmra.mxu0 %v1809
      %v3552 = vpop.f32.mrf.mxu0
      %v3553 = vadd.f32 %v3456, %v3552
      %v3554 = vpop.f32.mrf.mxu0
      %v3555 = vpop.f32.mrf.mxu0
      %v3556 = vadd.f32 %v3459, %v3555
      %v3557 = vpop.f32.mrf.mxu0
      %3558 = vmatprep.mubr.bf16.mxu0 %v1837
      %3559 = vmatmul.mubr.bf16.gmra.mxu0 %v1836
      %v3560 = vpop.f32.mrf.mxu0
      %v3561 = vadd.f32 %v3464, %v3560
      %v3562 = vpop.f32.mrf.mxu0
      %v3563 = vpop.f32.mrf.mxu0
      %v3564 = vadd.f32 %v3467, %v3563
      %v3565 = vpop.f32.mrf.mxu0
      %3566 = vdwg.mxu0
      %3567 = vmatprep.subr.bf16.mxu0 0
      %3568 = vmatpush1.bf16.msra.mxu0 %v2980
      %3569 = vmatprep.subr.bf16.mxu0 0
      %3570 = vmatpush1.bf16.msra.mxu0 %v2979
      %3571 = vmatprep.subr.bf16.mxu0 0
      %3572 = vmatpush1.bf16.msra.mxu0 %v2978
      %3573 = vmatprep.subr.bf16.mxu0 0
      %3574 = vmatpush1.bf16.msra.mxu0 %v2977
      %3575 = vmatprep.subr.bf16.mxu0 0
      %3576 = vmatpush1.bf16.msra.mxu0 %v2976
      %3577 = vmatprep.subr.bf16.mxu0 0
      %3578 = vmatpush1.bf16.msra.mxu0 %v2975
      %3579 = vmatprep.subr.bf16.mxu0 0
      %3580 = vmatpush1.bf16.msra.mxu0 %v2974
      %3581 = vmatprep.subr.bf16.mxu0 0
      %3582 = vmatpush1.bf16.msra.mxu0 %v2973
      %3583 = vmatprep.subr.bf16.mxu0 0
      %3584 = vmatpush2.bf16.msra.mxu0 %v2988
      %3585 = vmatprep.subr.bf16.mxu0 0
      %3586 = vmatpush2.bf16.msra.mxu0 %v2987
      %3587 = vmatprep.subr.bf16.mxu0 0
      %3588 = vmatpush2.bf16.msra.mxu0 %v2986
      %3589 = vmatprep.subr.bf16.mxu0 0
      %3590 = vmatpush2.bf16.msra.mxu0 %v2985
      %3591 = vmatprep.subr.bf16.mxu0 0
      %3592 = vmatpush2.bf16.msra.mxu0 %v2984
      %3593 = vmatprep.subr.bf16.mxu0 0
      %3594 = vmatpush2.bf16.msra.mxu0 %v2983
      %3595 = vmatprep.subr.bf16.mxu0 0
      %3596 = vmatpush2.bf16.msra.mxu0 %v2982
      %3597 = vmatprep.subr.bf16.mxu0 0
      %3598 = vmatpush2.bf16.msra.mxu0 %v2981
      %3599 = vmatprep.mubr.bf16.mxu0 %v1650
      %3600 = vmatmul.mubr.bf16.gmra.mxu0 %v1649
      %v3601 = vpop.f32.mrf.mxu0
      %v3602 = vadd.f32 %v3505, %v3601
      %v3603 = vpop.f32.mrf.mxu0
      %v3604 = vpop.f32.mrf.mxu0
      %v3605 = vadd.f32 %v3508, %v3604
      %v3606 = vpop.f32.mrf.mxu0
      %3607 = vmatprep.mubr.bf16.mxu0 %v1677
      %3608 = vmatmul.mubr.bf16.gmra.mxu0 %v1676
      %v3609 = vpop.f32.mrf.mxu0
      %v3610 = vadd.f32 %v3513, %v3609
      %v3611 = vpop.f32.mrf.mxu0
      %v3612 = vpop.f32.mrf.mxu0
      %v3613 = vadd.f32 %v3516, %v3612
      %v3614 = vpop.f32.mrf.mxu0
      %3615 = vmatprep.mubr.bf16.mxu0 %v1704
      %3616 = vmatmul.mubr.bf16.gmra.mxu0 %v1703
      %v3617 = vpop.f32.mrf.mxu0
      %v3618 = vadd.f32 %v3521, %v3617
      %v3619 = vpop.f32.mrf.mxu0
      %v3620 = vpop.f32.mrf.mxu0
      %v3621 = vadd.f32 %v3524, %v3620
      %v3622 = vpop.f32.mrf.mxu0
      %3623 = vmatprep.mubr.bf16.mxu0 %v1731
      %3624 = vmatmul.mubr.bf16.gmra.mxu0 %v1730
      %v3625 = vpop.f32.mrf.mxu0
      %v3626 = vadd.f32 %v3529, %v3625
      %v3627 = vpop.f32.mrf.mxu0
      %v3628 = vpop.f32.mrf.mxu0
      %v3629 = vadd.f32 %v3532, %v3628
      %v3630 = vpop.f32.mrf.mxu0
      %3631 = vmatprep.mubr.bf16.mxu0 %v1758
      %3632 = vmatmul.mubr.bf16.gmra.mxu0 %v1757
      %v3633 = vpop.f32.mrf.mxu0
      %v3634 = vadd.f32 %v3537, %v3633
      %v3635 = vpop.f32.mrf.mxu0
      %v3636 = vpop.f32.mrf.mxu0
      %v3637 = vadd.f32 %v3540, %v3636
      %v3638 = vpop.f32.mrf.mxu0
      %3639 = vmatprep.mubr.bf16.mxu0 %v1785
      %3640 = vmatmul.mubr.bf16.gmra.mxu0 %v1784
      %v3641 = vpop.f32.mrf.mxu0
      %v3642 = vadd.f32 %v3545, %v3641
      %v3643 = vpop.f32.mrf.mxu0
      %v3644 = vpop.f32.mrf.mxu0
      %v3645 = vadd.f32 %v3548, %v3644
      %v3646 = vpop.f32.mrf.mxu0
      %3647 = vmatprep.mubr.bf16.mxu0 %v1812
      %3648 = vmatmul.mubr.bf16.gmra.mxu0 %v1811
      %v3649 = vpop.f32.mrf.mxu0
      %v3650 = vadd.f32 %v3553, %v3649
      %v3651 = vpop.f32.mrf.mxu0
      %v3652 = vpop.f32.mrf.mxu0
      %v3653 = vadd.f32 %v3556, %v3652
      %v3654 = vpop.f32.mrf.mxu0
      %3655 = vmatprep.mubr.bf16.mxu0 %v1839
      %3656 = vmatmul.mubr.bf16.gmra.mxu0 %v1838
      %v3657 = vpop.f32.mrf.mxu0
      %v3658 = vadd.f32 %v3561, %v3657
      %v3659 = vpop.f32.mrf.mxu0
      %v3660 = vpop.f32.mrf.mxu0
      %v3661 = vadd.f32 %v3564, %v3660
      %v3662 = vpop.f32.mrf.mxu0
      %3663 = vdwg.mxu0
      %3664 = vmatprep.subr.bf16.mxu0 0
      %3665 = vmatpush1.bf16.msra.mxu0 %v2996
      %3666 = vmatprep.subr.bf16.mxu0 0
      %3667 = vmatpush1.bf16.msra.mxu0 %v2995
      %3668 = vmatprep.subr.bf16.mxu0 0
      %3669 = vmatpush1.bf16.msra.mxu0 %v2994
      %3670 = vmatprep.subr.bf16.mxu0 0
      %3671 = vmatpush1.bf16.msra.mxu0 %v2993
      %3672 = vmatprep.subr.bf16.mxu0 0
      %3673 = vmatpush1.bf16.msra.mxu0 %v2992
      %3674 = vmatprep.subr.bf16.mxu0 0
      %3675 = vmatpush1.bf16.msra.mxu0 %v2991
      %3676 = vmatprep.subr.bf16.mxu0 0
      %3677 = vmatpush1.bf16.msra.mxu0 %v2990
      %3678 = vmatprep.subr.bf16.mxu0 0
      %3679 = vmatpush1.bf16.msra.mxu0 %v2989
      %3680 = vmatprep.subr.bf16.mxu0 0
      %3681 = vmatpush2.bf16.msra.mxu0 %v3004
      %3682 = vmatprep.subr.bf16.mxu0 0
      %3683 = vmatpush2.bf16.msra.mxu0 %v3003
      %3684 = vmatprep.subr.bf16.mxu0 0
      %3685 = vmatpush2.bf16.msra.mxu0 %v3002
      %3686 = vmatprep.subr.bf16.mxu0 0
      %3687 = vmatpush2.bf16.msra.mxu0 %v3001
      %3688 = vmatprep.subr.bf16.mxu0 0
      %3689 = vmatpush2.bf16.msra.mxu0 %v3000
      %3690 = vmatprep.subr.bf16.mxu0 0
      %3691 = vmatpush2.bf16.msra.mxu0 %v2999
      %3692 = vmatprep.subr.bf16.mxu0 0
      %3693 = vmatpush2.bf16.msra.mxu0 %v2998
      %3694 = vmatprep.subr.bf16.mxu0 0
      %3695 = vmatpush2.bf16.msra.mxu0 %v2997
      %3696 = vmatprep.mubr.bf16.mxu0 %v1652
      %3697 = vmatmul.mubr.bf16.gmra.mxu0 %v1651
      %v3698 = vpop.f32.mrf.mxu0
      %v3699 = vadd.f32 %v3602, %v3698
      %v3700 = vpop.f32.mrf.mxu0
      %v3701 = vpop.f32.mrf.mxu0
      %v3702 = vadd.f32 %v3605, %v3701
      %v3703 = vpop.f32.mrf.mxu0
      %3704 = vmatprep.mubr.bf16.mxu0 %v1679
      %3705 = vmatmul.mubr.bf16.gmra.mxu0 %v1678
      %v3706 = vpop.f32.mrf.mxu0
      %v3707 = vadd.f32 %v3610, %v3706
      %v3708 = vpop.f32.mrf.mxu0
      %v3709 = vpop.f32.mrf.mxu0
      %v3710 = vadd.f32 %v3613, %v3709
      %v3711 = vpop.f32.mrf.mxu0
      %3712 = vmatprep.mubr.bf16.mxu0 %v1706
      %3713 = vmatmul.mubr.bf16.gmra.mxu0 %v1705
      %v3714 = vpop.f32.mrf.mxu0
      %v3715 = vadd.f32 %v3618, %v3714
      %v3716 = vpop.f32.mrf.mxu0
      %v3717 = vpop.f32.mrf.mxu0
      %v3718 = vadd.f32 %v3621, %v3717
      %v3719 = vpop.f32.mrf.mxu0
      %3720 = vmatprep.mubr.bf16.mxu0 %v1733
      %3721 = vmatmul.mubr.bf16.gmra.mxu0 %v1732
      %v3722 = vpop.f32.mrf.mxu0
      %v3723 = vadd.f32 %v3626, %v3722
      %v3724 = vpop.f32.mrf.mxu0
      %v3725 = vpop.f32.mrf.mxu0
      %v3726 = vadd.f32 %v3629, %v3725
      %v3727 = vpop.f32.mrf.mxu0
      %3728 = vmatprep.mubr.bf16.mxu0 %v1760
      %3729 = vmatmul.mubr.bf16.gmra.mxu0 %v1759
      %v3730 = vpop.f32.mrf.mxu0
      %v3731 = vadd.f32 %v3634, %v3730
      %v3732 = vpop.f32.mrf.mxu0
      %v3733 = vpop.f32.mrf.mxu0
      %v3734 = vadd.f32 %v3637, %v3733
      %v3735 = vpop.f32.mrf.mxu0
      %3736 = vmatprep.mubr.bf16.mxu0 %v1787
      %3737 = vmatmul.mubr.bf16.gmra.mxu0 %v1786
      %v3738 = vpop.f32.mrf.mxu0
      %v3739 = vadd.f32 %v3642, %v3738
      %v3740 = vpop.f32.mrf.mxu0
      %v3741 = vpop.f32.mrf.mxu0
      %v3742 = vadd.f32 %v3645, %v3741
      %v3743 = vpop.f32.mrf.mxu0
      %3744 = vmatprep.mubr.bf16.mxu0 %v1814
      %3745 = vmatmul.mubr.bf16.gmra.mxu0 %v1813
      %v3746 = vpop.f32.mrf.mxu0
      %v3747 = vadd.f32 %v3650, %v3746
      %v3748 = vpop.f32.mrf.mxu0
      %v3749 = vpop.f32.mrf.mxu0
      %v3750 = vadd.f32 %v3653, %v3749
      %v3751 = vpop.f32.mrf.mxu0
      %3752 = vmatprep.mubr.bf16.mxu0 %v1841
      %3753 = vmatmul.mubr.bf16.gmra.mxu0 %v1840
      %v3754 = vpop.f32.mrf.mxu0
      %v3755 = vadd.f32 %v3658, %v3754
      %v3756 = vpop.f32.mrf.mxu0
      %v3757 = vpop.f32.mrf.mxu0
      %v3758 = vadd.f32 %v3661, %v3757
      %v3759 = vpop.f32.mrf.mxu0
      %3760 = vdwg.mxu0
      %3761 = vmatprep.subr.bf16.mxu0 0
      %3762 = vmatpush1.bf16.msra.mxu0 %v3012
      %3763 = vmatprep.subr.bf16.mxu0 0
      %3764 = vmatpush1.bf16.msra.mxu0 %v3011
      %3765 = vmatprep.subr.bf16.mxu0 0
      %3766 = vmatpush1.bf16.msra.mxu0 %v3010
      %3767 = vmatprep.subr.bf16.mxu0 0
      %3768 = vmatpush1.bf16.msra.mxu0 %v3009
      %3769 = vmatprep.subr.bf16.mxu0 0
      %3770 = vmatpush1.bf16.msra.mxu0 %v3008
      %3771 = vmatprep.subr.bf16.mxu0 0
      %3772 = vmatpush1.bf16.msra.mxu0 %v3007
      %3773 = vmatprep.subr.bf16.mxu0 0
      %3774 = vmatpush1.bf16.msra.mxu0 %v3006
      %3775 = vmatprep.subr.bf16.mxu0 0
      %3776 = vmatpush1.bf16.msra.mxu0 %v3005
      %3777 = vmatprep.subr.bf16.mxu0 0
      %3778 = vmatpush2.bf16.msra.mxu0 %v3020
      %3779 = vmatprep.subr.bf16.mxu0 0
      %3780 = vmatpush2.bf16.msra.mxu0 %v3019
      %3781 = vmatprep.subr.bf16.mxu0 0
      %3782 = vmatpush2.bf16.msra.mxu0 %v3018
      %3783 = vmatprep.subr.bf16.mxu0 0
      %3784 = vmatpush2.bf16.msra.mxu0 %v3017
      %3785 = vmatprep.subr.bf16.mxu0 0
      %3786 = vmatpush2.bf16.msra.mxu0 %v3016
      %3787 = vmatprep.subr.bf16.mxu0 0
      %3788 = vmatpush2.bf16.msra.mxu0 %v3015
      %3789 = vmatprep.subr.bf16.mxu0 0
      %3790 = vmatpush2.bf16.msra.mxu0 %v3014
      %3791 = vmatprep.subr.bf16.mxu0 0
      %3792 = vmatpush2.bf16.msra.mxu0 %v3013
      %3793 = vmatprep.mubr.bf16.mxu0 %v1654
      %3794 = vmatmul.mubr.bf16.gmra.mxu0 %v1653
      %v3795 = vpop.f32.mrf.mxu0
      %v3796 = vadd.f32 %v3699, %v3795
      %v3797 = vpop.f32.mrf.mxu0
      %v3798 = vpop.f32.mrf.mxu0
      %v3799 = vadd.f32 %v3702, %v3798
      %v3800 = vpop.f32.mrf.mxu0
      %3801 = vmatprep.mubr.bf16.mxu0 %v1681
      %3802 = vmatmul.mubr.bf16.gmra.mxu0 %v1680
      %v3803 = vpop.f32.mrf.mxu0
      %v3804 = vadd.f32 %v3707, %v3803
      %v3805 = vpop.f32.mrf.mxu0
      %v3806 = vpop.f32.mrf.mxu0
      %v3807 = vadd.f32 %v3710, %v3806
      %v3808 = vpop.f32.mrf.mxu0
      %3809 = vmatprep.mubr.bf16.mxu0 %v1708
      %3810 = vmatmul.mubr.bf16.gmra.mxu0 %v1707
      %v3811 = vpop.f32.mrf.mxu0
      %v3812 = vadd.f32 %v3715, %v3811
      %v3813 = vpop.f32.mrf.mxu0
      %v3814 = vpop.f32.mrf.mxu0
      %v3815 = vadd.f32 %v3718, %v3814
      %v3816 = vpop.f32.mrf.mxu0
      %3817 = vmatprep.mubr.bf16.mxu0 %v1735
      %3818 = vmatmul.mubr.bf16.gmra.mxu0 %v1734
      %v3819 = vpop.f32.mrf.mxu0
      %v3820 = vadd.f32 %v3723, %v3819
      %v3821 = vpop.f32.mrf.mxu0
      %v3822 = vpop.f32.mrf.mxu0
      %v3823 = vadd.f32 %v3726, %v3822
      %v3824 = vpop.f32.mrf.mxu0
      %3825 = vmatprep.mubr.bf16.mxu0 %v1762
      %3826 = vmatmul.mubr.bf16.gmra.mxu0 %v1761
      %v3827 = vpop.f32.mrf.mxu0
      %v3828 = vadd.f32 %v3731, %v3827
      %v3829 = vpop.f32.mrf.mxu0
      %v3830 = vpop.f32.mrf.mxu0
      %v3831 = vadd.f32 %v3734, %v3830
      %v3832 = vpop.f32.mrf.mxu0
      %3833 = vmatprep.mubr.bf16.mxu0 %v1789
      %3834 = vmatmul.mubr.bf16.gmra.mxu0 %v1788
      %v3835 = vpop.f32.mrf.mxu0
      %v3836 = vadd.f32 %v3739, %v3835
      %v3837 = vpop.f32.mrf.mxu0
      %v3838 = vpop.f32.mrf.mxu0
      %v3839 = vadd.f32 %v3742, %v3838
      %v3840 = vpop.f32.mrf.mxu0
      %3841 = vmatprep.mubr.bf16.mxu0 %v1816
      %3842 = vmatmul.mubr.bf16.gmra.mxu0 %v1815
      %v3843 = vpop.f32.mrf.mxu0
      %v3844 = vadd.f32 %v3747, %v3843
      %v3845 = vpop.f32.mrf.mxu0
      %v3846 = vpop.f32.mrf.mxu0
      %v3847 = vadd.f32 %v3750, %v3846
      %v3848 = vpop.f32.mrf.mxu0
      %3849 = vmatprep.mubr.bf16.mxu0 %v1843
      %3850 = vmatmul.mubr.bf16.gmra.mxu0 %v1842
      %v3851 = vpop.f32.mrf.mxu0
      %v3852 = vadd.f32 %v3755, %v3851
      %v3853 = vpop.f32.mrf.mxu0
      %v3854 = vpop.f32.mrf.mxu0
      %v3855 = vadd.f32 %v3758, %v3854
      %v3856 = vpop.f32.mrf.mxu0
      %3857 = vdwg.mxu0
      %3858 = vmatprep.subr.bf16.mxu0 0
      %3859 = vmatpush1.bf16.msra.mxu0 %v3028
      %3860 = vmatprep.subr.bf16.mxu0 0
      %3861 = vmatpush1.bf16.msra.mxu0 %v3027
      %3862 = vmatprep.subr.bf16.mxu0 0
      %3863 = vmatpush1.bf16.msra.mxu0 %v3026
      %3864 = vmatprep.subr.bf16.mxu0 0
      %3865 = vmatpush1.bf16.msra.mxu0 %v3025
      %3866 = vmatprep.subr.bf16.mxu0 0
      %3867 = vmatpush1.bf16.msra.mxu0 %v3024
      %3868 = vmatprep.subr.bf16.mxu0 0
      %3869 = vmatpush1.bf16.msra.mxu0 %v3023
      %3870 = vmatprep.subr.bf16.mxu0 0
      %3871 = vmatpush1.bf16.msra.mxu0 %v3022
      %3872 = vmatprep.subr.bf16.mxu0 0
      %3873 = vmatpush1.bf16.msra.mxu0 %v3021
      %3874 = vmatprep.subr.bf16.mxu0 0
      %3875 = vmatpush2.bf16.msra.mxu0 %v3036
      %3876 = vmatprep.subr.bf16.mxu0 0
      %3877 = vmatpush2.bf16.msra.mxu0 %v3035
      %3878 = vmatprep.subr.bf16.mxu0 0
      %3879 = vmatpush2.bf16.msra.mxu0 %v3034
      %3880 = vmatprep.subr.bf16.mxu0 0
      %3881 = vmatpush2.bf16.msra.mxu0 %v3033
      %3882 = vmatprep.subr.bf16.mxu0 0
      %3883 = vmatpush2.bf16.msra.mxu0 %v3032
      %3884 = vmatprep.subr.bf16.mxu0 0
      %3885 = vmatpush2.bf16.msra.mxu0 %v3031
      %3886 = vmatprep.subr.bf16.mxu0 0
      %3887 = vmatpush2.bf16.msra.mxu0 %v3030
      %3888 = vmatprep.subr.bf16.mxu0 0
      %3889 = vmatpush2.bf16.msra.mxu0 %v3029
      %3890 = vmatprep.mubr.bf16.mxu0 %v1656
      %3891 = vmatmul.mubr.bf16.gmra.mxu0 %v1655
      %v3892 = vpop.f32.mrf.mxu0
      %v3893 = vadd.f32 %v3796, %v3892
      %v3894 = vpop.f32.mrf.mxu0
      %v3895 = vpop.f32.mrf.mxu0
      %v3896 = vadd.f32 %v3799, %v3895
      %v3897 = vpop.f32.mrf.mxu0
      %3898 = vmatprep.mubr.bf16.mxu0 %v1683
      %3899 = vmatmul.mubr.bf16.gmra.mxu0 %v1682
      %v3900 = vpop.f32.mrf.mxu0
      %v3901 = vadd.f32 %v3804, %v3900
      %v3902 = vpop.f32.mrf.mxu0
      %v3903 = vpop.f32.mrf.mxu0
      %v3904 = vadd.f32 %v3807, %v3903
      %v3905 = vpop.f32.mrf.mxu0
      %3906 = vmatprep.mubr.bf16.mxu0 %v1710
      %3907 = vmatmul.mubr.bf16.gmra.mxu0 %v1709
      %v3908 = vpop.f32.mrf.mxu0
      %v3909 = vadd.f32 %v3812, %v3908
      %v3910 = vpop.f32.mrf.mxu0
      %v3911 = vpop.f32.mrf.mxu0
      %v3912 = vadd.f32 %v3815, %v3911
      %v3913 = vpop.f32.mrf.mxu0
      %3914 = vmatprep.mubr.bf16.mxu0 %v1737
      %3915 = vmatmul.mubr.bf16.gmra.mxu0 %v1736
      %v3916 = vpop.f32.mrf.mxu0
      %v3917 = vadd.f32 %v3820, %v3916
      %v3918 = vpop.f32.mrf.mxu0
      %v3919 = vpop.f32.mrf.mxu0
      %v3920 = vadd.f32 %v3823, %v3919
      %v3921 = vpop.f32.mrf.mxu0
      %3922 = vmatprep.mubr.bf16.mxu0 %v1764
      %3923 = vmatmul.mubr.bf16.gmra.mxu0 %v1763
      %v3924 = vpop.f32.mrf.mxu0
      %v3925 = vadd.f32 %v3828, %v3924
      %v3926 = vpop.f32.mrf.mxu0
      %v3927 = vpop.f32.mrf.mxu0
      %v3928 = vadd.f32 %v3831, %v3927
      %v3929 = vpop.f32.mrf.mxu0
      %3930 = vmatprep.mubr.bf16.mxu0 %v1791
      %3931 = vmatmul.mubr.bf16.gmra.mxu0 %v1790
      %v3932 = vpop.f32.mrf.mxu0
      %v3933 = vadd.f32 %v3836, %v3932
      %v3934 = vpop.f32.mrf.mxu0
      %v3935 = vpop.f32.mrf.mxu0
      %v3936 = vadd.f32 %v3839, %v3935
      %v3937 = vpop.f32.mrf.mxu0
      %3938 = vmatprep.mubr.bf16.mxu0 %v1818
      %3939 = vmatmul.mubr.bf16.gmra.mxu0 %v1817
      %v3940 = vpop.f32.mrf.mxu0
      %v3941 = vadd.f32 %v3844, %v3940
      %v3942 = vpop.f32.mrf.mxu0
      %v3943 = vpop.f32.mrf.mxu0
      %v3944 = vadd.f32 %v3847, %v3943
      %v3945 = vpop.f32.mrf.mxu0
      %3946 = vmatprep.mubr.bf16.mxu0 %v1845
      %3947 = vmatmul.mubr.bf16.gmra.mxu0 %v1844
      %v3948 = vpop.f32.mrf.mxu0
      %v3949 = vadd.f32 %v3852, %v3948
      %v3950 = vpop.f32.mrf.mxu0
      %v3951 = vpop.f32.mrf.mxu0
      %v3952 = vadd.f32 %v3855, %v3951
      %v3953 = vpop.f32.mrf.mxu0
      %3954 = vdwg.mxu0
      %3955 = vmatprep.subr.bf16.mxu0 0
      %3956 = vmatpush1.bf16.msra.mxu0 %v3044
      %3957 = vmatprep.subr.bf16.mxu0 0
      %3958 = vmatpush1.bf16.msra.mxu0 %v3043
      %3959 = vmatprep.subr.bf16.mxu0 0
      %3960 = vmatpush1.bf16.msra.mxu0 %v3042
      %3961 = vmatprep.subr.bf16.mxu0 0
      %3962 = vmatpush1.bf16.msra.mxu0 %v3041
      %3963 = vmatprep.subr.bf16.mxu0 0
      %3964 = vmatpush1.bf16.msra.mxu0 %v3040
      %3965 = vmatprep.subr.bf16.mxu0 0
      %3966 = vmatpush1.bf16.msra.mxu0 %v3039
      %3967 = vmatprep.subr.bf16.mxu0 0
      %3968 = vmatpush1.bf16.msra.mxu0 %v3038
      %3969 = vmatprep.subr.bf16.mxu0 0
      %3970 = vmatpush1.bf16.msra.mxu0 %v3037
      %3971 = vmatprep.subr.bf16.mxu0 0
      %3972 = vmatpush2.bf16.msra.mxu0 %v3052
      %3973 = vmatprep.subr.bf16.mxu0 0
      %3974 = vmatpush2.bf16.msra.mxu0 %v3051
      %3975 = vmatprep.subr.bf16.mxu0 0
      %3976 = vmatpush2.bf16.msra.mxu0 %v3050
      %3977 = vmatprep.subr.bf16.mxu0 0
      %3978 = vmatpush2.bf16.msra.mxu0 %v3049
      %3979 = vmatprep.subr.bf16.mxu0 0
      %3980 = vmatpush2.bf16.msra.mxu0 %v3048
      %3981 = vmatprep.subr.bf16.mxu0 0
      %3982 = vmatpush2.bf16.msra.mxu0 %v3047
      %3983 = vmatprep.subr.bf16.mxu0 0
      %3984 = vmatpush2.bf16.msra.mxu0 %v3046
      %3985 = vmatprep.subr.bf16.mxu0 0
      %3986 = vmatpush2.bf16.msra.mxu0 %v3045
      %3987 = vmatprep.mubr.bf16.mxu0 %v1658
      %3988 = vmatmul.mubr.bf16.gmra.mxu0 %v1657
      %v3989 = vpop.f32.mrf.mxu0
      %v3990 = vadd.f32 %v3893, %v3989
      %v3991 = vpop.f32.mrf.mxu0
      %v3992 = vpop.f32.mrf.mxu0
      %v3993 = vadd.f32 %v3896, %v3992
      %v3994 = vpop.f32.mrf.mxu0
      %3995 = vmatprep.mubr.bf16.mxu0 %v1685
      %3996 = vmatmul.mubr.bf16.gmra.mxu0 %v1684
      %v3997 = vpop.f32.mrf.mxu0
      %v3998 = vadd.f32 %v3901, %v3997
      %v3999 = vpop.f32.mrf.mxu0
      %v4000 = vpop.f32.mrf.mxu0
      %v4001 = vadd.f32 %v3904, %v4000
      %v4002 = vpop.f32.mrf.mxu0
      %4003 = vmatprep.mubr.bf16.mxu0 %v1712
      %4004 = vmatmul.mubr.bf16.gmra.mxu0 %v1711
      %v4005 = vpop.f32.mrf.mxu0
      %v4006 = vadd.f32 %v3909, %v4005
      %v4007 = vpop.f32.mrf.mxu0
      %v4008 = vpop.f32.mrf.mxu0
      %v4009 = vadd.f32 %v3912, %v4008
      %v4010 = vpop.f32.mrf.mxu0
      %4011 = vmatprep.mubr.bf16.mxu0 %v1739
      %4012 = vmatmul.mubr.bf16.gmra.mxu0 %v1738
      %v4013 = vpop.f32.mrf.mxu0
      %v4014 = vadd.f32 %v3917, %v4013
      %v4015 = vpop.f32.mrf.mxu0
      %v4016 = vpop.f32.mrf.mxu0
      %v4017 = vadd.f32 %v3920, %v4016
      %v4018 = vpop.f32.mrf.mxu0
      %4019 = vmatprep.mubr.bf16.mxu0 %v1766
      %4020 = vmatmul.mubr.bf16.gmra.mxu0 %v1765
      %v4021 = vpop.f32.mrf.mxu0
      %v4022 = vadd.f32 %v3925, %v4021
      %v4023 = vpop.f32.mrf.mxu0
      %v4024 = vpop.f32.mrf.mxu0
      %v4025 = vadd.f32 %v3928, %v4024
      %v4026 = vpop.f32.mrf.mxu0
      %4027 = vmatprep.mubr.bf16.mxu0 %v1793
      %4028 = vmatmul.mubr.bf16.gmra.mxu0 %v1792
      %v4029 = vpop.f32.mrf.mxu0
      %v4030 = vadd.f32 %v3933, %v4029
      %v4031 = vpop.f32.mrf.mxu0
      %v4032 = vpop.f32.mrf.mxu0
      %v4033 = vadd.f32 %v3936, %v4032
      %v4034 = vpop.f32.mrf.mxu0
      %4035 = vmatprep.mubr.bf16.mxu0 %v1820
      %4036 = vmatmul.mubr.bf16.gmra.mxu0 %v1819
      %v4037 = vpop.f32.mrf.mxu0
      %v4038 = vadd.f32 %v3941, %v4037
      %v4039 = vpop.f32.mrf.mxu0
      %v4040 = vpop.f32.mrf.mxu0
      %v4041 = vadd.f32 %v3944, %v4040
      %v4042 = vpop.f32.mrf.mxu0
      %4043 = vmatprep.mubr.bf16.mxu0 %v1847
      %4044 = vmatmul.mubr.bf16.gmra.mxu0 %v1846
      %v4045 = vpop.f32.mrf.mxu0
      %v4046 = vadd.f32 %v3949, %v4045
      %v4047 = vpop.f32.mrf.mxu0
      %v4048 = vpop.f32.mrf.mxu0
      %v4049 = vadd.f32 %v3952, %v4048
      %v4050 = vpop.f32.mrf.mxu0
      %4051 = vdwg.mxu0
      %4052 = vmatprep.subr.bf16.mxu0 0
      %4053 = vmatpush1.bf16.msra.mxu0 %v3060
      %4054 = vmatprep.subr.bf16.mxu0 0
      %4055 = vmatpush1.bf16.msra.mxu0 %v3059
      %4056 = vmatprep.subr.bf16.mxu0 0
      %4057 = vmatpush1.bf16.msra.mxu0 %v3058
      %4058 = vmatprep.subr.bf16.mxu0 0
      %4059 = vmatpush1.bf16.msra.mxu0 %v3057
      %4060 = vmatprep.subr.bf16.mxu0 0
      %4061 = vmatpush1.bf16.msra.mxu0 %v3056
      %4062 = vmatprep.subr.bf16.mxu0 0
      %4063 = vmatpush1.bf16.msra.mxu0 %v3055
      %4064 = vmatprep.subr.bf16.mxu0 0
      %4065 = vmatpush1.bf16.msra.mxu0 %v3054
      %4066 = vmatprep.subr.bf16.mxu0 0
      %4067 = vmatpush1.bf16.msra.mxu0 %v3053
      %4068 = vmatprep.subr.bf16.mxu0 0
      %4069 = vmatpush2.bf16.msra.mxu0 %v3068
      %4070 = vmatprep.subr.bf16.mxu0 0
      %4071 = vmatpush2.bf16.msra.mxu0 %v3067
      %4072 = vmatprep.subr.bf16.mxu0 0
      %4073 = vmatpush2.bf16.msra.mxu0 %v3066
      %4074 = vmatprep.subr.bf16.mxu0 0
      %4075 = vmatpush2.bf16.msra.mxu0 %v3065
      %4076 = vmatprep.subr.bf16.mxu0 0
      %4077 = vmatpush2.bf16.msra.mxu0 %v3064
      %4078 = vmatprep.subr.bf16.mxu0 0
      %4079 = vmatpush2.bf16.msra.mxu0 %v3063
      %4080 = vmatprep.subr.bf16.mxu0 0
      %4081 = vmatpush2.bf16.msra.mxu0 %v3062
      %4082 = vmatprep.subr.bf16.mxu0 0
      %4083 = vmatpush2.bf16.msra.mxu0 %v3061
      %4084 = vmatprep.mubr.bf16.mxu0 %v1660
      %4085 = vmatmul.mubr.bf16.gmra.mxu0 %v1659
      %v4086 = vpop.f32.mrf.mxu0
      %v4087 = vadd.f32 %v3990, %v4086
      %v4088 = vpop.f32.mrf.mxu0
      %v4089 = vpop.f32.mrf.mxu0
      %v4090 = vadd.f32 %v3993, %v4089
      %v4091 = vpop.f32.mrf.mxu0
      %4092 = vmatprep.mubr.bf16.mxu0 %v1687
      %4093 = vmatmul.mubr.bf16.gmra.mxu0 %v1686
      %v4094 = vpop.f32.mrf.mxu0
      %v4095 = vadd.f32 %v3998, %v4094
      %v4096 = vpop.f32.mrf.mxu0
      %v4097 = vpop.f32.mrf.mxu0
      %v4098 = vadd.f32 %v4001, %v4097
      %v4099 = vpop.f32.mrf.mxu0
      %4100 = vmatprep.mubr.bf16.mxu0 %v1714
      %4101 = vmatmul.mubr.bf16.gmra.mxu0 %v1713
      %v4102 = vpop.f32.mrf.mxu0
      %v4103 = vadd.f32 %v4006, %v4102
      %v4104 = vpop.f32.mrf.mxu0
      %v4105 = vpop.f32.mrf.mxu0
      %v4106 = vadd.f32 %v4009, %v4105
      %v4107 = vpop.f32.mrf.mxu0
      %4108 = vmatprep.mubr.bf16.mxu0 %v1741
      %4109 = vmatmul.mubr.bf16.gmra.mxu0 %v1740
      %v4110 = vpop.f32.mrf.mxu0
      %v4111 = vadd.f32 %v4014, %v4110
      %v4112 = vpop.f32.mrf.mxu0
      %v4113 = vpop.f32.mrf.mxu0
      %v4114 = vadd.f32 %v4017, %v4113
      %v4115 = vpop.f32.mrf.mxu0
      %4116 = vmatprep.mubr.bf16.mxu0 %v1768
      %4117 = vmatmul.mubr.bf16.gmra.mxu0 %v1767
      %v4118 = vpop.f32.mrf.mxu0
      %v4119 = vadd.f32 %v4022, %v4118
      %v4120 = vpop.f32.mrf.mxu0
      %v4121 = vpop.f32.mrf.mxu0
      %v4122 = vadd.f32 %v4025, %v4121
      %v4123 = vpop.f32.mrf.mxu0
      %4124 = vmatprep.mubr.bf16.mxu0 %v1795
      %4125 = vmatmul.mubr.bf16.gmra.mxu0 %v1794
      %v4126 = vpop.f32.mrf.mxu0
      %v4127 = vadd.f32 %v4030, %v4126
      %v4128 = vpop.f32.mrf.mxu0
      %v4129 = vpop.f32.mrf.mxu0
      %v4130 = vadd.f32 %v4033, %v4129
      %v4131 = vpop.f32.mrf.mxu0
      %4132 = vmatprep.mubr.bf16.mxu0 %v1822
      %4133 = vmatmul.mubr.bf16.gmra.mxu0 %v1821
      %v4134 = vpop.f32.mrf.mxu0
      %v4135 = vadd.f32 %v4038, %v4134
      %v4136 = vpop.f32.mrf.mxu0
      %v4137 = vpop.f32.mrf.mxu0
      %v4138 = vadd.f32 %v4041, %v4137
      %v4139 = vpop.f32.mrf.mxu0
      %4140 = vmatprep.mubr.bf16.mxu0 %v1849
      %4141 = vmatmul.mubr.bf16.gmra.mxu0 %v1848
      %v4142 = vpop.f32.mrf.mxu0
      %v4143 = vadd.f32 %v4046, %v4142
      %v4144 = vpop.f32.mrf.mxu0
      %v4145 = vpop.f32.mrf.mxu0
      %v4146 = vadd.f32 %v4049, %v4145
      %v4147 = vpop.f32.mrf.mxu0
      %4148 = vdwg.mxu0
      %4149 = vmatprep.subr.bf16.mxu0 0
      %4150 = vmatpush1.bf16.msra.mxu0 %v3076
      %4151 = vmatprep.subr.bf16.mxu0 0
      %4152 = vmatpush1.bf16.msra.mxu0 %v3075
      %4153 = vmatprep.subr.bf16.mxu0 0
      %4154 = vmatpush1.bf16.msra.mxu0 %v3074
      %4155 = vmatprep.subr.bf16.mxu0 0
      %4156 = vmatpush1.bf16.msra.mxu0 %v3073
      %4157 = vmatprep.subr.bf16.mxu0 0
      %4158 = vmatpush1.bf16.msra.mxu0 %v3072
      %4159 = vmatprep.subr.bf16.mxu0 0
      %4160 = vmatpush1.bf16.msra.mxu0 %v3071
      %4161 = vmatprep.subr.bf16.mxu0 0
      %4162 = vmatpush1.bf16.msra.mxu0 %v3070
      %4163 = vmatprep.subr.bf16.mxu0 0
      %4164 = vmatpush1.bf16.msra.mxu0 %v3069
      %4165 = vmatprep.subr.bf16.mxu0 0
      %4166 = vmatpush2.bf16.msra.mxu0 %v3084
      %4167 = vmatprep.subr.bf16.mxu0 0
      %4168 = vmatpush2.bf16.msra.mxu0 %v3083
      %4169 = vmatprep.subr.bf16.mxu0 0
      %4170 = vmatpush2.bf16.msra.mxu0 %v3082
      %4171 = vmatprep.subr.bf16.mxu0 0
      %4172 = vmatpush2.bf16.msra.mxu0 %v3081
      %4173 = vmatprep.subr.bf16.mxu0 0
      %4174 = vmatpush2.bf16.msra.mxu0 %v3080
      %4175 = vmatprep.subr.bf16.mxu0 0
      %4176 = vmatpush2.bf16.msra.mxu0 %v3079
      %4177 = vmatprep.subr.bf16.mxu0 0
      %4178 = vmatpush2.bf16.msra.mxu0 %v3078
      %4179 = vmatprep.subr.bf16.mxu0 0
      %4180 = vmatpush2.bf16.msra.mxu0 %v3077
      %4181 = vmatprep.mubr.bf16.mxu0 %v1662
      %4182 = vmatmul.mubr.bf16.gmra.mxu0 %v1661
      %v4183 = vpop.f32.mrf.mxu0
      %v4184 = vadd.f32 %v4087, %v4183
      %v4185 = vpop.f32.mrf.mxu0
      %v4186 = vpop.f32.mrf.mxu0
      %v4187 = vadd.f32 %v4090, %v4186
      %v4188 = vpop.f32.mrf.mxu0
      %4189 = vmatprep.mubr.bf16.mxu0 %v1689
      %4190 = vmatmul.mubr.bf16.gmra.mxu0 %v1688
      %v4191 = vpop.f32.mrf.mxu0
      %v4192 = vadd.f32 %v4095, %v4191
      %v4193 = vpop.f32.mrf.mxu0
      %v4194 = vpop.f32.mrf.mxu0
      %v4195 = vadd.f32 %v4098, %v4194
      %v4196 = vpop.f32.mrf.mxu0
      %4197 = vmatprep.mubr.bf16.mxu0 %v1716
      %4198 = vmatmul.mubr.bf16.gmra.mxu0 %v1715
      %v4199 = vpop.f32.mrf.mxu0
      %v4200 = vadd.f32 %v4103, %v4199
      %v4201 = vpop.f32.mrf.mxu0
      %v4202 = vpop.f32.mrf.mxu0
      %v4203 = vadd.f32 %v4106, %v4202
      %v4204 = vpop.f32.mrf.mxu0
      %4205 = vmatprep.mubr.bf16.mxu0 %v1743
      %4206 = vmatmul.mubr.bf16.gmra.mxu0 %v1742
      %v4207 = vpop.f32.mrf.mxu0
      %v4208 = vadd.f32 %v4111, %v4207
      %v4209 = vpop.f32.mrf.mxu0
      %v4210 = vpop.f32.mrf.mxu0
      %v4211 = vadd.f32 %v4114, %v4210
      %v4212 = vpop.f32.mrf.mxu0
      %4213 = vmatprep.mubr.bf16.mxu0 %v1770
      %4214 = vmatmul.mubr.bf16.gmra.mxu0 %v1769
      %v4215 = vpop.f32.mrf.mxu0
      %v4216 = vadd.f32 %v4119, %v4215
      %v4217 = vpop.f32.mrf.mxu0
      %v4218 = vpop.f32.mrf.mxu0
      %v4219 = vadd.f32 %v4122, %v4218
      %v4220 = vpop.f32.mrf.mxu0
      %4221 = vmatprep.mubr.bf16.mxu0 %v1797
      %4222 = vmatmul.mubr.bf16.gmra.mxu0 %v1796
      %v4223 = vpop.f32.mrf.mxu0
      %v4224 = vadd.f32 %v4127, %v4223
      %v4225 = vpop.f32.mrf.mxu0
      %v4226 = vpop.f32.mrf.mxu0
      %v4227 = vadd.f32 %v4130, %v4226
      %v4228 = vpop.f32.mrf.mxu0
      %4229 = vmatprep.mubr.bf16.mxu0 %v1824
      %4230 = vmatmul.mubr.bf16.gmra.mxu0 %v1823
      %v4231 = vpop.f32.mrf.mxu0
      %v4232 = vadd.f32 %v4135, %v4231
      %v4233 = vpop.f32.mrf.mxu0
      %v4234 = vpop.f32.mrf.mxu0
      %v4235 = vadd.f32 %v4138, %v4234
      %v4236 = vpop.f32.mrf.mxu0
      %4237 = vmatprep.mubr.bf16.mxu0 %v1851
      %4238 = vmatmul.mubr.bf16.gmra.mxu0 %v1850
      %v4239 = vpop.f32.mrf.mxu0
      %v4240 = vadd.f32 %v4143, %v4239
      %v4241 = vpop.f32.mrf.mxu0
      %v4242 = vpop.f32.mrf.mxu0
      %v4243 = vadd.f32 %v4146, %v4242
      %v4244 = vpop.f32.mrf.mxu0
      %4245 = vdwg.mxu0
      %4246 = vmatprep.subr.bf16.mxu0 0
      %4247 = vmatpush1.bf16.msra.mxu0 %v3092
      %4248 = vmatprep.subr.bf16.mxu0 0
      %4249 = vmatpush1.bf16.msra.mxu0 %v3091
      %4250 = vmatprep.subr.bf16.mxu0 0
      %4251 = vmatpush1.bf16.msra.mxu0 %v3090
      %4252 = vmatprep.subr.bf16.mxu0 0
      %4253 = vmatpush1.bf16.msra.mxu0 %v3089
      %4254 = vmatprep.subr.bf16.mxu0 0
      %4255 = vmatpush1.bf16.msra.mxu0 %v3088
      %4256 = vmatprep.subr.bf16.mxu0 0
      %4257 = vmatpush1.bf16.msra.mxu0 %v3087
      %4258 = vmatprep.subr.bf16.mxu0 0
      %4259 = vmatpush1.bf16.msra.mxu0 %v3086
      %4260 = vmatprep.subr.bf16.mxu0 0
      %4261 = vmatpush1.bf16.msra.mxu0 %v3085
      %4262 = vmatprep.subr.bf16.mxu0 0
      %4263 = vmatpush2.bf16.msra.mxu0 %v3100
      %4264 = vmatprep.subr.bf16.mxu0 0
      %4265 = vmatpush2.bf16.msra.mxu0 %v3099
      %4266 = vmatprep.subr.bf16.mxu0 0
      %4267 = vmatpush2.bf16.msra.mxu0 %v3098
      %4268 = vmatprep.subr.bf16.mxu0 0
      %4269 = vmatpush2.bf16.msra.mxu0 %v3097
      %4270 = vmatprep.subr.bf16.mxu0 0
      %4271 = vmatpush2.bf16.msra.mxu0 %v3096
      %4272 = vmatprep.subr.bf16.mxu0 0
      %4273 = vmatpush2.bf16.msra.mxu0 %v3095
      %4274 = vmatprep.subr.bf16.mxu0 0
      %4275 = vmatpush2.bf16.msra.mxu0 %v3094
      %4276 = vmatprep.subr.bf16.mxu0 0
      %4277 = vmatpush2.bf16.msra.mxu0 %v3093
      %4278 = vmatprep.mubr.bf16.mxu0 %v1664
      %4279 = vmatmul.mubr.bf16.gmra.mxu0 %v1663
      %v4280 = vpop.f32.mrf.mxu0
      %v4281 = vadd.f32 %v4184, %v4280
      %v4282 = vpop.f32.mrf.mxu0
      %v4283 = vpop.f32.mrf.mxu0
      %v4284 = vadd.f32 %v4187, %v4283
      %v4285 = vpop.f32.mrf.mxu0
      %4286 = vmatprep.mubr.bf16.mxu0 %v1691
      %4287 = vmatmul.mubr.bf16.gmra.mxu0 %v1690
      %v4288 = vpop.f32.mrf.mxu0
      %v4289 = vadd.f32 %v4192, %v4288
      %v4290 = vpop.f32.mrf.mxu0
      %v4291 = vpop.f32.mrf.mxu0
      %v4292 = vadd.f32 %v4195, %v4291
      %v4293 = vpop.f32.mrf.mxu0
      %4294 = vmatprep.mubr.bf16.mxu0 %v1718
      %4295 = vmatmul.mubr.bf16.gmra.mxu0 %v1717
      %v4296 = vpop.f32.mrf.mxu0
      %v4297 = vadd.f32 %v4200, %v4296
      %v4298 = vpop.f32.mrf.mxu0
      %v4299 = vpop.f32.mrf.mxu0
      %v4300 = vadd.f32 %v4203, %v4299
      %v4301 = vpop.f32.mrf.mxu0
      %4302 = vmatprep.mubr.bf16.mxu0 %v1745
      %4303 = vmatmul.mubr.bf16.gmra.mxu0 %v1744
      %v4304 = vpop.f32.mrf.mxu0
      %v4305 = vadd.f32 %v4208, %v4304
      %v4306 = vpop.f32.mrf.mxu0
      %v4307 = vpop.f32.mrf.mxu0
      %v4308 = vadd.f32 %v4211, %v4307
      %v4309 = vpop.f32.mrf.mxu0
      %4310 = vmatprep.mubr.bf16.mxu0 %v1772
      %4311 = vmatmul.mubr.bf16.gmra.mxu0 %v1771
      %v4312 = vpop.f32.mrf.mxu0
      %v4313 = vadd.f32 %v4216, %v4312
      %v4314 = vpop.f32.mrf.mxu0
      %v4315 = vpop.f32.mrf.mxu0
      %v4316 = vadd.f32 %v4219, %v4315
      %v4317 = vpop.f32.mrf.mxu0
      %4318 = vmatprep.mubr.bf16.mxu0 %v1799
      %4319 = vmatmul.mubr.bf16.gmra.mxu0 %v1798
      %v4320 = vpop.f32.mrf.mxu0
      %v4321 = vadd.f32 %v4224, %v4320
      %v4322 = vpop.f32.mrf.mxu0
      %v4323 = vpop.f32.mrf.mxu0
      %v4324 = vadd.f32 %v4227, %v4323
      %v4325 = vpop.f32.mrf.mxu0
      %4326 = vmatprep.mubr.bf16.mxu0 %v1826
      %4327 = vmatmul.mubr.bf16.gmra.mxu0 %v1825
      %v4328 = vpop.f32.mrf.mxu0
      %v4329 = vadd.f32 %v4232, %v4328
      %v4330 = vpop.f32.mrf.mxu0
      %v4331 = vpop.f32.mrf.mxu0
      %v4332 = vadd.f32 %v4235, %v4331
      %v4333 = vpop.f32.mrf.mxu0
      %4334 = vmatprep.mubr.bf16.mxu0 %v1853
      %4335 = vmatmul.mubr.bf16.gmra.mxu0 %v1852
      %v4336 = vpop.f32.mrf.mxu0
      %v4337 = vadd.f32 %v4240, %v4336
      %v4338 = vpop.f32.mrf.mxu0
      %v4339 = vpop.f32.mrf.mxu0
      %v4340 = vadd.f32 %v4243, %v4339
      %v4341 = vpop.f32.mrf.mxu0
      %4342 = vdwg.mxu0
      %4343 = vmatprep.subr.bf16.mxu0 0
      %4344 = vmatpush1.bf16.msra.mxu0 %v3108
      %4345 = vmatprep.subr.bf16.mxu0 0
      %4346 = vmatpush1.bf16.msra.mxu0 %v3107
      %4347 = vmatprep.subr.bf16.mxu0 0
      %4348 = vmatpush1.bf16.msra.mxu0 %v3106
      %4349 = vmatprep.subr.bf16.mxu0 0
      %4350 = vmatpush1.bf16.msra.mxu0 %v3105
      %4351 = vmatprep.subr.bf16.mxu0 0
      %4352 = vmatpush1.bf16.msra.mxu0 %v3104
      %4353 = vmatprep.subr.bf16.mxu0 0
      %4354 = vmatpush1.bf16.msra.mxu0 %v3103
      %4355 = vmatprep.subr.bf16.mxu0 0
      %4356 = vmatpush1.bf16.msra.mxu0 %v3102
      %4357 = vmatprep.subr.bf16.mxu0 0
      %4358 = vmatpush1.bf16.msra.mxu0 %v3101
      %4359 = vmatprep.subr.bf16.mxu0 0
      %4360 = vmatpush2.bf16.msra.mxu0 %v3116
      %4361 = vmatprep.subr.bf16.mxu0 0
      %4362 = vmatpush2.bf16.msra.mxu0 %v3115
      %4363 = vmatprep.subr.bf16.mxu0 0
      %4364 = vmatpush2.bf16.msra.mxu0 %v3114
      %4365 = vmatprep.subr.bf16.mxu0 0
      %4366 = vmatpush2.bf16.msra.mxu0 %v3113
      %4367 = vmatprep.subr.bf16.mxu0 0
      %4368 = vmatpush2.bf16.msra.mxu0 %v3112
      %4369 = vmatprep.subr.bf16.mxu0 0
      %4370 = vmatpush2.bf16.msra.mxu0 %v3111
      %4371 = vmatprep.subr.bf16.mxu0 0
      %4372 = vmatpush2.bf16.msra.mxu0 %v3110
      %4373 = vmatprep.subr.bf16.mxu0 0
      %4374 = vmatpush2.bf16.msra.mxu0 %v3109
      %4375 = vmatprep.mubr.bf16.mxu0 %v1666
      %4376 = vmatmul.mubr.bf16.gmra.mxu0 %v1665
      %v4377 = vpop.f32.mrf.mxu0
      %v4378 = vadd.f32 %v4281, %v4377
      %v4379 = vpop.f32.mrf.mxu0
      %v4380 = vpop.f32.mrf.mxu0
      %v4381 = vadd.f32 %v4284, %v4380
      %v4382 = vpop.f32.mrf.mxu0
      %4383 = vmatprep.mubr.bf16.mxu0 %v1693
      %4384 = vmatmul.mubr.bf16.gmra.mxu0 %v1692
      %v4385 = vpop.f32.mrf.mxu0
      %v4386 = vadd.f32 %v4289, %v4385
      %v4387 = vpop.f32.mrf.mxu0
      %v4388 = vpop.f32.mrf.mxu0
      %v4389 = vadd.f32 %v4292, %v4388
      %v4390 = vpop.f32.mrf.mxu0
      %4391 = vmatprep.mubr.bf16.mxu0 %v1720
      %4392 = vmatmul.mubr.bf16.gmra.mxu0 %v1719
      %v4393 = vpop.f32.mrf.mxu0
      %v4394 = vadd.f32 %v4297, %v4393
      %v4395 = vpop.f32.mrf.mxu0
      %v4396 = vpop.f32.mrf.mxu0
      %v4397 = vadd.f32 %v4300, %v4396
      %v4398 = vpop.f32.mrf.mxu0
      %4399 = vmatprep.mubr.bf16.mxu0 %v1747
      %4400 = vmatmul.mubr.bf16.gmra.mxu0 %v1746
      %v4401 = vpop.f32.mrf.mxu0
      %v4402 = vadd.f32 %v4305, %v4401
      %v4403 = vpop.f32.mrf.mxu0
      %v4404 = vpop.f32.mrf.mxu0
      %v4405 = vadd.f32 %v4308, %v4404
      %v4406 = vpop.f32.mrf.mxu0
      %4407 = vmatprep.mubr.bf16.mxu0 %v1774
      %4408 = vmatmul.mubr.bf16.gmra.mxu0 %v1773
      %v4409 = vpop.f32.mrf.mxu0
      %v4410 = vadd.f32 %v4313, %v4409
      %v4411 = vpop.f32.mrf.mxu0
      %v4412 = vpop.f32.mrf.mxu0
      %v4413 = vadd.f32 %v4316, %v4412
      %v4414 = vpop.f32.mrf.mxu0
      %4415 = vmatprep.mubr.bf16.mxu0 %v1801
      %4416 = vmatmul.mubr.bf16.gmra.mxu0 %v1800
      %v4417 = vpop.f32.mrf.mxu0
      %v4418 = vadd.f32 %v4321, %v4417
      %v4419 = vpop.f32.mrf.mxu0
      %v4420 = vpop.f32.mrf.mxu0
      %v4421 = vadd.f32 %v4324, %v4420
      %v4422 = vpop.f32.mrf.mxu0
      %4423 = vmatprep.mubr.bf16.mxu0 %v1828
      %4424 = vmatmul.mubr.bf16.gmra.mxu0 %v1827
      %v4425 = vpop.f32.mrf.mxu0
      %v4426 = vadd.f32 %v4329, %v4425
      %v4427 = vpop.f32.mrf.mxu0
      %v4428 = vpop.f32.mrf.mxu0
      %v4429 = vadd.f32 %v4332, %v4428
      %v4430 = vpop.f32.mrf.mxu0
      %4431 = vmatprep.mubr.bf16.mxu0 %v1855
      %4432 = vmatmul.mubr.bf16.gmra.mxu0 %v1854
      %v4433 = vpop.f32.mrf.mxu0
      %v4434 = vadd.f32 %v4337, %v4433
      %v4435 = vpop.f32.mrf.mxu0
      %v4436 = vpop.f32.mrf.mxu0
      %v4437 = vadd.f32 %v4340, %v4436
      %v4438 = vpop.f32.mrf.mxu0
      %4439 = vdwg.mxu0
      %4440 = vmatprep.subr.bf16.mxu0 0
      %4441 = vmatpush1.bf16.msra.mxu0 %v3124
      %4442 = vmatprep.subr.bf16.mxu0 0
      %4443 = vmatpush1.bf16.msra.mxu0 %v3123
      %4444 = vmatprep.subr.bf16.mxu0 0
      %4445 = vmatpush1.bf16.msra.mxu0 %v3122
      %4446 = vmatprep.subr.bf16.mxu0 0
      %4447 = vmatpush1.bf16.msra.mxu0 %v3121
      %4448 = vmatprep.subr.bf16.mxu0 0
      %4449 = vmatpush1.bf16.msra.mxu0 %v3120
      %4450 = vmatprep.subr.bf16.mxu0 0
      %4451 = vmatpush1.bf16.msra.mxu0 %v3119
      %4452 = vmatprep.subr.bf16.mxu0 0
      %4453 = vmatpush1.bf16.msra.mxu0 %v3118
      %4454 = vmatprep.subr.bf16.mxu0 0
      %4455 = vmatpush1.bf16.msra.mxu0 %v3117
      %4456 = vmatprep.subr.bf16.mxu0 0
      %4457 = vmatpush2.bf16.msra.mxu0 %v3132
      %4458 = vmatprep.subr.bf16.mxu0 0
      %4459 = vmatpush2.bf16.msra.mxu0 %v3131
      %4460 = vmatprep.subr.bf16.mxu0 0
      %4461 = vmatpush2.bf16.msra.mxu0 %v3130
      %4462 = vmatprep.subr.bf16.mxu0 0
      %4463 = vmatpush2.bf16.msra.mxu0 %v3129
      %4464 = vmatprep.subr.bf16.mxu0 0
      %4465 = vmatpush2.bf16.msra.mxu0 %v3128
      %4466 = vmatprep.subr.bf16.mxu0 0
      %4467 = vmatpush2.bf16.msra.mxu0 %v3127
      %4468 = vmatprep.subr.bf16.mxu0 0
      %4469 = vmatpush2.bf16.msra.mxu0 %v3126
      %4470 = vmatprep.subr.bf16.mxu0 0
      %4471 = vmatpush2.bf16.msra.mxu0 %v3125
      %4472 = vmatprep.mubr.bf16.mxu0 %v1668
      %4473 = vmatmul.mubr.bf16.gmra.mxu0 %v1667
      %v4474 = vpop.f32.mrf.mxu0
      %v4475 = vadd.f32 %v4378, %v4474
      %v4476 = vpop.f32.mrf.mxu0
      %v4477 = vpop.f32.mrf.mxu0
      %v4478 = vadd.f32 %v4381, %v4477
      %v4479 = vpop.f32.mrf.mxu0
      %4480 = vmatprep.mubr.bf16.mxu0 %v1695
      %4481 = vmatmul.mubr.bf16.gmra.mxu0 %v1694
      %v4482 = vpop.f32.mrf.mxu0
      %v4483 = vadd.f32 %v4386, %v4482
      %v4484 = vpop.f32.mrf.mxu0
      %v4485 = vpop.f32.mrf.mxu0
      %v4486 = vadd.f32 %v4389, %v4485
      %v4487 = vpop.f32.mrf.mxu0
      %4488 = vmatprep.mubr.bf16.mxu0 %v1722
      %4489 = vmatmul.mubr.bf16.gmra.mxu0 %v1721
      %v4490 = vpop.f32.mrf.mxu0
      %v4491 = vadd.f32 %v4394, %v4490
      %v4492 = vpop.f32.mrf.mxu0
      %v4493 = vpop.f32.mrf.mxu0
      %v4494 = vadd.f32 %v4397, %v4493
      %v4495 = vpop.f32.mrf.mxu0
      %4496 = vmatprep.mubr.bf16.mxu0 %v1749
      %4497 = vmatmul.mubr.bf16.gmra.mxu0 %v1748
      %v4498 = vpop.f32.mrf.mxu0
      %v4499 = vadd.f32 %v4402, %v4498
      %v4500 = vpop.f32.mrf.mxu0
      %v4501 = vpop.f32.mrf.mxu0
      %v4502 = vadd.f32 %v4405, %v4501
      %v4503 = vpop.f32.mrf.mxu0
      %4504 = vmatprep.mubr.bf16.mxu0 %v1776
      %4505 = vmatmul.mubr.bf16.gmra.mxu0 %v1775
      %v4506 = vpop.f32.mrf.mxu0
      %v4507 = vadd.f32 %v4410, %v4506
      %v4508 = vpop.f32.mrf.mxu0
      %v4509 = vpop.f32.mrf.mxu0
      %v4510 = vadd.f32 %v4413, %v4509
      %v4511 = vpop.f32.mrf.mxu0
      %4512 = vmatprep.mubr.bf16.mxu0 %v1803
      %4513 = vmatmul.mubr.bf16.gmra.mxu0 %v1802
      %v4514 = vpop.f32.mrf.mxu0
      %v4515 = vadd.f32 %v4418, %v4514
      %v4516 = vpop.f32.mrf.mxu0
      %v4517 = vpop.f32.mrf.mxu0
      %v4518 = vadd.f32 %v4421, %v4517
      %v4519 = vpop.f32.mrf.mxu0
      %4520 = vmatprep.mubr.bf16.mxu0 %v1830
      %4521 = vmatmul.mubr.bf16.gmra.mxu0 %v1829
      %v4522 = vpop.f32.mrf.mxu0
      %v4523 = vadd.f32 %v4426, %v4522
      %v4524 = vpop.f32.mrf.mxu0
      %v4525 = vpop.f32.mrf.mxu0
      %v4526 = vadd.f32 %v4429, %v4525
      %v4527 = vpop.f32.mrf.mxu0
      %4528 = vmatprep.mubr.bf16.mxu0 %v1857
      %4529 = vmatmul.mubr.bf16.gmra.mxu0 %v1856
      %v4530 = vpop.f32.mrf.mxu0
      %v4531 = vadd.f32 %v4434, %v4530
      %v4532 = vpop.f32.mrf.mxu0
      %v4533 = vpop.f32.mrf.mxu0
      %v4534 = vadd.f32 %v4437, %v4533
      %v4535 = vpop.f32.mrf.mxu0
      %4536 = vdwg.mxu0
      %4537 = vmatprep.subr.bf16.mxu0 0
      %4538 = vmatpush1.bf16.msra.mxu0 %v3140
      %4539 = vmatprep.subr.bf16.mxu0 0
      %4540 = vmatpush1.bf16.msra.mxu0 %v3139
      %4541 = vmatprep.subr.bf16.mxu0 0
      %4542 = vmatpush1.bf16.msra.mxu0 %v3138
      %4543 = vmatprep.subr.bf16.mxu0 0
      %4544 = vmatpush1.bf16.msra.mxu0 %v3137
      %4545 = vmatprep.subr.bf16.mxu0 0
      %4546 = vmatpush1.bf16.msra.mxu0 %v3136
      %4547 = vmatprep.subr.bf16.mxu0 0
      %4548 = vmatpush1.bf16.msra.mxu0 %v3135
      %4549 = vmatprep.subr.bf16.mxu0 0
      %4550 = vmatpush1.bf16.msra.mxu0 %v3134
      %4551 = vmatprep.subr.bf16.mxu0 0
      %4552 = vmatpush1.bf16.msra.mxu0 %v3133
      %4553 = vmatprep.subr.bf16.mxu0 0
      %4554 = vmatpush2.bf16.msra.mxu0 %v3148
      %4555 = vmatprep.subr.bf16.mxu0 0
      %4556 = vmatpush2.bf16.msra.mxu0 %v3147
      %4557 = vmatprep.subr.bf16.mxu0 0
      %4558 = vmatpush2.bf16.msra.mxu0 %v3146
      %4559 = vmatprep.subr.bf16.mxu0 0
      %4560 = vmatpush2.bf16.msra.mxu0 %v3145
      %4561 = vmatprep.subr.bf16.mxu0 0
      %4562 = vmatpush2.bf16.msra.mxu0 %v3144
      %4563 = vmatprep.subr.bf16.mxu0 0
      %4564 = vmatpush2.bf16.msra.mxu0 %v3143
      %4565 = vmatprep.subr.bf16.mxu0 0
      %4566 = vmatpush2.bf16.msra.mxu0 %v3142
      %4567 = vmatprep.subr.bf16.mxu0 0
      %4568 = vmatpush2.bf16.msra.mxu0 %v3141
      %4569 = vmatprep.mubr.bf16.mxu0 %v1670
      %4570 = vmatmul.mubr.bf16.gmra.mxu0 %v1669
      %v4571 = vpop.f32.mrf.mxu0
      %v4572 = vadd.f32 %v4475, %v4571
      %v4573 = vpop.f32.mrf.mxu0
      %v4574 = vpop.f32.mrf.mxu0
      %v4575 = vadd.f32 %v4478, %v4574
      %v4576 = vpop.f32.mrf.mxu0
      %4577 = vmatprep.mubr.bf16.mxu0 %v1697
      %4578 = vmatmul.mubr.bf16.gmra.mxu0 %v1696
      %v4579 = vpop.f32.mrf.mxu0
      %v4580 = vadd.f32 %v4483, %v4579
      %v4581 = vpop.f32.mrf.mxu0
      %v4582 = vpop.f32.mrf.mxu0
      %v4583 = vadd.f32 %v4486, %v4582
      %v4584 = vpop.f32.mrf.mxu0
      %4585 = vmatprep.mubr.bf16.mxu0 %v1724
      %4586 = vmatmul.mubr.bf16.gmra.mxu0 %v1723
      %v4587 = vpop.f32.mrf.mxu0
      %v4588 = vadd.f32 %v4491, %v4587
      %v4589 = vpop.f32.mrf.mxu0
      %v4590 = vpop.f32.mrf.mxu0
      %v4591 = vadd.f32 %v4494, %v4590
      %v4592 = vpop.f32.mrf.mxu0
      %4593 = vmatprep.mubr.bf16.mxu0 %v1751
      %4594 = vmatmul.mubr.bf16.gmra.mxu0 %v1750
      %v4595 = vpop.f32.mrf.mxu0
      %v4596 = vadd.f32 %v4499, %v4595
      %v4597 = vpop.f32.mrf.mxu0
      %v4598 = vpop.f32.mrf.mxu0
      %v4599 = vadd.f32 %v4502, %v4598
      %v4600 = vpop.f32.mrf.mxu0
      %4601 = vmatprep.mubr.bf16.mxu0 %v1778
      %4602 = vmatmul.mubr.bf16.gmra.mxu0 %v1777
      %v4603 = vpop.f32.mrf.mxu0
      %v4604 = vadd.f32 %v4507, %v4603
      %v4605 = vpop.f32.mrf.mxu0
      %v4606 = vpop.f32.mrf.mxu0
      %v4607 = vadd.f32 %v4510, %v4606
      %v4608 = vpop.f32.mrf.mxu0
      %4609 = vmatprep.mubr.bf16.mxu0 %v1805
      %4610 = vmatmul.mubr.bf16.gmra.mxu0 %v1804
      %v4611 = vpop.f32.mrf.mxu0
      %v4612 = vadd.f32 %v4515, %v4611
      %v4613 = vpop.f32.mrf.mxu0
      %v4614 = vpop.f32.mrf.mxu0
      %v4615 = vadd.f32 %v4518, %v4614
      %v4616 = vpop.f32.mrf.mxu0
      %4617 = vmatprep.mubr.bf16.mxu0 %v1832
      %4618 = vmatmul.mubr.bf16.gmra.mxu0 %v1831
      %v4619 = vpop.f32.mrf.mxu0
      %v4620 = vadd.f32 %v4523, %v4619
      %v4621 = vpop.f32.mrf.mxu0
      %v4622 = vpop.f32.mrf.mxu0
      %v4623 = vadd.f32 %v4526, %v4622
      %v4624 = vpop.f32.mrf.mxu0
      %4625 = vmatprep.mubr.bf16.mxu0 %v1859
      %4626 = vmatmul.mubr.bf16.gmra.mxu0 %v1858
      %v4627 = vpop.f32.mrf.mxu0
      %v4628 = vadd.f32 %v4531, %v4627
      %v4629 = vpop.f32.mrf.mxu0
      %v4630 = vpop.f32.mrf.mxu0
      %v4631 = vadd.f32 %v4534, %v4630
      %v4632 = vpop.f32.mrf.mxu0
      %4633 = vdwg.mxu0
      %4634 = vmatprep.subr.bf16.mxu0 0
      %4635 = vmatpush1.bf16.msra.mxu0 %v3156
      %4636 = vmatprep.subr.bf16.mxu0 0
      %4637 = vmatpush1.bf16.msra.mxu0 %v3155
      %4638 = vmatprep.subr.bf16.mxu0 0
      %4639 = vmatpush1.bf16.msra.mxu0 %v3154
      %4640 = vmatprep.subr.bf16.mxu0 0
      %4641 = vmatpush1.bf16.msra.mxu0 %v3153
      %4642 = vmatprep.subr.bf16.mxu0 0
      %4643 = vmatpush1.bf16.msra.mxu0 %v3152
      %4644 = vmatprep.subr.bf16.mxu0 0
      %4645 = vmatpush1.bf16.msra.mxu0 %v3151
      %4646 = vmatprep.subr.bf16.mxu0 0
      %4647 = vmatpush1.bf16.msra.mxu0 %v3150
      %4648 = vmatprep.subr.bf16.mxu0 0
      %4649 = vmatpush1.bf16.msra.mxu0 %v3149
      %4650 = vmatprep.subr.bf16.mxu0 0
      %4651 = vmatpush2.bf16.msra.mxu0 0
      %4652 = vmatprep.subr.bf16.mxu0 0
      %4653 = vmatpush2.bf16.msra.mxu0 0
      %4654 = vmatprep.subr.bf16.mxu0 0
      %4655 = vmatpush2.bf16.msra.mxu0 0
      %4656 = vmatprep.subr.bf16.mxu0 0
      %4657 = vmatpush2.bf16.msra.mxu0 0
      %4658 = vmatprep.subr.bf16.mxu0 0
      %4659 = vmatpush2.bf16.msra.mxu0 0
      %4660 = vmatprep.subr.bf16.mxu0 0
      %4661 = vmatpush2.bf16.msra.mxu0 0
      %4662 = vmatprep.subr.bf16.mxu0 0
      %4663 = vmatpush2.bf16.msra.mxu0 0
      %4664 = vmatprep.subr.bf16.mxu0 0
      %4665 = vmatpush2.bf16.msra.mxu0 0
      %4666 = vmatprep.mubr.bf16.mxu0 0
      %4667 = vmatmul.mubr.bf16.gmra.mxu0 %v1671
      %v4668 = vpop.f32.mrf.mxu0
      %v4669 = vadd.f32 %v4572, %v4668
      %v4670 = vpop.f32.mrf.mxu0
      %v4671 = vpop.f32.mrf.mxu0
      %v4672 = vadd.f32 %v4575, %v4671
      %v4673 = vpop.f32.mrf.mxu0
      %4674 = vmatprep.mubr.bf16.mxu0 0
      %4675 = vmatmul.mubr.bf16.gmra.mxu0 %v1698
      %v4676 = vpop.f32.mrf.mxu0
      %v4677 = vadd.f32 %v4580, %v4676
      %v4678 = vpop.f32.mrf.mxu0
      %v4679 = vpop.f32.mrf.mxu0
      %v4680 = vadd.f32 %v4583, %v4679
      %v4681 = vpop.f32.mrf.mxu0
      %4682 = vmatprep.mubr.bf16.mxu0 0
      %4683 = vmatmul.mubr.bf16.gmra.mxu0 %v1725
      %v4684 = vpop.f32.mrf.mxu0
      %v4685 = vadd.f32 %v4588, %v4684
      %v4686 = vpop.f32.mrf.mxu0
      %v4687 = vpop.f32.mrf.mxu0
      %v4688 = vadd.f32 %v4591, %v4687
      %v4689 = vpop.f32.mrf.mxu0
      %4690 = vmatprep.mubr.bf16.mxu0 0
      %4691 = vmatmul.mubr.bf16.gmra.mxu0 %v1752
      %v4692 = vpop.f32.mrf.mxu0
      %v4693 = vadd.f32 %v4596, %v4692
      %v4694 = vpop.f32.mrf.mxu0
      %v4695 = vpop.f32.mrf.mxu0
      %v4696 = vadd.f32 %v4599, %v4695
      %v4697 = vpop.f32.mrf.mxu0
      %4698 = vmatprep.mubr.bf16.mxu0 0
      %4699 = vmatmul.mubr.bf16.gmra.mxu0 %v1779
      %v4700 = vpop.f32.mrf.mxu0
      %v4701 = vadd.f32 %v4604, %v4700
      %v4702 = vpop.f32.mrf.mxu0
      %v4703 = vpop.f32.mrf.mxu0
      %v4704 = vadd.f32 %v4607, %v4703
      %v4705 = vpop.f32.mrf.mxu0
      %4706 = vmatprep.mubr.bf16.mxu0 0
      %4707 = vmatmul.mubr.bf16.gmra.mxu0 %v1806
      %v4708 = vpop.f32.mrf.mxu0
      %v4709 = vadd.f32 %v4612, %v4708
      %v4710 = vpop.f32.mrf.mxu0
      %v4711 = vpop.f32.mrf.mxu0
      %v4712 = vadd.f32 %v4615, %v4711
      %v4713 = vpop.f32.mrf.mxu0
      %4714 = vmatprep.mubr.bf16.mxu0 0
      %4715 = vmatmul.mubr.bf16.gmra.mxu0 %v1833
      %v4716 = vpop.f32.mrf.mxu0
      %v4717 = vadd.f32 %v4620, %v4716
      %v4718 = vpop.f32.mrf.mxu0
      %v4719 = vpop.f32.mrf.mxu0
      %v4720 = vadd.f32 %v4623, %v4719
      %v4721 = vpop.f32.mrf.mxu0
      %4722 = vmatprep.mubr.bf16.mxu0 0
      %4723 = vmatmul.mubr.bf16.gmra.mxu0 %v1860
      %v4724 = vpop.f32.mrf.mxu0
      %v4725 = vadd.f32 %v4628, %v4724
      %v4726 = vpop.f32.mrf.mxu0
      %v4727 = vpop.f32.mrf.mxu0
      %v4728 = vadd.f32 %v4631, %v4727
      %v4729 = vpop.f32.mrf.mxu0
      %4730 = vdwg.mxu0
      %v4731 = vld [vmem:[%s2] sm:$0xff]
      %v4732 = vld [vmem:[%s2 + $0x8] sm:$0xff]
      %v4733 = vld [vmem:[%s2 + $0x10] sm:$0xff]
      %v4734 = vld [vmem:[%s2 + $0x18] sm:$0xff]
      %v4735 = vld [vmem:[%s2 + $0x20] sm:$0xff]
      %v4736 = vld [vmem:[%s2 + $0x28] sm:$0xff]
      %v4737 = vld [vmem:[%s2 + $0x30] sm:$0xff]
      %v4738 = vld [vmem:[%s2 + $0x38] sm:$0xff]
      %v4739 = vld [vmem:[%s2 + $0x40] sm:$0xff]
      %v4740 = vld [vmem:[%s2 + $0x48] sm:$0xff]
      %v4741 = vld [vmem:[%s2 + $0x50] sm:$0xff]
      %v4742 = vld [vmem:[%s2 + $0x58] sm:$0xff]
      %v4743 = vld [vmem:[%s2 + $0x60] sm:$0xff]
      %v4744 = vld [vmem:[%s2 + $0x68] sm:$0xff]
      %v4745 = vld [vmem:[%s2 + $0x70] sm:$0xff]
      %v4746 = vld [vmem:[%s2 + $0x78] sm:$0xff]
      %4747 = vmatprep.subr.mxu0 0.0
      %4748 = vmatpush1.msra.mxu0 %v4746
      %4749 = vmatprep.subr.mxu0 0.0
      %4750 = vmatpush1.msra.mxu0 %v4745
      %4751 = vmatprep.subr.mxu0 0.0
      %4752 = vmatpush1.msra.mxu0 %v4744
      %4753 = vmatprep.subr.mxu0 0.0
      %4754 = vmatpush1.msra.mxu0 %v4743
      %4755 = vmatprep.subr.mxu0 0.0
      %4756 = vmatpush1.msra.mxu0 %v4742
      %4757 = vmatprep.subr.mxu0 0.0
      %4758 = vmatpush1.msra.mxu0 %v4741
      %4759 = vmatprep.subr.mxu0 0.0
      %4760 = vmatpush1.msra.mxu0 %v4740
      %4761 = vmatprep.subr.mxu0 0.0
      %4762 = vmatpush1.msra.mxu0 %v4739
      %4763 = vmatprep.subr.mxu0 0.0
      %4764 = vmatpush1.msra.mxu0 %v4738
      %4765 = vmatprep.subr.mxu0 0.0
      %4766 = vmatpush1.msra.mxu0 %v4737
      %4767 = vmatprep.subr.mxu0 0.0
      %4768 = vmatpush1.msra.mxu0 %v4736
      %4769 = vmatprep.subr.mxu0 0.0
      %4770 = vmatpush1.msra.mxu0 %v4735
      %4771 = vmatprep.subr.mxu0 0.0
      %4772 = vmatpush1.msra.mxu0 %v4734
      %4773 = vmatprep.subr.mxu0 0.0
      %4774 = vmatpush1.msra.mxu0 %v4733
      %4775 = vmatprep.subr.mxu0 0.0
      %4776 = vmatpush1.msra.mxu0 %v4732
      %4777 = vmatprep.subr.mxu0 0.0
      %4778 = vmatpush1.msra.mxu0 %v4731
      %4779 = vmatprep.subr.mxu0 0.0
      %4780 = vmatpush2.msra.mxu0 0.0
      %4781 = vmatprep.subr.mxu0 0.0
      %4782 = vmatpush2.msra.mxu0 0.0
      %4783 = vmatprep.subr.mxu0 0.0
      %4784 = vmatpush2.msra.mxu0 0.0
      %4785 = vmatprep.subr.mxu0 0.0
      %4786 = vmatpush2.msra.mxu0 0.0
      %4787 = vmatprep.subr.mxu0 0.0
      %4788 = vmatpush2.msra.mxu0 0.0
      %4789 = vmatprep.subr.mxu0 0.0
      %4790 = vmatpush2.msra.mxu0 0.0
      %4791 = vmatprep.subr.mxu0 0.0
      %4792 = vmatpush2.msra.mxu0 0.0
      %4793 = vmatprep.subr.mxu0 0.0
      %4794 = vmatpush2.msra.mxu0 0.0
      %4795 = vmatprep.subr.mxu0 0.0
      %4796 = vmatpush2.msra.mxu0 0.0
      %4797 = vmatprep.subr.mxu0 0.0
      %4798 = vmatpush2.msra.mxu0 0.0
      %4799 = vmatprep.subr.mxu0 0.0
      %4800 = vmatpush2.msra.mxu0 0.0
      %4801 = vmatprep.subr.mxu0 0.0
      %4802 = vmatpush2.msra.mxu0 0.0
      %4803 = vmatprep.subr.mxu0 0.0
      %4804 = vmatpush2.msra.mxu0 0.0
      %4805 = vmatprep.subr.mxu0 0.0
      %4806 = vmatpush2.msra.mxu0 0.0
      %4807 = vmatprep.subr.mxu0 0.0
      %4808 = vmatpush2.msra.mxu0 0.0
      %4809 = vmatprep.subr.mxu0 0.0
      %4810 = vmatpush2.msra.mxu0 0.0
      %4811 = vmatprep.mubr.f32.mxu0 0.0
      %4812 = vmatmul.mubr.f32.gmra.mxu0 %v4669
      %v4813 = vpop.f32.mrf.mxu0
      %v4814 = vadd.f32 0.0, %v4813
      %v4815 = vpop.f32.mrf.mxu0
      %4816 = vmatprep.mubr.f32.mxu0 0.0
      %4817 = vmatmul.mubr.f32.gmra.mxu0 %v4672
      %v4818 = vpop.f32.mrf.mxu0
      %v4819 = vadd.f32 0.0, %v4818
      %v4820 = vpop.f32.mrf.mxu0
      %4821 = vmatprep.mubr.f32.mxu0 0.0
      %4822 = vmatmul.mubr.f32.gmra.mxu0 %v4677
      %v4823 = vpop.f32.mrf.mxu0
      %v4824 = vadd.f32 0.0, %v4823
      %v4825 = vpop.f32.mrf.mxu0
      %4826 = vmatprep.mubr.f32.mxu0 0.0
      %4827 = vmatmul.mubr.f32.gmra.mxu0 %v4680
      %v4828 = vpop.f32.mrf.mxu0
      %v4829 = vadd.f32 0.0, %v4828
      %v4830 = vpop.f32.mrf.mxu0
      %4831 = vmatprep.mubr.f32.mxu0 0.0
      %4832 = vmatmul.mubr.f32.gmra.mxu0 %v4685
      %v4833 = vpop.f32.mrf.mxu0
      %v4834 = vadd.f32 0.0, %v4833
      %v4835 = vpop.f32.mrf.mxu0
      %4836 = vmatprep.mubr.f32.mxu0 0.0
      %4837 = vmatmul.mubr.f32.gmra.mxu0 %v4688
      %v4838 = vpop.f32.mrf.mxu0
      %v4839 = vadd.f32 0.0, %v4838
      %v4840 = vpop.f32.mrf.mxu0
      %4841 = vmatprep.mubr.f32.mxu0 0.0
      %4842 = vmatmul.mubr.f32.gmra.mxu0 %v4693
      %v4843 = vpop.f32.mrf.mxu0
      %v4844 = vadd.f32 0.0, %v4843
      %v4845 = vpop.f32.mrf.mxu0
      %4846 = vmatprep.mubr.f32.mxu0 0.0
      %4847 = vmatmul.mubr.f32.gmra.mxu0 %v4696
      %v4848 = vpop.f32.mrf.mxu0
      %v4849 = vadd.f32 0.0, %v4848
      %v4850 = vpop.f32.mrf.mxu0
      %4851 = vmatprep.mubr.f32.mxu0 0.0
      %4852 = vmatmul.mubr.f32.gmra.mxu0 %v4701
      %v4853 = vpop.f32.mrf.mxu0
      %v4854 = vadd.f32 0.0, %v4853
      %v4855 = vpop.f32.mrf.mxu0
      %4856 = vmatprep.mubr.f32.mxu0 0.0
      %4857 = vmatmul.mubr.f32.gmra.mxu0 %v4704
      %v4858 = vpop.f32.mrf.mxu0
      %v4859 = vadd.f32 0.0, %v4858
      %v4860 = vpop.f32.mrf.mxu0
      %4861 = vmatprep.mubr.f32.mxu0 0.0
      %4862 = vmatmul.mubr.f32.gmra.mxu0 %v4709
      %v4863 = vpop.f32.mrf.mxu0
      %v4864 = vadd.f32 0.0, %v4863
      %v4865 = vpop.f32.mrf.mxu0
      %4866 = vmatprep.mubr.f32.mxu0 0.0
      %4867 = vmatmul.mubr.f32.gmra.mxu0 %v4712
      %v4868 = vpop.f32.mrf.mxu0
      %v4869 = vadd.f32 0.0, %v4868
      %v4870 = vpop.f32.mrf.mxu0
      %4871 = vmatprep.mubr.f32.mxu0 0.0
      %4872 = vmatmul.mubr.f32.gmra.mxu0 %v4717
      %v4873 = vpop.f32.mrf.mxu0
      %v4874 = vadd.f32 0.0, %v4873
      %v4875 = vpop.f32.mrf.mxu0
      %4876 = vmatprep.mubr.f32.mxu0 0.0
      %4877 = vmatmul.mubr.f32.gmra.mxu0 %v4720
      %v4878 = vpop.f32.mrf.mxu0
      %v4879 = vadd.f32 0.0, %v4878
      %v4880 = vpop.f32.mrf.mxu0
      %4881 = vmatprep.mubr.f32.mxu0 0.0
      %4882 = vmatmul.mubr.f32.gmra.mxu0 %v4725
      %v4883 = vpop.f32.mrf.mxu0
      %v4884 = vadd.f32 0.0, %v4883
      %v4885 = vpop.f32.mrf.mxu0
      %4886 = vmatprep.mubr.f32.mxu0 0.0
      %4887 = vmatmul.mubr.f32.gmra.mxu0 %v4728
      %v4888 = vpop.f32.mrf.mxu0
      %v4889 = vadd.f32 0.0, %v4888
      %v4890 = vpop.f32.mrf.mxu0
      %4891 = vdwg.mxu0
      %v4892 = vsub.f32 %v4669, %v4814
      %v4893 = vsub.f32 %v4672, %v4819
      %v4894 = vsub.f32 %v4677, %v4824
      %v4895 = vsub.f32 %v4680, %v4829
      %v4896 = vsub.f32 %v4685, %v4834
      %v4897 = vsub.f32 %v4688, %v4839
      %v4898 = vsub.f32 %v4693, %v4844
      %v4899 = vsub.f32 %v4696, %v4849
      %v4900 = vsub.f32 %v4701, %v4854
      %v4901 = vsub.f32 %v4704, %v4859
      %v4902 = vsub.f32 %v4709, %v4864
      %v4903 = vsub.f32 %v4712, %v4869
      %v4904 = vsub.f32 %v4717, %v4874
      %v4905 = vsub.f32 %v4720, %v4879
      %v4906 = vsub.f32 %v4725, %v4884
      %v4907 = vsub.f32 %v4728, %v4889
      %v4908 = vmul.f32 %v4892, %v4892
      %v4909 = vmul.f32 %v4893, %v4893
      %v4910 = vmul.f32 %v4894, %v4894
      %v4911 = vmul.f32 %v4895, %v4895
      %v4912 = vmul.f32 %v4896, %v4896
      %v4913 = vmul.f32 %v4897, %v4897
      %v4914 = vmul.f32 %v4898, %v4898
      %v4915 = vmul.f32 %v4899, %v4899
      %v4916 = vmul.f32 %v4900, %v4900
      %v4917 = vmul.f32 %v4901, %v4901
      %v4918 = vmul.f32 %v4902, %v4902
      %v4919 = vmul.f32 %v4903, %v4903
      %v4920 = vmul.f32 %v4904, %v4904
      %v4921 = vmul.f32 %v4905, %v4905
      %v4922 = vmul.f32 %v4906, %v4906
      %v4923 = vmul.f32 %v4907, %v4907
      %4924 = vmatprep.subr.mxu0 0.0
      %4925 = vmatpush1.msra.mxu0 %v4746
      %4926 = vmatprep.subr.mxu0 0.0
      %4927 = vmatpush1.msra.mxu0 %v4745
      %4928 = vmatprep.subr.mxu0 0.0
      %4929 = vmatpush1.msra.mxu0 %v4744
      %4930 = vmatprep.subr.mxu0 0.0
      %4931 = vmatpush1.msra.mxu0 %v4743
      %4932 = vmatprep.subr.mxu0 0.0
      %4933 = vmatpush1.msra.mxu0 %v4742
      %4934 = vmatprep.subr.mxu0 0.0
      %4935 = vmatpush1.msra.mxu0 %v4741
      %4936 = vmatprep.subr.mxu0 0.0
      %4937 = vmatpush1.msra.mxu0 %v4740
      %4938 = vmatprep.subr.mxu0 0.0
      %4939 = vmatpush1.msra.mxu0 %v4739
      %4940 = vmatprep.subr.mxu0 0.0
      %4941 = vmatpush1.msra.mxu0 %v4738
      %4942 = vmatprep.subr.mxu0 0.0
      %4943 = vmatpush1.msra.mxu0 %v4737
      %4944 = vmatprep.subr.mxu0 0.0
      %4945 = vmatpush1.msra.mxu0 %v4736
      %4946 = vmatprep.subr.mxu0 0.0
      %4947 = vmatpush1.msra.mxu0 %v4735
      %4948 = vmatprep.subr.mxu0 0.0
      %4949 = vmatpush1.msra.mxu0 %v4734
      %4950 = vmatprep.subr.mxu0 0.0
      %4951 = vmatpush1.msra.mxu0 %v4733
      %4952 = vmatprep.subr.mxu0 0.0
      %4953 = vmatpush1.msra.mxu0 %v4732
      %4954 = vmatprep.subr.mxu0 0.0
      %4955 = vmatpush1.msra.mxu0 %v4731
      %4956 = vmatprep.subr.mxu0 0.0
      %4957 = vmatpush2.msra.mxu0 0.0
      %4958 = vmatprep.subr.mxu0 0.0
      %4959 = vmatpush2.msra.mxu0 0.0
      %4960 = vmatprep.subr.mxu0 0.0
      %4961 = vmatpush2.msra.mxu0 0.0
      %4962 = vmatprep.subr.mxu0 0.0
      %4963 = vmatpush2.msra.mxu0 0.0
      %4964 = vmatprep.subr.mxu0 0.0
      %4965 = vmatpush2.msra.mxu0 0.0
      %4966 = vmatprep.subr.mxu0 0.0
      %4967 = vmatpush2.msra.mxu0 0.0
      %4968 = vmatprep.subr.mxu0 0.0
      %4969 = vmatpush2.msra.mxu0 0.0
      %4970 = vmatprep.subr.mxu0 0.0
      %4971 = vmatpush2.msra.mxu0 0.0
      %4972 = vmatprep.subr.mxu0 0.0
      %4973 = vmatpush2.msra.mxu0 0.0
      %4974 = vmatprep.subr.mxu0 0.0
      %4975 = vmatpush2.msra.mxu0 0.0
      %4976 = vmatprep.subr.mxu0 0.0
      %4977 = vmatpush2.msra.mxu0 0.0
      %4978 = vmatprep.subr.mxu0 0.0
      %4979 = vmatpush2.msra.mxu0 0.0
      %4980 = vmatprep.subr.mxu0 0.0
      %4981 = vmatpush2.msra.mxu0 0.0
      %4982 = vmatprep.subr.mxu0 0.0
      %4983 = vmatpush2.msra.mxu0 0.0
      %4984 = vmatprep.subr.mxu0 0.0
      %4985 = vmatpush2.msra.mxu0 0.0
      %4986 = vmatprep.subr.mxu0 0.0
      %4987 = vmatpush2.msra.mxu0 0.0
      %4988 = vmatprep.mubr.f32.mxu0 0.0
      %4989 = vmatmul.mubr.f32.gmra.mxu0 %v4908
      %v4990 = vpop.f32.mrf.mxu0
      %v4991 = vadd.f32 1e-05, %v4990
      %v4992 = vpop.f32.mrf.mxu0
      %4993 = vmatprep.mubr.f32.mxu0 0.0
      %4994 = vmatmul.mubr.f32.gmra.mxu0 %v4909
      %v4995 = vpop.f32.mrf.mxu0
      %v4996 = vadd.f32 1e-05, %v4995
      %v4997 = vpop.f32.mrf.mxu0
      %4998 = vmatprep.mubr.f32.mxu0 0.0
      %4999 = vmatmul.mubr.f32.gmra.mxu0 %v4910
      %v5000 = vpop.f32.mrf.mxu0
      %v5001 = vadd.f32 1e-05, %v5000
      %v5002 = vpop.f32.mrf.mxu0
      %5003 = vmatprep.mubr.f32.mxu0 0.0
      %5004 = vmatmul.mubr.f32.gmra.mxu0 %v4911
      %v5005 = vpop.f32.mrf.mxu0
      %v5006 = vadd.f32 1e-05, %v5005
      %v5007 = vpop.f32.mrf.mxu0
      %5008 = vmatprep.mubr.f32.mxu0 0.0
      %5009 = vmatmul.mubr.f32.gmra.mxu0 %v4912
      %v5010 = vpop.f32.mrf.mxu0
      %v5011 = vadd.f32 1e-05, %v5010
      %v5012 = vpop.f32.mrf.mxu0
      %5013 = vmatprep.mubr.f32.mxu0 0.0
      %5014 = vmatmul.mubr.f32.gmra.mxu0 %v4913
      %v5015 = vpop.f32.mrf.mxu0
      %v5016 = vadd.f32 1e-05, %v5015
      %v5017 = vpop.f32.mrf.mxu0
      %5018 = vmatprep.mubr.f32.mxu0 0.0
      %5019 = vmatmul.mubr.f32.gmra.mxu0 %v4914
      %v5020 = vpop.f32.mrf.mxu0
      %v5021 = vadd.f32 1e-05, %v5020
      %v5022 = vpop.f32.mrf.mxu0
      %5023 = vmatprep.mubr.f32.mxu0 0.0
      %5024 = vmatmul.mubr.f32.gmra.mxu0 %v4915
      %v5025 = vpop.f32.mrf.mxu0
      %v5026 = vadd.f32 1e-05, %v5025
      %v5027 = vpop.f32.mrf.mxu0
      %5028 = vmatprep.mubr.f32.mxu0 0.0
      %5029 = vmatmul.mubr.f32.gmra.mxu0 %v4916
      %v5030 = vpop.f32.mrf.mxu0
      %v5031 = vadd.f32 1e-05, %v5030
      %v5032 = vpop.f32.mrf.mxu0
      %5033 = vmatprep.mubr.f32.mxu0 0.0
      %5034 = vmatmul.mubr.f32.gmra.mxu0 %v4917
      %v5035 = vpop.f32.mrf.mxu0
      %v5036 = vadd.f32 1e-05, %v5035
      %v5037 = vpop.f32.mrf.mxu0
      %5038 = vmatprep.mubr.f32.mxu0 0.0
      %5039 = vmatmul.mubr.f32.gmra.mxu0 %v4918
      %v5040 = vpop.f32.mrf.mxu0
      %v5041 = vadd.f32 1e-05, %v5040
      %v5042 = vpop.f32.mrf.mxu0
      %5043 = vmatprep.mubr.f32.mxu0 0.0
      %5044 = vmatmul.mubr.f32.gmra.mxu0 %v4919
      %v5045 = vpop.f32.mrf.mxu0
      %v5046 = vadd.f32 1e-05, %v5045
      %v5047 = vpop.f32.mrf.mxu0
      %5048 = vmatprep.mubr.f32.mxu0 0.0
      %5049 = vmatmul.mubr.f32.gmra.mxu0 %v4920
      %v5050 = vpop.f32.mrf.mxu0
      %v5051 = vadd.f32 1e-05, %v5050
      %v5052 = vpop.f32.mrf.mxu0
      %5053 = vmatprep.mubr.f32.mxu0 0.0
      %5054 = vmatmul.mubr.f32.gmra.mxu0 %v4921
      %v5055 = vpop.f32.mrf.mxu0
      %v5056 = vadd.f32 1e-05, %v5055
      %v5057 = vpop.f32.mrf.mxu0
      %5058 = vmatprep.mubr.f32.mxu0 0.0
      %5059 = vmatmul.mubr.f32.gmra.mxu0 %v4922
      %v5060 = vpop.f32.mrf.mxu0
      %v5061 = vadd.f32 1e-05, %v5060
      %v5062 = vpop.f32.mrf.mxu0
      %5063 = vmatprep.mubr.f32.mxu0 0.0
      %5064 = vmatmul.mubr.f32.gmra.mxu0 %v4923
      %v5065 = vpop.f32.mrf.mxu0
      %v5066 = vadd.f32 1e-05, %v5065
      %v5067 = vpop.f32.mrf.mxu0
      %5068 = vdwg.mxu0
      %v5069 = vrsqrt.pop %v4991
      %v5070 = vrsqrt.pop %v4996
      %v5071 = vrsqrt.pop %v5001
      %v5072 = vrsqrt.pop %v5006
      %v5073 = vrsqrt.pop %v5011
      %v5074 = vrsqrt.pop %v5016
      %v5075 = vrsqrt.pop %v5021
      %v5076 = vrsqrt.pop %v5026
      %v5077 = vrsqrt.pop %v5031
      %v5078 = vrsqrt.pop %v5036
      %v5079 = vrsqrt.pop %v5041
      %v5080 = vrsqrt.pop %v5046
      %v5081 = vrsqrt.pop %v5051
      %v5082 = vrsqrt.pop %v5056
      %v5083 = vrsqrt.pop %v5061
      %v5084 = vrsqrt.pop %v5066
      %v5085 = vmul.f32 %v4892, %v5069
      %v5086 = vmul.f32 %v4893, %v5070
      %v5087 = vmul.f32 %v4894, %v5071
      %v5088 = vmul.f32 %v4895, %v5072
      %v5089 = vmul.f32 %v4896, %v5073
      %v5090 = vmul.f32 %v4897, %v5074
      %v5091 = vmul.f32 %v4898, %v5075
      %v5092 = vmul.f32 %v4899, %v5076
      %v5093 = vmul.f32 %v4900, %v5077
      %v5094 = vmul.f32 %v4901, %v5078
      %v5095 = vmul.f32 %v4902, %v5079
      %v5096 = vmul.f32 %v4903, %v5080
      %v5097 = vmul.f32 %v4904, %v5081
      %v5098 = vmul.f32 %v4905, %v5082
      %v5099 = vmul.f32 %v4906, %v5083
      %v5100 = vmul.f32 %v4907, %v5084
      %v5101 = vld [vmem:[%s4] sm:$0x1]
      %v5103 = vlaneseq
      %v5104 = vshrl.u32 %v5103, 7
      %v5105 = vsub.s32 0, %v5104
      %v5106 = vrot.slane %v5101, %v5105
      %v5108 = vmul.f32 %v5085, %v5106
      %v5109 = vmul.f32 %v5086, %v5106
      %v5110 = vmul.f32 %v5087, %v5106
      %v5111 = vmul.f32 %v5088, %v5106
      %v5112 = vmul.f32 %v5089, %v5106
      %v5113 = vmul.f32 %v5090, %v5106
      %v5114 = vmul.f32 %v5091, %v5106
      %v5115 = vmul.f32 %v5092, %v5106
      %v5116 = vmul.f32 %v5093, %v5106
      %v5117 = vmul.f32 %v5094, %v5106
      %v5118 = vmul.f32 %v5095, %v5106
      %v5119 = vmul.f32 %v5096, %v5106
      %v5120 = vmul.f32 %v5097, %v5106
      %v5121 = vmul.f32 %v5098, %v5106
      %v5122 = vmul.f32 %v5099, %v5106
      %v5123 = vmul.f32 %v5100, %v5106
      %v5124 = vld [vmem:[%s5] sm:$0x1]
      %v5126 = vlaneseq
      %v5127 = vshrl.u32 %v5126, 7
      %v5128 = vsub.s32 0, %v5127
      %v5129 = vrot.slane %v5124, %v5128
      %v5131 = vadd.f32 %v5108, %v5129
      %v5132 = vadd.f32 %v5109, %v5129
      %v5133 = vadd.f32 %v5110, %v5129
      %v5134 = vadd.f32 %v5111, %v5129
      %v5135 = vadd.f32 %v5112, %v5129
      %v5136 = vadd.f32 %v5113, %v5129
      %v5137 = vadd.f32 %v5114, %v5129
      %v5138 = vadd.f32 %v5115, %v5129
      %v5139 = vadd.f32 %v5116, %v5129
      %v5140 = vadd.f32 %v5117, %v5129
      %v5141 = vadd.f32 %v5118, %v5129
      %v5142 = vadd.f32 %v5119, %v5129
      %v5143 = vadd.f32 %v5120, %v5129
      %v5144 = vadd.f32 %v5121, %v5129
      %v5145 = vadd.f32 %v5122, %v5129
      %v5146 = vadd.f32 %v5123, %v5129
      %v5147 = vmul.f32 %v5131, 0.5
      %v5148 = vmul.f32 %v5132, 0.5
      %v5149 = vmul.f32 %v5133, 0.5
      %v5150 = vmul.f32 %v5134, 0.5
      %v5151 = vmul.f32 %v5135, 0.5
      %v5152 = vmul.f32 %v5136, 0.5
      %v5153 = vmul.f32 %v5137, 0.5
      %v5154 = vmul.f32 %v5138, 0.5
      %v5155 = vmul.f32 %v5139, 0.5
      %v5156 = vmul.f32 %v5140, 0.5
      %v5157 = vmul.f32 %v5141, 0.5
      %v5158 = vmul.f32 %v5142, 0.5
      %v5159 = vmul.f32 %v5143, 0.5
      %v5160 = vmul.f32 %v5144, 0.5
      %v5161 = vmul.f32 %v5145, 0.5
      %v5162 = vmul.f32 %v5146, 0.5
      %v5163 = vmul.f32 %v5131, 0.70710677
      %v5164 = vmul.f32 %v5132, 0.70710677
      %v5165 = vmul.f32 %v5133, 0.70710677
      %v5166 = vmul.f32 %v5134, 0.70710677
      %v5167 = vmul.f32 %v5135, 0.70710677
      %v5168 = vmul.f32 %v5136, 0.70710677
      %v5169 = vmul.f32 %v5137, 0.70710677
      %v5170 = vmul.f32 %v5138, 0.70710677
      %v5171 = vmul.f32 %v5139, 0.70710677
      %v5172 = vmul.f32 %v5140, 0.70710677
      %v5173 = vmul.f32 %v5141, 0.70710677
      %v5174 = vmul.f32 %v5142, 0.70710677
      %v5175 = vmul.f32 %v5143, 0.70710677
      %v5176 = vmul.f32 %v5144, 0.70710677
      %v5177 = vmul.f32 %v5145, 0.70710677
      %v5178 = vmul.f32 %v5146, 0.70710677
      %v5179 = verf.f32.pop %v5163
      %v5180 = verf.f32.pop %v5164
      %v5181 = verf.f32.pop %v5165
      %v5182 = verf.f32.pop %v5166
      %v5183 = verf.f32.pop %v5167
      %v5184 = verf.f32.pop %v5168
      %v5185 = verf.f32.pop %v5169
      %v5186 = verf.f32.pop %v5170
      %v5187 = verf.f32.pop %v5171
      %v5188 = verf.f32.pop %v5172
      %v5189 = verf.f32.pop %v5173
      %v5190 = verf.f32.pop %v5174
      %v5191 = verf.f32.pop %v5175
      %v5192 = verf.f32.pop %v5176
      %v5193 = verf.f32.pop %v5177
      %v5194 = verf.f32.pop %v5178
      %v5195 = vadd.f32 %v5179, 1.0
      %v5196 = vadd.f32 %v5180, 1.0
      %v5197 = vadd.f32 %v5181, 1.0
      %v5198 = vadd.f32 %v5182, 1.0
      %v5199 = vadd.f32 %v5183, 1.0
      %v5200 = vadd.f32 %v5184, 1.0
      %v5201 = vadd.f32 %v5185, 1.0
      %v5202 = vadd.f32 %v5186, 1.0
      %v5203 = vadd.f32 %v5187, 1.0
      %v5204 = vadd.f32 %v5188, 1.0
      %v5205 = vadd.f32 %v5189, 1.0
      %v5206 = vadd.f32 %v5190, 1.0
      %v5207 = vadd.f32 %v5191, 1.0
      %v5208 = vadd.f32 %v5192, 1.0
      %v5209 = vadd.f32 %v5193, 1.0
      %v5210 = vadd.f32 %v5194, 1.0
      %v5211 = vmul.f32 %v5147, %v5195
      %v5212 = vmul.f32 %v5148, %v5196
      %v5213 = vmul.f32 %v5149, %v5197
      %v5214 = vmul.f32 %v5150, %v5198
      %v5215 = vmul.f32 %v5151, %v5199
      %v5216 = vmul.f32 %v5152, %v5200
      %v5217 = vmul.f32 %v5153, %v5201
      %v5218 = vmul.f32 %v5154, %v5202
      %v5219 = vmul.f32 %v5155, %v5203
      %v5220 = vmul.f32 %v5156, %v5204
      %v5221 = vmul.f32 %v5157, %v5205
      %v5222 = vmul.f32 %v5158, %v5206
      %v5223 = vmul.f32 %v5159, %v5207
      %v5224 = vmul.f32 %v5160, %v5208
      %v5225 = vmul.f32 %v5161, %v5209
      %v5226 = vmul.f32 %v5162, %v5210
      %5227 = vst [vmem:[%s314] sm:$0xff] %v5211
      %5228 = vst [vmem:[%s314 + $0x8] sm:$0xff] %v5212
      %5229 = vst [vmem:[%s314 + $0x10] sm:$0xff] %v5213
      %5230 = vst [vmem:[%s314 + $0x18] sm:$0xff] %v5214
      %5231 = vst [vmem:[%s314 + $0x20] sm:$0xff] %v5215
      %5232 = vst [vmem:[%s314 + $0x28] sm:$0xff] %v5216
      %5233 = vst [vmem:[%s314 + $0x30] sm:$0xff] %v5217
      %5234 = vst [vmem:[%s314 + $0x38] sm:$0xff] %v5218
      %5235 = vst [vmem:[%s314 + $0x40] sm:$0xff] %v5219
      %5236 = vst [vmem:[%s314 + $0x48] sm:$0xff] %v5220
      %5237 = vst [vmem:[%s314 + $0x50] sm:$0xff] %v5221
      %5238 = vst [vmem:[%s314 + $0x58] sm:$0xff] %v5222
      %5239 = vst [vmem:[%s314 + $0x60] sm:$0xff] %v5223
      %5240 = vst [vmem:[%s314 + $0x68] sm:$0xff] %v5224
      %5241 = vst [vmem:[%s314 + $0x70] sm:$0xff] %v5225
      %5242 = vst [vmem:[%s314 + $0x78] sm:$0xff] %v5226
      %s5243 = smul.u32 16, %s22
      %p5244 = scmp.lt.s32.totalorder %s21, 1
      %s5245 = scalar_select %p5244, %s21, 1
      %p5246 = scmp.lt.s32.totalorder %s5243, 63
      %s5247 = scalar_select %p5246, %s5243, 63
      %s5248 = smul.addr %s5245, 64
      %s5249 = sadd.s32 %s5247, %s5248
      %s5250 = smul.addr %s5249, 8
      %s5251 = scalar_lea.vmem %s6, %s5250
      // Predicated region
      $region45: #{fcu_down_forward.1} parent=43 // pred_check
        %p5252 = pneg %p187
      $region46: #{fcu_down_forward.1} parent=43 // pred_check_branch
        %5254 = sbr.rel (%p5252) target = $region48
      $region47: #{fcu_down_forward.1} parent=43 // pred_region
        %s5255 = smul.u32 16, %s22
      $region48: #{fcu_down_forward.1} parent=43 // pred_fallthru
        _
    $region44: #{fcu_down_forward.1} parent=5 // pred_fallthru
      _
    %p5256 = scmp.le.s32.totalorder 2, %s12
    // Predicated region
    $region49: #{fcu_down_forward.1} parent=5 // pred_check
      %p5257 = pneg %p5256
    $region50: #{fcu_down_forward.1} parent=5 // pred_check_branch
      %5259 = sbr.rel (%p5257) target = $region52
    $region51: #{fcu_down_forward.1} parent=5 // pred_region
      %s5260 = ssub.s32 %s12, 2
      // Predicated region
      $region53: #{fcu_down_forward.1} parent=51 // pred_check
        %p5261 = pneg %p193
      $region54: #{fcu_down_forward.1} parent=51 // pred_check_branch
        %5263 = sbr.rel (%p5261) target = $region56
      $region55: #{fcu_down_forward.1} parent=51 // pred_region
        %s5264 = smul.u32 16, %s24
        %p5265 = scmp.lt.s32.totalorder %s23, 1
        %s5266 = scalar_select %p5265, %s23, 1
        %p5267 = scmp.lt.s32.totalorder %s5264, 63
        %s5268 = scalar_select %p5267, %s5264, 63
        %s5269 = smul.addr %s5266, 64
        %s5270 = sadd.s32 %s5268, %s5269
        %s5271 = smul.addr %s5270, 8
        %s5272 = scalar_lea.vmem %s6, %s5271
      $region56: #{fcu_down_forward.1} parent=51 // pred_fallthru
        _
    $region52: #{fcu_down_forward.1} parent=5 // pred_fallthru
      _
  $region6: #{fcu_down_forward.1} parent=0 // loop_footer
    %s16 = sadd.s32 1, %s12
  $region7: #{fcu_down_forward.1} parent=0 // loop_footer_branch
    %11 = sbr.rel target = $region3
  $region8: #{fcu_down_forward.1} parent=0 // loop_exit
    _

</llo_original>
